<compile_context>
chip_gen: v7x
topology: tpu7x:2x2x1
jax: 0.10.0
libtpu: 0.0.40
codegen_flags: <defaults>
</compile_context>

<pallas_src>
import functools
from types import SimpleNamespace

import jax
import jax.numpy as jnp
import numpy as np
from jax import lax
from jax.experimental import pallas as pl
from jax.experimental.pallas import tpu as pltpu

EPS = 1e-5                      # PyTorch BatchNorm2d default eps
VMEM_LIMIT = 32 * 1024 * 1024   # per-step working set is tiny; safe on v5e/v6e/v7x


# --------------------------------------------------------------------------- utils
def _round_up(v, m):
    return (v + m - 1) // m * m


def _pick_batch_block(n, cap=8):
    b = min(n, cap)
    while n % b:
        b -= 1
    return b


def _half_dims(h_in, w_in, cin, cout, k, stride, pad, b_blk):
    """Static geometry for one ReLU->dw->1x1 half in the packed-lane layout."""
    hp, wp = h_in + 2 * pad, w_in + 2 * pad
    seg = wp                                  # per-(b,ci) plane segment width (lanes)
    n_rows = hp - k + 1                       # full-resolution (stride-1) output rows
    n_valid = wp - k + 1                      # full-resolution valid cols per plane
    out_h = (hp - k) // stride + 1
    out_w = (wp - k) // stride + 1
    chunk = b_blk * seg                       # lanes per output channel
    l_acc = _round_up(cin * b_blk * seg, 128) # depthwise accumulator width
    l_scr = l_acc + 128                       # padded-input scratch width (>= l_acc+k-1)
    l_out = _round_up(cout * chunk, 128)      # pre-BN output (y) lane width
    s_stat = _round_up(chunk, 128)            # stats output lane width
    return SimpleNamespace(hp=hp, wp=wp, seg=seg, n_rows=n_rows, n_valid=n_valid,
                           out_h=out_h, out_w=out_w, chunk=chunk, l_acc=l_acc,
                           l_scr=l_scr, l_out=l_out, s_stat=s_stat)


def _dw_lane_vectors(dw_kkc, b_blk, seg, n_valid, l_acc):
    """Per-tap per-lane depthwise weights (channel-major plane packing).

    lane (ci*b_blk + b)*seg + w gets dw[tap, ci] for w < n_valid, else 0, so the
    gutter/filler lanes of the packed accumulator stay exactly zero."""
    kk, cin = dw_kkc.shape
    colv = (jnp.arange(seg) < n_valid).astype(jnp.float32)             # (seg,)
    per_plane = jnp.repeat(dw_kkc.astype(jnp.float32), b_blk, axis=1)  # (kk, cin*b_blk)
    wv = (per_plane[:, :, None] * colv[None, None, :]).reshape(kk, cin * b_blk * seg)
    if l_acc > cin * b_blk * seg:
        wv = jnp.pad(wv, ((0, 0), (0, l_acc - cin * b_blk * seg)))
    return wv


def _col_mask(b_blk, seg, n_valid, stride, out_w):
    """0/1 per-lane mask (length chunk) selecting the columns that belong to the
    strided conv output (used only for the wrapper-side stats reduction)."""
    wv = np.arange(seg)
    valid = (wv % stride == 0) & (wv // stride < out_w) & (wv < n_valid)
    return jnp.asarray(np.tile(valid.astype(np.float32), b_blk))


# ------------------------------------------------------------------- kernel pieces
def _dw_pw_packed(scr_ref, wv_ref, pw_ref, *, k, cin, cout, n_rows, chunk, l_acc):
    """Depthwise conv (packed lanes) + 1x1 conv.

    scr_ref: (hp, l_scr) padded packed input, planes channel-major on lanes.
    wv_ref : (k*k, l_acc) per-tap per-lane depthwise weights (0 at invalid lanes).
    pw_ref : SMEM (cin*cout,) 1x1 weights, index ci*cout + co.
    Returns cout arrays of shape (n_rows, chunk); invalid lanes are exactly 0."""
    acc = jnp.zeros((n_rows, l_acc), jnp.float32)
    for kh in range(k):
        for kw in range(k):
            win = scr_ref[kh:kh + n_rows, kw:kw + l_acc]
            acc = acc + win * wv_ref[kh * k + kw:kh * k + kw + 1, :]
    parts = [acc[:, ci * chunk:(ci + 1) * chunk] for ci in range(cin)]
    outs = []
    for co in range(cout):
        y = parts[0] * pw_ref[co]
        for ci in range(1, cin):
            y = y + parts[ci] * pw_ref[ci * cout + co]
        outs.append(y)
    return outs


def _emit_outputs(ys, y_ref, st_ref, *, cout, chunk, n_rows, l_out, s_stat,
                  row_mask=None):
    """Write pre-BN output channels and their per-lane sum / sum-of-squares."""
    for co, y in enumerate(ys):
        ym = y if row_mask is None else y * row_mask
        st_ref[0, co:co + 1, 0:chunk] = jnp.sum(ym, axis=0, keepdims=True)
        st_ref[0, cout + co:cout + co + 1, 0:chunk] = jnp.sum(ym * ym, axis=0,
                                                              keepdims=True)
        y_ref[0, :, co * chunk:(co + 1) * chunk] = y
    if cout * chunk < l_out:
        y_ref[0, :, cout * chunk:] = jnp.zeros((n_rows, l_out - cout * chunk),
                                               jnp.float32)
    if chunk < s_stat:
        st_ref[0, :, chunk:] = jnp.zeros((2 * cout, s_stat - chunk), jnp.float32)


def _half1_kernel(x_ref, wv_ref, pw_ref, y_ref, st_ref, scr_ref, *,
                  b_blk, cin, cout, k, stride, pad, h_in, w_in, dims):
    """ReLU -> depthwise (stride handled via row mask) -> 1x1; BN1 moments + y1."""
    d = dims
    scr_ref[...] = jnp.zeros_like(scr_ref)                 # zero pad ring + filler
    for b in range(b_blk):
        for ci in range(cin):
            q = ci * b_blk + b
            scr_ref[pad:pad + h_in, q * d.seg + pad:q * d.seg + pad + w_in] = \
                jnp.maximum(x_ref[b, ci].astype(jnp.float32), 0.0)
    ys = _dw_pw_packed(scr_ref, wv_ref, pw_ref, k=k, cin=cin, cout=cout,
                       n_rows=d.n_rows, chunk=d.chunk, l_acc=d.l_acc)
    row_mask = None
    if stride > 1:                                         # stats only over strided rows
        ridx = lax.broadcasted_iota(jnp.int32, (d.n_rows, 1), 0)
        row_mask = jnp.where(ridx % stride == 0, 1.0, 0.0)
    _emit_outputs(ys, y_ref, st_ref, cout=cout, chunk=d.chunk, n_rows=d.n_rows,
                  l_out=d.l_out, s_stat=d.s_stat, row_mask=row_mask)


def _half2_kernel(a_ref, wv_ref, pw_ref, sc_ref, sh_ref, y_ref, st_ref, scr_ref, *,
                  b_blk, cin, cout, k, pad, h_in, w_in, seg_in, dims):
    """BN1 affine -> ReLU -> depthwise (stride 1) -> 1x1; BN2 moments + y2."""
    d = dims
    scr_ref[...] = jnp.zeros_like(scr_ref)
    for b in range(b_blk):
        for ci in range(cin):
            q = ci * b_blk + b
            plane = a_ref[0, 0:h_in, q * seg_in:q * seg_in + w_in]
            plane = jnp.maximum(plane * sc_ref[ci] + sh_ref[ci], 0.0)
            scr_ref[pad:pad + h_in, q * d.seg + pad:q * d.seg + pad + w_in] = plane
    ys = _dw_pw_packed(scr_ref, wv_ref, pw_ref, k=k, cin=cin, cout=cout,
                       n_rows=d.n_rows, chunk=d.chunk, l_acc=d.l_acc)
    _emit_outputs(ys, y_ref, st_ref, cout=cout, chunk=d.chunk, n_rows=d.n_rows,
                  l_out=d.l_out, s_stat=d.s_stat)


def _bn_apply_kernel(y_ref, sc_ref, sh_ref, o_ref, *, b_blk, cout, seg, h, w):
    """BN2 affine; writes a lane-dense (b, h, cout*w) block (NCHW via wrapper)."""
    for b in range(b_blk):
        for co in range(cout):
            q = co * b_blk + b
            plane = y_ref[0, 0:h, q * seg:q * seg + w]
            o_ref[b, :, co * w:(co + 1) * w] = plane * sc_ref[co] + sh_ref[co]


# ----------------------------------------------------------------------- wrapper
def _fold_bn(stats, gamma, beta, *, cout, chunk, col_mask, count):
    s = stats[:, :cout, :chunk] * col_mask[None, None, :]
    q = stats[:, cout:2 * cout, :chunk] * col_mask[None, None, :]
    mean = s.sum(axis=(0, 2)) / count
    var = q.sum(axis=(0, 2)) / count - mean * mean
    scale = gamma.astype(jnp.float32) * lax.rsqrt(var + EPS)
    shift = beta.astype(jnp.float32) - mean * scale
    return scale, shift


def sepconv_forward(x_nchw, params, *, kernel_size, stride, padding):
    x = x_nchw.astype(jnp.float32)
    n, cin, h, w = x.shape
    cout = params['pw2'].shape[1]
    k = kernel_size
    kk = k * k
    b_blk = _pick_batch_block(n)
    n_steps = n // b_blk
    smem = pl.BlockSpec(memory_space=pltpu.MemorySpace.SMEM)
    cparams = pltpu.CompilerParams(dimension_semantics=("parallel",),
                                   vmem_limit_bytes=VMEM_LIMIT)

    # ---- pass 1: ReLU -> dw1 -> pw1, BN1 partial moments, y1 (packed) ----------
    d1 = _half_dims(h, w, cin, cin, k, stride, padding, b_blk)
    wv1 = _dw_lane_vectors(params['dw1'], b_blk, d1.seg, d1.n_valid, d1.l_acc)
    y1, st1 = pl.pallas_call(
        functools.partial(_half1_kernel, b_blk=b_blk, cin=cin, cout=cin, k=k,
                          stride=stride, pad=padding, h_in=h, w_in=w, dims=d1),
        grid=(n_steps,),
        in_specs=[pl.BlockSpec((b_blk, cin, h, w), lambda i: (i, 0, 0, 0)),
                  pl.BlockSpec((kk, d1.l_acc), lambda i: (0, 0)),
                  smem],
        out_specs=[pl.BlockSpec((1, d1.n_rows, d1.l_out), lambda i: (i, 0, 0)),
                   pl.BlockSpec((1, 2 * cin, d1.s_stat), lambda i: (i, 0, 0))],
        out_shape=[jax.ShapeDtypeStruct((n_steps, d1.n_rows, d1.l_out), jnp.float32),
                   jax.ShapeDtypeStruct((n_steps, 2 * cin, d1.s_stat), jnp.float32)],
        scratch_shapes=[pltpu.VMEM((d1.hp, d1.l_scr), jnp.float32)],
        compiler_params=cparams,
    )(x, wv1, params['pw1'].astype(jnp.float32).reshape(-1))

    col_mask1 = _col_mask(b_blk, d1.seg, d1.n_valid, stride, d1.out_w)
    count1 = n * d1.out_h * d1.out_w
    scale1, shift1 = _fold_bn(st1, params['g1'], params['b1'], cout=cin,
                              chunk=d1.chunk, col_mask=col_mask1, count=count1)

    # Re-pack y1 for half 2 (only when stride > 1: drop the skipped rows/cols).
    if stride == 1:
        y1b, h2_in, w2_in, seg_in = y1, d1.n_rows, d1.n_valid, d1.seg
    else:
        p1 = cin * b_blk
        t = y1[:, :, :p1 * d1.seg].reshape(n_steps, d1.n_rows, p1, d1.seg)
        t = t[:, 0:stride * d1.out_h:stride, :, 0:stride * d1.out_w:stride]
        t = t.reshape(n_steps, d1.out_h, p1 * d1.out_w)
        l1b = _round_up(p1 * d1.out_w, 128)
        if l1b > p1 * d1.out_w:
            t = jnp.pad(t, ((0, 0), (0, 0), (0, l1b - p1 * d1.out_w)))
        y1b, h2_in, w2_in, seg_in = t, d1.out_h, d1.out_w, d1.out_w

    # ---- pass 2: BN1 affine -> ReLU -> dw2 -> pw2, BN2 partial moments, y2 -----
    d2 = _half_dims(h2_in, w2_in, cin, cout, k, 1, padding, b_blk)
    wv2 = _dw_lane_vectors(params['dw2'], b_blk, d2.seg, d2.n_valid, d2.l_acc)
    y2, st2 = pl.pallas_call(
        functools.partial(_half2_kernel, b_blk=b_blk, cin=cin, cout=cout, k=k,
                          pad=padding, h_in=h2_in, w_in=w2_in, seg_in=seg_in, dims=d2),
        grid=(n_steps,),
        in_specs=[pl.BlockSpec((1, h2_in, y1b.shape[-1]), lambda i: (i, 0, 0)),
                  pl.BlockSpec((kk, d2.l_acc), lambda i: (0, 0)),
                  smem, smem, smem],
        out_specs=[pl.BlockSpec((1, d2.n_rows, d2.l_out), lambda i: (i, 0, 0)),
                   pl.BlockSpec((1, 2 * cout, d2.s_stat), lambda i: (i, 0, 0))],
        out_shape=[jax.ShapeDtypeStruct((n_steps, d2.n_rows, d2.l_out), jnp.float32),
                   jax.ShapeDtypeStruct((n_steps, 2 * cout, d2.s_stat), jnp.float32)],
        scratch_shapes=[pltpu.VMEM((d2.hp, d2.l_scr), jnp.float32)],
        compiler_params=cparams,
    )(y1b, wv2, params['pw2'].astype(jnp.float32).reshape(-1), scale1, shift1)

    col_mask2 = _col_mask(b_blk, d2.seg, d2.n_valid, 1, d2.out_w)
    count2 = n * d2.out_h * d2.out_w
    scale2, shift2 = _fold_bn(st2, params['g2'], params['b2'], cout=cout,
                              chunk=d2.chunk, col_mask=col_mask2, count=count2)

    # ---- pass 3: BN2 affine -> lane-dense output, then NCHW in the wrapper -----
    out_h, out_w = d2.out_h, d2.out_w
    out_packed = pl.pallas_call(
        functools.partial(_bn_apply_kernel, b_blk=b_blk, cout=cout, seg=d2.seg,
                          h=out_h, w=out_w),
        grid=(n_steps,),
        in_specs=[pl.BlockSpec((1, d2.n_rows, d2.l_out), lambda i: (i, 0, 0)),
                  smem, smem],
        out_specs=pl.BlockSpec((b_blk, out_h, cout * out_w), lambda i: (i, 0, 0)),
        out_shape=jax.ShapeDtypeStruct((n, out_h, cout * out_w), jnp.float32),
        compiler_params=cparams,
    )(y2, scale2, shift2)

    return out_packed.reshape(n, out_h, cout, out_w).transpose(0, 2, 1, 3)


# --------------------------------------------------------------------- parameters
def init_sepconv_params(key, c_in, c_out, kernel_size):
    """Deterministic parameter init (same shapes as the PyTorch module)."""
    k1, k2, k3, k4 = jax.random.split(key, 4)
    kk = kernel_size * kernel_size
    return dict(
        dw1=0.1 * jax.random.normal(k1, (kk, c_in), jnp.float32),     # Conv2d(C,C,k,groups=C)
        pw1=0.1 * jax.random.normal(k2, (c_in, c_in), jnp.float32),   # Conv2d(C,C,1)
        g1=jnp.ones((c_in,), jnp.float32),                            # BN(C_in) gamma
        b1=jnp.zeros((c_in,), jnp.float32),                           # BN(C_in) beta
        dw2=0.1 * jax.random.normal(k3, (kk, c_in), jnp.float32),     # Conv2d(C,C,k,groups=C)
        pw2=0.1 * jax.random.normal(k4, (c_in, c_out), jnp.float32),  # Conv2d(C_in,C_out,1)
        g2=jnp.ones((c_out,), jnp.float32),                           # BN(C_out) gamma
        b2=jnp.zeros((c_out,), jnp.float32),                          # BN(C_out) beta
    )


# ----------------------- pure-JAX reference for validation -----------------------
def ref_sepconv(x, params, *, kernel_size, stride, padding):
    k = kernel_size

    def dwconv(h, w_kkc, s):
        c = h.shape[1]
        w = w_kkc.reshape(k, k, c).transpose(2, 0, 1)[:, None, :, :]  # (C,1,k,k)
        return lax.conv_general_dilated(h, w, (s, s),
                                        ((padding, padding), (padding, padding)),
                                        dimension_numbers=('NCHW', 'OIHW', 'NCHW'),
                                        feature_group_count=c,
                                        precision=lax.Precision.HIGHEST)

    def pwconv(h, w_io):
        w = w_io.T[:, :, None, None]  # (Cout,Cin,1,1)
        return lax.conv_general_dilated(h, w, (1, 1), ((0, 0), (0, 0)),
                                        dimension_numbers=('NCHW', 'OIHW', 'NCHW'),
                                        precision=lax.Precision.HIGHEST)

    def bn(h, g, b):
        mean = h.mean(axis=(0, 2, 3), keepdims=True)
        var = ((h - mean) ** 2).mean(axis=(0, 2, 3), keepdims=True)
        return (h - mean) * lax.rsqrt(var + EPS) * g.reshape(1, -1, 1, 1) + b.reshape(1, -1, 1, 1)

    h = jnp.maximum(x, 0.0)
    h = dwconv(h, params['dw1'], stride)
    h = pwconv(h, params['pw1'])
    h = bn(h, params['g1'], params['b1'])
    h = jnp.maximum(h, 0.0)
    h = dwconv(h, params['dw2'], 1)
    h = pwconv(h, params['pw2'])
    h = bn(h, params['g2'], params['b2'])
    return h


if __name__ == "__main__":
    key = jax.random.PRNGKey(0)
    kx, kp = jax.random.split(key)

    N, C_in, C_out, H, W = 2, 4, 8, 16, 16
    kernel_size, padding = 3, 1

    x = jax.random.normal(kx, (N, C_in, H, W), jnp.float32)
    params = init_sepconv_params(kp, C_in, C_out, kernel_size)

    for stride in (1, 2):
        fwd = jax.jit(functools.partial(sepconv_forward, kernel_size=kernel_size,
                                        stride=stride, padding=padding))
        out = jax.block_until_ready(fwd(x, params))
        ref = ref_sepconv(x, params, kernel_size=kernel_size, stride=stride,
                          padding=padding)
        assert out.shape == ref.shape, (out.shape, ref.shape)
        np.testing.assert_allclose(np.asarray(out), np.asarray(ref),
                                   rtol=2e-4, atol=2e-4)

    print("KERNEL_OK")
</pallas_src>

<mosaic_0001>
module attributes {stable_mosaic.version = 11 : i64} {
  func.func @_half2_kernel(%arg0: i32, %arg1: memref<1x16x256xf32, #tpu.memory_space<vmem>>, %arg2: memref<9x256xf32, #tpu.memory_space<vmem>>, %arg3: memref<32xf32, #tpu.memory_space<smem>>, %arg4: memref<4xf32, #tpu.memory_space<smem>>, %arg5: memref<4xf32, #tpu.memory_space<smem>>, %arg6: memref<1x16x384xf32, #tpu.memory_space<vmem>>, %arg7: memref<1x16x128xf32, #tpu.memory_space<vmem>>, %arg8: memref<18x384xf32, #tpu.memory_space<vmem>>) attributes {dimension_semantics = [#tpu.dimension_semantics<parallel>], iteration_bounds = array<i64: 1>, scalar_prefetch = 0 : i64, scratch_operands = 1 : i64, tpu.core_type = #tpu.core_type<tc>, window_params = [{transform_indices = @transform_0, window_bounds = array<i64: 1, 16, 256>}, {pipeline_mode = #tpu.pipeline_mode<synchronous>, transform_indices = @transform_1, window_bounds = array<i64: 9, 256>}, {transform_indices = @transform_2, window_bounds = array<i64: 32>}, {transform_indices = @transform_3, window_bounds = array<i64: 4>}, {transform_indices = @transform_4, window_bounds = array<i64: 4>}, {transform_indices = @transform_5, window_bounds = array<i64: 1, 16, 384>}, {transform_indices = @transform_6, window_bounds = array<i64: 1, 16, 128>}]} {
    %cst = arith.constant 0.000000e+00 : f32
    %0 = vector.broadcast %cst : f32 to vector<18x384xf32>
    %c0 = arith.constant 0 : index
    %c0_0 = arith.constant 0 : index
    %1 = vector.load %arg8[%c0, %c0_0] : memref<18x384xf32, #tpu.memory_space<vmem>>, vector<18x384xf32>
    tpu.vector_store %arg8[%c0, %c0_0], %0 {strides = array<i32>} : memref<18x384xf32, #tpu.memory_space<vmem>>, vector<18x384xf32>,
    %c0_1 = arith.constant 0 : index
    %c0_2 = arith.constant 0 : index
    %c0_3 = arith.constant 0 : index
    %2 = vector.load %arg1[%c0_1, %c0_2, %c0_3] : memref<1x16x256xf32, #tpu.memory_space<vmem>>, vector<1x16x16xf32>
    %3 = vector.shape_cast %2 : vector<1x16x16xf32> to vector<16x16xf32>
    %c0_4 = arith.constant 0 : index
    %4 = memref.load %arg4[%c0_4] : memref<4xf32, #tpu.memory_space<smem>>
    %5 = vector.broadcast %4 : f32 to vector<16x16xf32>
    %6 = arith.mulf %3, %5 : vector<16x16xf32>
    %c0_5 = arith.constant 0 : index
    %7 = memref.load %arg5[%c0_5] : memref<4xf32, #tpu.memory_space<smem>>
    %8 = vector.broadcast %7 : f32 to vector<16x16xf32>
    %9 = arith.addf %6, %8 : vector<16x16xf32>
    %cst_6 = arith.constant 0.000000e+00 : f32
    %10 = vector.broadcast %cst_6 : f32 to vector<16x16xf32>
    %11 = arith.maximumf %9, %10 : vector<16x16xf32>
    %c1 = arith.constant 1 : index
    %c1_7 = arith.constant 1 : index
    %12 = vector.load %arg8[%c1, %c1_7] : memref<18x384xf32, #tpu.memory_space<vmem>>, vector<16x16xf32>
    tpu.vector_store %arg8[%c1, %c1_7], %11 {strides = array<i32>} : memref<18x384xf32, #tpu.memory_space<vmem>>, vector<16x16xf32>,
    %c0_8 = arith.constant 0 : index
    %c0_9 = arith.constant 0 : index
    %c36 = arith.constant 36 : index
    %13 = vector.load %arg1[%c0_8, %c0_9, %c36] : memref<1x16x256xf32, #tpu.memory_space<vmem>>, vector<1x16x16xf32>
    %14 = vector.shape_cast %13 : vector<1x16x16xf32> to vector<16x16xf32>
    %c1_10 = arith.constant 1 : index
    %15 = memref.load %arg4[%c1_10] : memref<4xf32, #tpu.memory_space<smem>>
    %16 = vector.broadcast %15 : f32 to vector<16x16xf32>
    %17 = arith.mulf %14, %16 : vector<16x16xf32>
    %c1_11 = arith.constant 1 : index
    %18 = memref.load %arg5[%c1_11] : memref<4xf32, #tpu.memory_space<smem>>
    %19 = vector.broadcast %18 : f32 to vector<16x16xf32>
    %20 = arith.addf %17, %19 : vector<16x16xf32>
    %cst_12 = arith.constant 0.000000e+00 : f32
    %21 = vector.broadcast %cst_12 : f32 to vector<16x16xf32>
    %22 = arith.maximumf %20, %21 : vector<16x16xf32>
    %c1_13 = arith.constant 1 : index
    %c37 = arith.constant 37 : index
    %23 = vector.load %arg8[%c1_13, %c37] : memref<18x384xf32, #tpu.memory_space<vmem>>, vector<16x16xf32>
    tpu.vector_store %arg8[%c1_13, %c37], %22 {strides = array<i32>} : memref<18x384xf32, #tpu.memory_space<vmem>>, vector<16x16xf32>,
    %c0_14 = arith.constant 0 : index
    %c0_15 = arith.constant 0 : index
    %c72 = arith.constant 72 : index
    %24 = vector.load %arg1[%c0_14, %c0_15, %c72] : memref<1x16x256xf32, #tpu.memory_space<vmem>>, vector<1x16x16xf32>
    %25 = vector.shape_cast %24 : vector<1x16x16xf32> to vector<16x16xf32>
    %c2 = arith.constant 2 : index
    %26 = memref.load %arg4[%c2] : memref<4xf32, #tpu.memory_space<smem>>
    %27 = vector.broadcast %26 : f32 to vector<16x16xf32>
    %28 = arith.mulf %25, %27 : vector<16x16xf32>
    %c2_16 = arith.constant 2 : index
    %29 = memref.load %arg5[%c2_16] : memref<4xf32, #tpu.memory_space<smem>>
    %30 = vector.broadcast %29 : f32 to vector<16x16xf32>
    %31 = arith.addf %28, %30 : vector<16x16xf32>
    %cst_17 = arith.constant 0.000000e+00 : f32
    %32 = vector.broadcast %cst_17 : f32 to vector<16x16xf32>
    %33 = arith.maximumf %31, %32 : vector<16x16xf32>
    %c1_18 = arith.constant 1 : index
    %c73 = arith.constant 73 : index
    %34 = vector.load %arg8[%c1_18, %c73] : memref<18x384xf32, #tpu.memory_space<vmem>>, vector<16x16xf32>
    tpu.vector_store %arg8[%c1_18, %c73], %33 {strides = array<i32>} : memref<18x384xf32, #tpu.memory_space<vmem>>, vector<16x16xf32>,
    %c0_19 = arith.constant 0 : index
    %c0_20 = arith.constant 0 : index
    %c108 = arith.constant 108 : index
    %35 = vector.load %arg1[%c0_19, %c0_20, %c108] : memref<1x16x256xf32, #tpu.memory_space<vmem>>, vector<1x16x16xf32>
    %36 = vector.shape_cast %35 : vector<1x16x16xf32> to vector<16x16xf32>
    %c3 = arith.constant 3 : index
    %37 = memref.load %arg4[%c3] : memref<4xf32, #tpu.memory_space<smem>>
    %38 = vector.broadcast %37 : f32 to vector<16x16xf32>
    %39 = arith.mulf %36, %38 : vector<16x16xf32>
    %c3_21 = arith.constant 3 : index
    %40 = memref.load %arg5[%c3_21] : memref<4xf32, #tpu.memory_space<smem>>
    %41 = vector.broadcast %40 : f32 to vector<16x16xf32>
    %42 = arith.addf %39, %41 : vector<16x16xf32>
    %cst_22 = arith.constant 0.000000e+00 : f32
    %43 = vector.broadcast %cst_22 : f32 to vector<16x16xf32>
    %44 = arith.maximumf %42, %43 : vector<16x16xf32>
    %c1_23 = arith.constant 1 : index
    %c109 = arith.constant 109 : index
    %45 = vector.load %arg8[%c1_23, %c109] : memref<18x384xf32, #tpu.memory_space<vmem>>, vector<16x16xf32>
    tpu.vector_store %arg8[%c1_23, %c109], %44 {strides = array<i32>} : memref<18x384xf32, #tpu.memory_space<vmem>>, vector<16x16xf32>,
    %c0_24 = arith.constant 0 : index
    %c0_25 = arith.constant 0 : index
    %c18 = arith.constant 18 : index
    %46 = vector.load %arg1[%c0_24, %c0_25, %c18] : memref<1x16x256xf32, #tpu.memory_space<vmem>>, vector<1x16x16xf32>
    %47 = vector.shape_cast %46 : vector<1x16x16xf32> to vector<16x16xf32>
    %c0_26 = arith.constant 0 : index
    %48 = memref.load %arg4[%c0_26] : memref<4xf32, #tpu.memory_space<smem>>
    %49 = vector.broadcast %48 : f32 to vector<16x16xf32>
    %50 = arith.mulf %47, %49 : vector<16x16xf32>
    %c0_27 = arith.constant 0 : index
    %51 = memref.load %arg5[%c0_27] : memref<4xf32, #tpu.memory_space<smem>>
    %52 = vector.broadcast %51 : f32 to vector<16x16xf32>
    %53 = arith.addf %50, %52 : vector<16x16xf32>
    %cst_28 = arith.constant 0.000000e+00 : f32
    %54 = vector.broadcast %cst_28 : f32 to vector<16x16xf32>
    %55 = arith.maximumf %53, %54 : vector<16x16xf32>
    %c1_29 = arith.constant 1 : index
    %c19 = arith.constant 19 : index
    %56 = vector.load %arg8[%c1_29, %c19] : memref<18x384xf32, #tpu.memory_space<vmem>>, vector<16x16xf32>
    tpu.vector_store %arg8[%c1_29, %c19], %55 {strides = array<i32>} : memref<18x384xf32, #tpu.memory_space<vmem>>, vector<16x16xf32>,
    %c0_30 = arith.constant 0 : index
    %c0_31 = arith.constant 0 : index
    %c54 = arith.constant 54 : index
    %57 = vector.load %arg1[%c0_30, %c0_31, %c54] : memref<1x16x256xf32, #tpu.memory_space<vmem>>, vector<1x16x16xf32>
    %58 = vector.shape_cast %57 : vector<1x16x16xf32> to vector<16x16xf32>
    %c1_32 = arith.constant 1 : index
    %59 = memref.load %arg4[%c1_32] : memref<4xf32, #tpu.memory_space<smem>>
    %60 = vector.broadcast %59 : f32 to vector<16x16xf32>
    %61 = arith.mulf %58, %60 : vector<16x16xf32>
    %c1_33 = arith.constant 1 : index
    %62 = memref.load %arg5[%c1_33] : memref<4xf32, #tpu.memory_space<smem>>
    %63 = vector.broadcast %62 : f32 to vector<16x16xf32>
    %64 = arith.addf %61, %63 : vector<16x16xf32>
    %cst_34 = arith.constant 0.000000e+00 : f32
    %65 = vector.broadcast %cst_34 : f32 to vector<16x16xf32>
    %66 = arith.maximumf %64, %65 : vector<16x16xf32>
    %c1_35 = arith.constant 1 : index
    %c55 = arith.constant 55 : index
    %67 = vector.load %arg8[%c1_35, %c55] : memref<18x384xf32, #tpu.memory_space<vmem>>, vector<16x16xf32>
    tpu.vector_store %arg8[%c1_35, %c55], %66 {strides = array<i32>} : memref<18x384xf32, #tpu.memory_space<vmem>>, vector<16x16xf32>,
    %c0_36 = arith.constant 0 : index
    %c0_37 = arith.constant 0 : index
    %c90 = arith.constant 90 : index
    %68 = vector.load %arg1[%c0_36, %c0_37, %c90] : memref<1x16x256xf32, #tpu.memory_space<vmem>>, vector<1x16x16xf32>
    %69 = vector.shape_cast %68 : vector<1x16x16xf32> to vector<16x16xf32>
    %c2_38 = arith.constant 2 : index
    %70 = memref.load %arg4[%c2_38] : memref<4xf32, #tpu.memory_space<smem>>
    %71 = vector.broadcast %70 : f32 to vector<16x16xf32>
    %72 = arith.mulf %69, %71 : vector<16x16xf32>
    %c2_39 = arith.constant 2 : index
    %73 = memref.load %arg5[%c2_39] : memref<4xf32, #tpu.memory_space<smem>>
    %74 = vector.broadcast %73 : f32 to vector<16x16xf32>
    %75 = arith.addf %72, %74 : vector<16x16xf32>
    %cst_40 = arith.constant 0.000000e+00 : f32
    %76 = vector.broadcast %cst_40 : f32 to vector<16x16xf32>
    %77 = arith.maximumf %75, %76 : vector<16x16xf32>
    %c1_41 = arith.constant 1 : index
    %c91 = arith.constant 91 : index
    %78 = vector.load %arg8[%c1_41, %c91] : memref<18x384xf32, #tpu.memory_space<vmem>>, vector<16x16xf32>
    tpu.vector_store %arg8[%c1_41, %c91], %77 {strides = array<i32>} : memref<18x384xf32, #tpu.memory_space<vmem>>, vector<16x16xf32>,
    %c0_42 = arith.constant 0 : index
    %c0_43 = arith.constant 0 : index
    %c126 = arith.constant 126 : index
    %79 = vector.load %arg1[%c0_42, %c0_43, %c126] : memref<1x16x256xf32, #tpu.memory_space<vmem>>, vector<1x16x16xf32>
    %80 = vector.shape_cast %79 : vector<1x16x16xf32> to vector<16x16xf32>
    %c3_44 = arith.constant 3 : index
    %81 = memref.load %arg4[%c3_44] : memref<4xf32, #tpu.memory_space<smem>>
    %82 = vector.broadcast %81 : f32 to vector<16x16xf32>
    %83 = arith.mulf %80, %82 : vector<16x16xf32>
    %c3_45 = arith.constant 3 : index
    %84 = memref.load %arg5[%c3_45] : memref<4xf32, #tpu.memory_space<smem>>
    %85 = vector.broadcast %84 : f32 to vector<16x16xf32>
    %86 = arith.addf %83, %85 : vector<16x16xf32>
    %cst_46 = arith.constant 0.000000e+00 : f32
    %87 = vector.broadcast %cst_46 : f32 to vector<16x16xf32>
    %88 = arith.maximumf %86, %87 : vector<16x16xf32>
    %c1_47 = arith.constant 1 : index
    %c127 = arith.constant 127 : index
    %89 = vector.load %arg8[%c1_47, %c127] : memref<18x384xf32, #tpu.memory_space<vmem>>, vector<16x16xf32>
    tpu.vector_store %arg8[%c1_47, %c127], %88 {strides = array<i32>} : memref<18x384xf32, #tpu.memory_space<vmem>>, vector<16x16xf32>,
    %cst_48 = arith.constant 0.000000e+00 : f32
    %90 = vector.broadcast %cst_48 : f32 to vector<16x256xf32>
    %c0_49 = arith.constant 0 : index
    %c0_50 = arith.constant 0 : index
    %91 = vector.load %arg8[%c0_49, %c0_50] : memref<18x384xf32, #tpu.memory_space<vmem>>, vector<16x256xf32>
    %c0_51 = arith.constant 0 : index
    %c0_52 = arith.constant 0 : index
    %92 = vector.load %arg2[%c0_51, %c0_52] : memref<9x256xf32, #tpu.memory_space<vmem>>, vector<1x256xf32>
    %93 = vector.broadcast %92 : vector<1x256xf32> to vector<16x256xf32>
    %94 = arith.mulf %91, %93 : vector<16x256xf32>
    %95 = arith.addf %90, %94 : vector<16x256xf32>
    %c0_53 = arith.constant 0 : index
    %c1_54 = arith.constant 1 : index
    %96 = vector.load %arg8[%c0_53, %c1_54] : memref<18x384xf32, #tpu.memory_space<vmem>>, vector<16x256xf32>
    %c1_55 = arith.constant 1 : index
    %c0_56 = arith.constant 0 : index
    %97 = vector.load %arg2[%c1_55, %c0_56] : memref<9x256xf32, #tpu.memory_space<vmem>>, vector<1x256xf32>
    %98 = vector.broadcast %97 : vector<1x256xf32> to vector<16x256xf32>
    %99 = arith.mulf %96, %98 : vector<16x256xf32>
    %100 = arith.addf %95, %99 : vector<16x256xf32>
    %c0_57 = arith.constant 0 : index
    %c2_58 = arith.constant 2 : index
    %101 = vector.load %arg8[%c0_57, %c2_58] : memref<18x384xf32, #tpu.memory_space<vmem>>, vector<16x256xf32>
    %c2_59 = arith.constant 2 : index
    %c0_60 = arith.constant 0 : index
    %102 = vector.load %arg2[%c2_59, %c0_60] : memref<9x256xf32, #tpu.memory_space<vmem>>, vector<1x256xf32>
    %103 = vector.broadcast %102 : vector<1x256xf32> to vector<16x256xf32>
    %104 = arith.mulf %101, %103 : vector<16x256xf32>
    %105 = arith.addf %100, %104 : vector<16x256xf32>
    %c1_61 = arith.constant 1 : index
    %c0_62 = arith.constant 0 : index
    %106 = vector.load %arg8[%c1_61, %c0_62] : memref<18x384xf32, #tpu.memory_space<vmem>>, vector<16x256xf32>
    %c3_63 = arith.constant 3 : index
    %c0_64 = arith.constant 0 : index
    %107 = vector.load %arg2[%c3_63, %c0_64] : memref<9x256xf32, #tpu.memory_space<vmem>>, vector<1x256xf32>
    %108 = vector.broadcast %107 : vector<1x256xf32> to vector<16x256xf32>
    %109 = arith.mulf %106, %108 : vector<16x256xf32>
    %110 = arith.addf %105, %109 : vector<16x256xf32>
    %c1_65 = arith.constant 1 : index
    %c1_66 = arith.constant 1 : index
    %111 = vector.load %arg8[%c1_65, %c1_66] : memref<18x384xf32, #tpu.memory_space<vmem>>, vector<16x256xf32>
    %c4 = arith.constant 4 : index
    %c0_67 = arith.constant 0 : index
    %112 = vector.load %arg2[%c4, %c0_67] : memref<9x256xf32, #tpu.memory_space<vmem>>, vector<1x256xf32>
    %113 = vector.broadcast %112 : vector<1x256xf32> to vector<16x256xf32>
    %114 = arith.mulf %111, %113 : vector<16x256xf32>
    %115 = arith.addf %110, %114 : vector<16x256xf32>
    %c1_68 = arith.constant 1 : index
    %c2_69 = arith.constant 2 : index
    %116 = vector.load %arg8[%c1_68, %c2_69] : memref<18x384xf32, #tpu.memory_space<vmem>>, vector<16x256xf32>
    %c5 = arith.constant 5 : index
    %c0_70 = arith.constant 0 : index
    %117 = vector.load %arg2[%c5, %c0_70] : memref<9x256xf32, #tpu.memory_space<vmem>>, vector<1x256xf32>
    %118 = vector.broadcast %117 : vector<1x256xf32> to vector<16x256xf32>
    %119 = arith.mulf %116, %118 : vector<16x256xf32>
    %120 = arith.addf %115, %119 : vector<16x256xf32>
    %c2_71 = arith.constant 2 : index
    %c0_72 = arith.constant 0 : index
    %121 = vector.load %arg8[%c2_71, %c0_72] : memref<18x384xf32, #tpu.memory_space<vmem>>, vector<16x256xf32>
    %c6 = arith.constant 6 : index
    %c0_73 = arith.constant 0 : index
    %122 = vector.load %arg2[%c6, %c0_73] : memref<9x256xf32, #tpu.memory_space<vmem>>, vector<1x256xf32>
    %123 = vector.broadcast %122 : vector<1x256xf32> to vector<16x256xf32>
    %124 = arith.mulf %121, %123 : vector<16x256xf32>
    %125 = arith.addf %120, %124 : vector<16x256xf32>
    %c2_74 = arith.constant 2 : index
    %c1_75 = arith.constant 1 : index
    %126 = vector.load %arg8[%c2_74, %c1_75] : memref<18x384xf32, #tpu.memory_space<vmem>>, vector<16x256xf32>
    %c7 = arith.constant 7 : index
    %c0_76 = arith.constant 0 : index
    %127 = vector.load %arg2[%c7, %c0_76] : memref<9x256xf32, #tpu.memory_space<vmem>>, vector<1x256xf32>
    %128 = vector.broadcast %127 : vector<1x256xf32> to vector<16x256xf32>
    %129 = arith.mulf %126, %128 : vector<16x256xf32>
    %130 = arith.addf %125, %129 : vector<16x256xf32>
    %c2_77 = arith.constant 2 : index
    %c2_78 = arith.constant 2 : index
    %131 = vector.load %arg8[%c2_77, %c2_78] : memref<18x384xf32, #tpu.memory_space<vmem>>, vector<16x256xf32>
    %c8 = arith.constant 8 : index
    %c0_79 = arith.constant 0 : index
    %132 = vector.load %arg2[%c8, %c0_79] : memref<9x256xf32, #tpu.memory_space<vmem>>, vector<1x256xf32>
    %133 = vector.broadcast %132 : vector<1x256xf32> to vector<16x256xf32>
    %134 = arith.mulf %131, %133 : vector<16x256xf32>
    %135 = arith.addf %130, %134 : vector<16x256xf32>
    %136 = vector.extract_strided_slice %135 {offsets = [0, 0], sizes = [16, 36], strides = [1, 1]} : vector<16x256xf32> to vector<16x36xf32>
    %137 = vector.extract_strided_slice %135 {offsets = [0, 36], sizes = [16, 36], strides = [1, 1]} : vector<16x256xf32> to vector<16x36xf32>
    %138 = vector.extract_strided_slice %135 {offsets = [0, 72], sizes = [16, 36], strides = [1, 1]} : vector<16x256xf32> to vector<16x36xf32>
    %139 = vector.extract_strided_slice %135 {offsets = [0, 108], sizes = [16, 36], strides = [1, 1]} : vector<16x256xf32> to vector<16x36xf32>
    %c0_80 = arith.constant 0 : index
    %140 = memref.load %arg3[%c0_80] : memref<32xf32, #tpu.memory_space<smem>>
    %141 = vector.broadcast %140 : f32 to vector<16x36xf32>
    %142 = arith.mulf %136, %141 : vector<16x36xf32>
    %c8_81 = arith.constant 8 : index
    %143 = memref.load %arg3[%c8_81] : memref<32xf32, #tpu.memory_space<smem>>
    %144 = vector.broadcast %143 : f32 to vector<16x36xf32>
    %145 = arith.mulf %137, %144 : vector<16x36xf32>
    %146 = arith.addf %142, %145 : vector<16x36xf32>
    %c16 = arith.constant 16 : index
    %147 = memref.load %arg3[%c16] : memref<32xf32, #tpu.memory_space<smem>>
    %148 = vector.broadcast %147 : f32 to vector<16x36xf32>
    %149 = arith.mulf %138, %148 : vector<16x36xf32>
    %150 = arith.addf %146, %149 : vector<16x36xf32>
    %c24 = arith.constant 24 : index
    %151 = memref.load %arg3[%c24] : memref<32xf32, #tpu.memory_space<smem>>
    %152 = vector.broadcast %151 : f32 to vector<16x36xf32>
    %153 = arith.mulf %139, %152 : vector<16x36xf32>
    %154 = arith.addf %150, %153 : vector<16x36xf32>
    %c1_82 = arith.constant 1 : index
    %155 = memref.load %arg3[%c1_82] : memref<32xf32, #tpu.memory_space<smem>>
    %156 = vector.broadcast %155 : f32 to vector<16x36xf32>
    %157 = arith.mulf %136, %156 : vector<16x36xf32>
    %c9 = arith.constant 9 : index
    %158 = memref.load %arg3[%c9] : memref<32xf32, #tpu.memory_space<smem>>
    %159 = vector.broadcast %158 : f32 to vector<16x36xf32>
    %160 = arith.mulf %137, %159 : vector<16x36xf32>
    %161 = arith.addf %157, %160 : vector<16x36xf32>
    %c17 = arith.constant 17 : index
    %162 = memref.load %arg3[%c17] : memref<32xf32, #tpu.memory_space<smem>>
    %163 = vector.broadcast %162 : f32 to vector<16x36xf32>
    %164 = arith.mulf %138, %163 : vector<16x36xf32>
    %165 = arith.addf %161, %164 : vector<16x36xf32>
    %c25 = arith.constant 25 : index
    %166 = memref.load %arg3[%c25] : memref<32xf32, #tpu.memory_space<smem>>
    %167 = vector.broadcast %166 : f32 to vector<16x36xf32>
    %168 = arith.mulf %139, %167 : vector<16x36xf32>
    %169 = arith.addf %165, %168 : vector<16x36xf32>
    %c2_83 = arith.constant 2 : index
    %170 = memref.load %arg3[%c2_83] : memref<32xf32, #tpu.memory_space<smem>>
    %171 = vector.broadcast %170 : f32 to vector<16x36xf32>
    %172 = arith.mulf %136, %171 : vector<16x36xf32>
    %c10 = arith.constant 10 : index
    %173 = memref.load %arg3[%c10] : memref<32xf32, #tpu.memory_space<smem>>
    %174 = vector.broadcast %173 : f32 to vector<16x36xf32>
    %175 = arith.mulf %137, %174 : vector<16x36xf32>
    %176 = arith.addf %172, %175 : vector<16x36xf32>
    %c18_84 = arith.constant 18 : index
    %177 = memref.load %arg3[%c18_84] : memref<32xf32, #tpu.memory_space<smem>>
    %178 = vector.broadcast %177 : f32 to vector<16x36xf32>
    %179 = arith.mulf %138, %178 : vector<16x36xf32>
    %180 = arith.addf %176, %179 : vector<16x36xf32>
    %c26 = arith.constant 26 : index
    %181 = memref.load %arg3[%c26] : memref<32xf32, #tpu.memory_space<smem>>
    %182 = vector.broadcast %181 : f32 to vector<16x36xf32>
    %183 = arith.mulf %139, %182 : vector<16x36xf32>
    %184 = arith.addf %180, %183 : vector<16x36xf32>
    %c3_85 = arith.constant 3 : index
    %185 = memref.load %arg3[%c3_85] : memref<32xf32, #tpu.memory_space<smem>>
    %186 = vector.broadcast %185 : f32 to vector<16x36xf32>
    %187 = arith.mulf %136, %186 : vector<16x36xf32>
    %c11 = arith.constant 11 : index
    %188 = memref.load %arg3[%c11] : memref<32xf32, #tpu.memory_space<smem>>
    %189 = vector.broadcast %188 : f32 to vector<16x36xf32>
    %190 = arith.mulf %137, %189 : vector<16x36xf32>
    %191 = arith.addf %187, %190 : vector<16x36xf32>
    %c19_86 = arith.constant 19 : index
    %192 = memref.load %arg3[%c19_86] : memref<32xf32, #tpu.memory_space<smem>>
    %193 = vector.broadcast %192 : f32 to vector<16x36xf32>
    %194 = arith.mulf %138, %193 : vector<16x36xf32>
    %195 = arith.addf %191, %194 : vector<16x36xf32>
    %c27 = arith.constant 27 : index
    %196 = memref.load %arg3[%c27] : memref<32xf32, #tpu.memory_space<smem>>
    %197 = vector.broadcast %196 : f32 to vector<16x36xf32>
    %198 = arith.mulf %139, %197 : vector<16x36xf32>
    %199 = arith.addf %195, %198 : vector<16x36xf32>
    %c4_87 = arith.constant 4 : index
    %200 = memref.load %arg3[%c4_87] : memref<32xf32, #tpu.memory_space<smem>>
    %201 = vector.broadcast %200 : f32 to vector<16x36xf32>
    %202 = arith.mulf %136, %201 : vector<16x36xf32>
    %c12 = arith.constant 12 : index
    %203 = memref.load %arg3[%c12] : memref<32xf32, #tpu.memory_space<smem>>
    %204 = vector.broadcast %203 : f32 to vector<16x36xf32>
    %205 = arith.mulf %137, %204 : vector<16x36xf32>
    %206 = arith.addf %202, %205 : vector<16x36xf32>
    %c20 = arith.constant 20 : index
    %207 = memref.load %arg3[%c20] : memref<32xf32, #tpu.memory_space<smem>>
    %208 = vector.broadcast %207 : f32 to vector<16x36xf32>
    %209 = arith.mulf %138, %208 : vector<16x36xf32>
    %210 = arith.addf %206, %209 : vector<16x36xf32>
    %c28 = arith.constant 28 : index
    %211 = memref.load %arg3[%c28] : memref<32xf32, #tpu.memory_space<smem>>
    %212 = vector.broadcast %211 : f32 to vector<16x36xf32>
    %213 = arith.mulf %139, %212 : vector<16x36xf32>
    %214 = arith.addf %210, %213 : vector<16x36xf32>
    %c5_88 = arith.constant 5 : index
    %215 = memref.load %arg3[%c5_88] : memref<32xf32, #tpu.memory_space<smem>>
    %216 = vector.broadcast %215 : f32 to vector<16x36xf32>
    %217 = arith.mulf %136, %216 : vector<16x36xf32>
    %c13 = arith.constant 13 : index
    %218 = memref.load %arg3[%c13] : memref<32xf32, #tpu.memory_space<smem>>
    %219 = vector.broadcast %218 : f32 to vector<16x36xf32>
    %220 = arith.mulf %137, %219 : vector<16x36xf32>
    %221 = arith.addf %217, %220 : vector<16x36xf32>
    %c21 = arith.constant 21 : index
    %222 = memref.load %arg3[%c21] : memref<32xf32, #tpu.memory_space<smem>>
    %223 = vector.broadcast %222 : f32 to vector<16x36xf32>
    %224 = arith.mulf %138, %223 : vector<16x36xf32>
    %225 = arith.addf %221, %224 : vector<16x36xf32>
    %c29 = arith.constant 29 : index
    %226 = memref.load %arg3[%c29] : memref<32xf32, #tpu.memory_space<smem>>
    %227 = vector.broadcast %226 : f32 to vector<16x36xf32>
    %228 = arith.mulf %139, %227 : vector<16x36xf32>
    %229 = arith.addf %225, %228 : vector<16x36xf32>
    %c6_89 = arith.constant 6 : index
    %230 = memref.load %arg3[%c6_89] : memref<32xf32, #tpu.memory_space<smem>>
    %231 = vector.broadcast %230 : f32 to vector<16x36xf32>
    %232 = arith.mulf %136, %231 : vector<16x36xf32>
    %c14 = arith.constant 14 : index
    %233 = memref.load %arg3[%c14] : memref<32xf32, #tpu.memory_space<smem>>
    %234 = vector.broadcast %233 : f32 to vector<16x36xf32>
    %235 = arith.mulf %137, %234 : vector<16x36xf32>
    %236 = arith.addf %232, %235 : vector<16x36xf32>
    %c22 = arith.constant 22 : index
    %237 = memref.load %arg3[%c22] : memref<32xf32, #tpu.memory_space<smem>>
    %238 = vector.broadcast %237 : f32 to vector<16x36xf32>
    %239 = arith.mulf %138, %238 : vector<16x36xf32>
    %240 = arith.addf %236, %239 : vector<16x36xf32>
    %c30 = arith.constant 30 : index
    %241 = memref.load %arg3[%c30] : memref<32xf32, #tpu.memory_space<smem>>
    %242 = vector.broadcast %241 : f32 to vector<16x36xf32>
    %243 = arith.mulf %139, %242 : vector<16x36xf32>
    %244 = arith.addf %240, %243 : vector<16x36xf32>
    %c7_90 = arith.constant 7 : index
    %245 = memref.load %arg3[%c7_90] : memref<32xf32, #tpu.memory_space<smem>>
    %246 = vector.broadcast %245 : f32 to vector<16x36xf32>
    %247 = arith.mulf %136, %246 : vector<16x36xf32>
    %c15 = arith.constant 15 : index
    %248 = memref.load %arg3[%c15] : memref<32xf32, #tpu.memory_space<smem>>
    %249 = vector.broadcast %248 : f32 to vector<16x36xf32>
    %250 = arith.mulf %137, %249 : vector<16x36xf32>
    %251 = arith.addf %247, %250 : vector<16x36xf32>
    %c23 = arith.constant 23 : index
    %252 = memref.load %arg3[%c23] : memref<32xf32, #tpu.memory_space<smem>>
    %253 = vector.broadcast %252 : f32 to vector<16x36xf32>
    %254 = arith.mulf %138, %253 : vector<16x36xf32>
    %255 = arith.addf %251, %254 : vector<16x36xf32>
    %c31 = arith.constant 31 : index
    %256 = memref.load %arg3[%c31] : memref<32xf32, #tpu.memory_space<smem>>
    %257 = vector.broadcast %256 : f32 to vector<16x36xf32>
    %258 = arith.mulf %139, %257 : vector<16x36xf32>
    %259 = arith.addf %255, %258 : vector<16x36xf32>
    %cst_91 = arith.constant dense<0.000000e+00> : vector<36xf32>
    %260 = vector.multi_reduction <add>, %154, %cst_91 [0] : vector<16x36xf32> to vector<36xf32>
    %261 = vector.shape_cast %260 : vector<36xf32> to vector<1x36xf32>
    %c0_92 = arith.constant 0 : index
    %c0_93 = arith.constant 0 : index
    %c0_94 = arith.constant 0 : index
    %262 = vector.load %arg7[%c0_92, %c0_93, %c0_94] : memref<1x16x128xf32, #tpu.memory_space<vmem>>, vector<1x1x36xf32>
    %263 = vector.shape_cast %262 : vector<1x1x36xf32> to vector<1x36xf32>
    %264 = vector.shape_cast %261 : vector<1x36xf32> to vector<1x1x36xf32>
    tpu.vector_store %arg7[%c0_92, %c0_93, %c0_94], %264 {strides = array<i32>} : memref<1x16x128xf32, #tpu.memory_space<vmem>>, vector<1x1x36xf32>,
    %265 = arith.mulf %154, %154 : vector<16x36xf32>
    %cst_95 = arith.constant dense<0.000000e+00> : vector<36xf32>
    %266 = vector.multi_reduction <add>, %265, %cst_95 [0] : vector<16x36xf32> to vector<36xf32>
    %267 = vector.shape_cast %266 : vector<36xf32> to vector<1x36xf32>
    %c0_96 = arith.constant 0 : index
    %c8_97 = arith.constant 8 : index
    %c0_98 = arith.constant 0 : index
    %268 = vector.load %arg7[%c0_96, %c8_97, %c0_98] : memref<1x16x128xf32, #tpu.memory_space<vmem>>, vector<1x1x36xf32>
    %269 = vector.shape_cast %268 : vector<1x1x36xf32> to vector<1x36xf32>
    %270 = vector.shape_cast %267 : vector<1x36xf32> to vector<1x1x36xf32>
    tpu.vector_store %arg7[%c0_96, %c8_97, %c0_98], %270 {strides = array<i32>} : memref<1x16x128xf32, #tpu.memory_space<vmem>>, vector<1x1x36xf32>,
    %c0_99 = arith.constant 0 : index
    %c0_100 = arith.constant 0 : index
    %c0_101 = arith.constant 0 : index
    %271 = vector.load %arg6[%c0_99, %c0_100, %c0_101] : memref<1x16x384xf32, #tpu.memory_space<vmem>>, vector<1x16x36xf32>
    %272 = vector.shape_cast %271 : vector<1x16x36xf32> to vector<16x36xf32>
    %273 = vector.shape_cast %154 : vector<16x36xf32> to vector<1x16x36xf32>
    tpu.vector_store %arg6[%c0_99, %c0_100, %c0_101], %273 {strides = array<i32>} : memref<1x16x384xf32, #tpu.memory_space<vmem>>, vector<1x16x36xf32>,
    %cst_102 = arith.constant dense<0.000000e+00> : vector<36xf32>
    %274 = vector.multi_reduction <add>, %169, %cst_102 [0] : vector<16x36xf32> to vector<36xf32>
    %275 = vector.shape_cast %274 : vector<36xf32> to vector<1x36xf32>
    %c0_103 = arith.constant 0 : index
    %c1_104 = arith.constant 1 : index
    %c0_105 = arith.constant 0 : index
    %276 = vector.load %arg7[%c0_103, %c1_104, %c0_105] : memref<1x16x128xf32, #tpu.memory_space<vmem>>, vector<1x1x36xf32>
    %277 = vector.shape_cast %276 : vector<1x1x36xf32> to vector<1x36xf32>
    %278 = vector.shape_cast %275 : vector<1x36xf32> to vector<1x1x36xf32>
    tpu.vector_store %arg7[%c0_103, %c1_104, %c0_105], %278 {strides = array<i32>} : memref<1x16x128xf32, #tpu.memory_space<vmem>>, vector<1x1x36xf32>,
    %279 = arith.mulf %169, %169 : vector<16x36xf32>
    %cst_106 = arith.constant dense<0.000000e+00> : vector<36xf32>
    %280 = vector.multi_reduction <add>, %279, %cst_106 [0] : vector<16x36xf32> to vector<36xf32>
    %281 = vector.shape_cast %280 : vector<36xf32> to vector<1x36xf32>
    %c0_107 = arith.constant 0 : index
    %c9_108 = arith.constant 9 : index
    %c0_109 = arith.constant 0 : index
    %282 = vector.load %arg7[%c0_107, %c9_108, %c0_109] : memref<1x16x128xf32, #tpu.memory_space<vmem>>, vector<1x1x36xf32>
    %283 = vector.shape_cast %282 : vector<1x1x36xf32> to vector<1x36xf32>
    %284 = vector.shape_cast %281 : vector<1x36xf32> to vector<1x1x36xf32>
    tpu.vector_store %arg7[%c0_107, %c9_108, %c0_109], %284 {strides = array<i32>} : memref<1x16x128xf32, #tpu.memory_space<vmem>>, vector<1x1x36xf32>,
    %c0_110 = arith.constant 0 : index
    %c0_111 = arith.constant 0 : index
    %c36_112 = arith.constant 36 : index
    %285 = vector.load %arg6[%c0_110, %c0_111, %c36_112] : memref<1x16x384xf32, #tpu.memory_space<vmem>>, vector<1x16x36xf32>
    %286 = vector.shape_cast %285 : vector<1x16x36xf32> to vector<16x36xf32>
    %287 = vector.shape_cast %169 : vector<16x36xf32> to vector<1x16x36xf32>
    tpu.vector_store %arg6[%c0_110, %c0_111, %c36_112], %287 {strides = array<i32>} : memref<1x16x384xf32, #tpu.memory_space<vmem>>, vector<1x16x36xf32>,
    %cst_113 = arith.constant dense<0.000000e+00> : vector<36xf32>
    %288 = vector.multi_reduction <add>, %184, %cst_113 [0] : vector<16x36xf32> to vector<36xf32>
    %289 = vector.shape_cast %288 : vector<36xf32> to vector<1x36xf32>
    %c0_114 = arith.constant 0 : index
    %c2_115 = arith.constant 2 : index
    %c0_116 = arith.constant 0 : index
    %290 = vector.load %arg7[%c0_114, %c2_115, %c0_116] : memref<1x16x128xf32, #tpu.memory_space<vmem>>, vector<1x1x36xf32>
    %291 = vector.shape_cast %290 : vector<1x1x36xf32> to vector<1x36xf32>
    %292 = vector.shape_cast %289 : vector<1x36xf32> to vector<1x1x36xf32>
    tpu.vector_store %arg7[%c0_114, %c2_115, %c0_116], %292 {strides = array<i32>} : memref<1x16x128xf32, #tpu.memory_space<vmem>>, vector<1x1x36xf32>,
    %293 = arith.mulf %184, %184 : vector<16x36xf32>
    %cst_117 = arith.constant dense<0.000000e+00> : vector<36xf32>
    %294 = vector.multi_reduction <add>, %293, %cst_117 [0] : vector<16x36xf32> to vector<36xf32>
    %295 = vector.shape_cast %294 : vector<36xf32> to vector<1x36xf32>
    %c0_118 = arith.constant 0 : index
    %c10_119 = arith.constant 10 : index
    %c0_120 = arith.constant 0 : index
    %296 = vector.load %arg7[%c0_118, %c10_119, %c0_120] : memref<1x16x128xf32, #tpu.memory_space<vmem>>, vector<1x1x36xf32>
    %297 = vector.shape_cast %296 : vector<1x1x36xf32> to vector<1x36xf32>
    %298 = vector.shape_cast %295 : vector<1x36xf32> to vector<1x1x36xf32>
    tpu.vector_store %arg7[%c0_118, %c10_119, %c0_120], %298 {strides = array<i32>} : memref<1x16x128xf32, #tpu.memory_space<vmem>>, vector<1x1x36xf32>,
    %c0_121 = arith.constant 0 : index
    %c0_122 = arith.constant 0 : index
    %c72_123 = arith.constant 72 : index
    %299 = vector.load %arg6[%c0_121, %c0_122, %c72_123] : memref<1x16x384xf32, #tpu.memory_space<vmem>>, vector<1x16x36xf32>
    %300 = vector.shape_cast %299 : vector<1x16x36xf32> to vector<16x36xf32>
    %301 = vector.shape_cast %184 : vector<16x36xf32> to vector<1x16x36xf32>
    tpu.vector_store %arg6[%c0_121, %c0_122, %c72_123], %301 {strides = array<i32>} : memref<1x16x384xf32, #tpu.memory_space<vmem>>, vector<1x16x36xf32>,
    %cst_124 = arith.constant dense<0.000000e+00> : vector<36xf32>
    %302 = vector.multi_reduction <add>, %199, %cst_124 [0] : vector<16x36xf32> to vector<36xf32>
    %303 = vector.shape_cast %302 : vector<36xf32> to vector<1x36xf32>
    %c0_125 = arith.constant 0 : index
    %c3_126 = arith.constant 3 : index
    %c0_127 = arith.constant 0 : index
    %304 = vector.load %arg7[%c0_125, %c3_126, %c0_127] : memref<1x16x128xf32, #tpu.memory_space<vmem>>, vector<1x1x36xf32>
    %305 = vector.shape_cast %304 : vector<1x1x36xf32> to vector<1x36xf32>
    %306 = vector.shape_cast %303 : vector<1x36xf32> to vector<1x1x36xf32>
    tpu.vector_store %arg7[%c0_125, %c3_126, %c0_127], %306 {strides = array<i32>} : memref<1x16x128xf32, #tpu.memory_space<vmem>>, vector<1x1x36xf32>,
    %307 = arith.mulf %199, %199 : vector<16x36xf32>
    %cst_128 = arith.constant dense<0.000000e+00> : vector<36xf32>
    %308 = vector.multi_reduction <add>, %307, %cst_128 [0] : vector<16x36xf32> to vector<36xf32>
    %309 = vector.shape_cast %308 : vector<36xf32> to vector<1x36xf32>
    %c0_129 = arith.constant 0 : index
    %c11_130 = arith.constant 11 : index
    %c0_131 = arith.constant 0 : index
    %310 = vector.load %arg7[%c0_129, %c11_130, %c0_131] : memref<1x16x128xf32, #tpu.memory_space<vmem>>, vector<1x1x36xf32>
    %311 = vector.shape_cast %310 : vector<1x1x36xf32> to vector<1x36xf32>
    %312 = vector.shape_cast %309 : vector<1x36xf32> to vector<1x1x36xf32>
    tpu.vector_store %arg7[%c0_129, %c11_130, %c0_131], %312 {strides = array<i32>} : memref<1x16x128xf32, #tpu.memory_space<vmem>>, vector<1x1x36xf32>,
    %c0_132 = arith.constant 0 : index
    %c0_133 = arith.constant 0 : index
    %c108_134 = arith.constant 108 : index
    %313 = vector.load %arg6[%c0_132, %c0_133, %c108_134] : memref<1x16x384xf32, #tpu.memory_space<vmem>>, vector<1x16x36xf32>
    %314 = vector.shape_cast %313 : vector<1x16x36xf32> to vector<16x36xf32>
    %315 = vector.shape_cast %199 : vector<16x36xf32> to vector<1x16x36xf32>
    tpu.vector_store %arg6[%c0_132, %c0_133, %c108_134], %315 {strides = array<i32>} : memref<1x16x384xf32, #tpu.memory_space<vmem>>, vector<1x16x36xf32>,
    %cst_135 = arith.constant dense<0.000000e+00> : vector<36xf32>
    %316 = vector.multi_reduction <add>, %214, %cst_135 [0] : vector<16x36xf32> to vector<36xf32>
    %317 = vector.shape_cast %316 : vector<36xf32> to vector<1x36xf32>
    %c0_136 = arith.constant 0 : index
    %c4_137 = arith.constant 4 : index
    %c0_138 = arith.constant 0 : index
    %318 = vector.load %arg7[%c0_136, %c4_137, %c0_138] : memref<1x16x128xf32, #tpu.memory_space<vmem>>, vector<1x1x36xf32>
    %319 = vector.shape_cast %318 : vector<1x1x36xf32> to vector<1x36xf32>
    %320 = vector.shape_cast %317 : vector<1x36xf32> to vector<1x1x36xf32>
    tpu.vector_store %arg7[%c0_136, %c4_137, %c0_138], %320 {strides = array<i32>} : memref<1x16x128xf32, #tpu.memory_space<vmem>>, vector<1x1x36xf32>,
    %321 = arith.mulf %214, %214 : vector<16x36xf32>
    %cst_139 = arith.constant dense<0.000000e+00> : vector<36xf32>
    %322 = vector.multi_reduction <add>, %321, %cst_139 [0] : vector<16x36xf32> to vector<36xf32>
    %323 = vector.shape_cast %322 : vector<36xf32> to vector<1x36xf32>
    %c0_140 = arith.constant 0 : index
    %c12_141 = arith.constant 12 : index
    %c0_142 = arith.constant 0 : index
    %324 = vector.load %arg7[%c0_140, %c12_141, %c0_142] : memref<1x16x128xf32, #tpu.memory_space<vmem>>, vector<1x1x36xf32>
    %325 = vector.shape_cast %324 : vector<1x1x36xf32> to vector<1x36xf32>
    %326 = vector.shape_cast %323 : vector<1x36xf32> to vector<1x1x36xf32>
    tpu.vector_store %arg7[%c0_140, %c12_141, %c0_142], %326 {strides = array<i32>} : memref<1x16x128xf32, #tpu.memory_space<vmem>>, vector<1x1x36xf32>,
    %c0_143 = arith.constant 0 : index
    %c0_144 = arith.constant 0 : index
    %c144 = arith.constant 144 : index
    %327 = vector.load %arg6[%c0_143, %c0_144, %c144] : memref<1x16x384xf32, #tpu.memory_space<vmem>>, vector<1x16x36xf32>
    %328 = vector.shape_cast %327 : vector<1x16x36xf32> to vector<16x36xf32>
    %329 = vector.shape_cast %214 : vector<16x36xf32> to vector<1x16x36xf32>
    tpu.vector_store %arg6[%c0_143, %c0_144, %c144], %329 {strides = array<i32>} : memref<1x16x384xf32, #tpu.memory_space<vmem>>, vector<1x16x36xf32>,
    %cst_145 = arith.constant dense<0.000000e+00> : vector<36xf32>
    %330 = vector.multi_reduction <add>, %229, %cst_145 [0] : vector<16x36xf32> to vector<36xf32>
    %331 = vector.shape_cast %330 : vector<36xf32> to vector<1x36xf32>
    %c0_146 = arith.constant 0 : index
    %c5_147 = arith.constant 5 : index
    %c0_148 = arith.constant 0 : index
    %332 = vector.load %arg7[%c0_146, %c5_147, %c0_148] : memref<1x16x128xf32, #tpu.memory_space<vmem>>, vector<1x1x36xf32>
    %333 = vector.shape_cast %332 : vector<1x1x36xf32> to vector<1x36xf32>
    %334 = vector.shape_cast %331 : vector<1x36xf32> to vector<1x1x36xf32>
    tpu.vector_store %arg7[%c0_146, %c5_147, %c0_148], %334 {strides = array<i32>} : memref<1x16x128xf32, #tpu.memory_space<vmem>>, vector<1x1x36xf32>,
    %335 = arith.mulf %229, %229 : vector<16x36xf32>
    %cst_149 = arith.constant dense<0.000000e+00> : vector<36xf32>
    %336 = vector.multi_reduction <add>, %335, %cst_149 [0] : vector<16x36xf32> to vector<36xf32>
    %337 = vector.shape_cast %336 : vector<36xf32> to vector<1x36xf32>
    %c0_150 = arith.constant 0 : index
    %c13_151 = arith.constant 13 : index
    %c0_152 = arith.constant 0 : index
    %338 = vector.load %arg7[%c0_150, %c13_151, %c0_152] : memref<1x16x128xf32, #tpu.memory_space<vmem>>, vector<1x1x36xf32>
    %339 = vector.shape_cast %338 : vector<1x1x36xf32> to vector<1x36xf32>
    %340 = vector.shape_cast %337 : vector<1x36xf32> to vector<1x1x36xf32>
    tpu.vector_store %arg7[%c0_150, %c13_151, %c0_152], %340 {strides = array<i32>} : memref<1x16x128xf32, #tpu.memory_space<vmem>>, vector<1x1x36xf32>,
    %c0_153 = arith.constant 0 : index
    %c0_154 = arith.constant 0 : index
    %c180 = arith.constant 180 : index
    %341 = vector.load %arg6[%c0_153, %c0_154, %c180] : memref<1x16x384xf32, #tpu.memory_space<vmem>>, vector<1x16x36xf32>
    %342 = vector.shape_cast %341 : vector<1x16x36xf32> to vector<16x36xf32>
    %343 = vector.shape_cast %229 : vector<16x36xf32> to vector<1x16x36xf32>
    tpu.vector_store %arg6[%c0_153, %c0_154, %c180], %343 {strides = array<i32>} : memref<1x16x384xf32, #tpu.memory_space<vmem>>, vector<1x16x36xf32>,
    %cst_155 = arith.constant dense<0.000000e+00> : vector<36xf32>
    %344 = vector.multi_reduction <add>, %244, %cst_155 [0] : vector<16x36xf32> to vector<36xf32>
    %345 = vector.shape_cast %344 : vector<36xf32> to vector<1x36xf32>
    %c0_156 = arith.constant 0 : index
    %c6_157 = arith.constant 6 : index
    %c0_158 = arith.constant 0 : index
    %346 = vector.load %arg7[%c0_156, %c6_157, %c0_158] : memref<1x16x128xf32, #tpu.memory_space<vmem>>, vector<1x1x36xf32>
    %347 = vector.shape_cast %346 : vector<1x1x36xf32> to vector<1x36xf32>
    %348 = vector.shape_cast %345 : vector<1x36xf32> to vector<1x1x36xf32>
    tpu.vector_store %arg7[%c0_156, %c6_157, %c0_158], %348 {strides = array<i32>} : memref<1x16x128xf32, #tpu.memory_space<vmem>>, vector<1x1x36xf32>,
    %349 = arith.mulf %244, %244 : vector<16x36xf32>
    %cst_159 = arith.constant dense<0.000000e+00> : vector<36xf32>
    %350 = vector.multi_reduction <add>, %349, %cst_159 [0] : vector<16x36xf32> to vector<36xf32>
    %351 = vector.shape_cast %350 : vector<36xf32> to vector<1x36xf32>
    %c0_160 = arith.constant 0 : index
    %c14_161 = arith.constant 14 : index
    %c0_162 = arith.constant 0 : index
    %352 = vector.load %arg7[%c0_160, %c14_161, %c0_162] : memref<1x16x128xf32, #tpu.memory_space<vmem>>, vector<1x1x36xf32>
    %353 = vector.shape_cast %352 : vector<1x1x36xf32> to vector<1x36xf32>
    %354 = vector.shape_cast %351 : vector<1x36xf32> to vector<1x1x36xf32>
    tpu.vector_store %arg7[%c0_160, %c14_161, %c0_162], %354 {strides = array<i32>} : memref<1x16x128xf32, #tpu.memory_space<vmem>>, vector<1x1x36xf32>,
    %c0_163 = arith.constant 0 : index
    %c0_164 = arith.constant 0 : index
    %c216 = arith.constant 216 : index
    %355 = vector.load %arg6[%c0_163, %c0_164, %c216] : memref<1x16x384xf32, #tpu.memory_space<vmem>>, vector<1x16x36xf32>
    %356 = vector.shape_cast %355 : vector<1x16x36xf32> to vector<16x36xf32>
    %357 = vector.shape_cast %244 : vector<16x36xf32> to vector<1x16x36xf32>
    tpu.vector_store %arg6[%c0_163, %c0_164, %c216], %357 {strides = array<i32>} : memref<1x16x384xf32, #tpu.memory_space<vmem>>, vector<1x16x36xf32>,
    %cst_165 = arith.constant dense<0.000000e+00> : vector<36xf32>
    %358 = vector.multi_reduction <add>, %259, %cst_165 [0] : vector<16x36xf32> to vector<36xf32>
    %359 = vector.shape_cast %358 : vector<36xf32> to vector<1x36xf32>
    %c0_166 = arith.constant 0 : index
    %c7_167 = arith.constant 7 : index
    %c0_168 = arith.constant 0 : index
    %360 = vector.load %arg7[%c0_166, %c7_167, %c0_168] : memref<1x16x128xf32, #tpu.memory_space<vmem>>, vector<1x1x36xf32>
    %361 = vector.shape_cast %360 : vector<1x1x36xf32> to vector<1x36xf32>
    %362 = vector.shape_cast %359 : vector<1x36xf32> to vector<1x1x36xf32>
    tpu.vector_store %arg7[%c0_166, %c7_167, %c0_168], %362 {strides = array<i32>} : memref<1x16x128xf32, #tpu.memory_space<vmem>>, vector<1x1x36xf32>,
    %363 = arith.mulf %259, %259 : vector<16x36xf32>
    %cst_169 = arith.constant dense<0.000000e+00> : vector<36xf32>
    %364 = vector.multi_reduction <add>, %363, %cst_169 [0] : vector<16x36xf32> to vector<36xf32>
    %365 = vector.shape_cast %364 : vector<36xf32> to vector<1x36xf32>
    %c0_170 = arith.constant 0 : index
    %c15_171 = arith.constant 15 : index
    %c0_172 = arith.constant 0 : index
    %366 = vector.load %arg7[%c0_170, %c15_171, %c0_172] : memref<1x16x128xf32, #tpu.memory_space<vmem>>, vector<1x1x36xf32>
    %367 = vector.shape_cast %366 : vector<1x1x36xf32> to vector<1x36xf32>
    %368 = vector.shape_cast %365 : vector<1x36xf32> to vector<1x1x36xf32>
    tpu.vector_store %arg7[%c0_170, %c15_171, %c0_172], %368 {strides = array<i32>} : memref<1x16x128xf32, #tpu.memory_space<vmem>>, vector<1x1x36xf32>,
    %c0_173 = arith.constant 0 : index
    %c0_174 = arith.constant 0 : index
    %c252 = arith.constant 252 : index
    %369 = vector.load %arg6[%c0_173, %c0_174, %c252] : memref<1x16x384xf32, #tpu.memory_space<vmem>>, vector<1x16x36xf32>
    %370 = vector.shape_cast %369 : vector<1x16x36xf32> to vector<16x36xf32>
    %371 = vector.shape_cast %259 : vector<16x36xf32> to vector<1x16x36xf32>
    tpu.vector_store %arg6[%c0_173, %c0_174, %c252], %371 {strides = array<i32>} : memref<1x16x384xf32, #tpu.memory_space<vmem>>, vector<1x16x36xf32>,
    %cst_175 = arith.constant 0.000000e+00 : f32
    %372 = vector.broadcast %cst_175 : f32 to vector<16x96xf32>
    %c0_176 = arith.constant 0 : index
    %c0_177 = arith.constant 0 : index
    %c288 = arith.constant 288 : index
    %373 = vector.load %arg6[%c0_176, %c0_177, %c288] : memref<1x16x384xf32, #tpu.memory_space<vmem>>, vector<1x16x96xf32>
    %374 = vector.shape_cast %373 : vector<1x16x96xf32> to vector<16x96xf32>
    %375 = vector.shape_cast %372 : vector<16x96xf32> to vector<1x16x96xf32>
    tpu.vector_store %arg6[%c0_176, %c0_177, %c288], %375 {strides = array<i32>} : memref<1x16x384xf32, #tpu.memory_space<vmem>>, vector<1x16x96xf32>,
    %cst_178 = arith.constant 0.000000e+00 : f32
    %376 = vector.broadcast %cst_178 : f32 to vector<16x92xf32>
    %c0_179 = arith.constant 0 : index
    %c0_180 = arith.constant 0 : index
    %c36_181 = arith.constant 36 : index
    %377 = vector.load %arg7[%c0_179, %c0_180, %c36_181] : memref<1x16x128xf32, #tpu.memory_space<vmem>>, vector<1x16x92xf32>
    %378 = vector.shape_cast %377 : vector<1x16x92xf32> to vector<16x92xf32>
    %379 = vector.shape_cast %376 : vector<16x92xf32> to vector<1x16x92xf32>
    tpu.vector_store %arg7[%c0_179, %c0_180, %c36_181], %379 {strides = array<i32>} : memref<1x16x128xf32, #tpu.memory_space<vmem>>, vector<1x16x92xf32>,
    return
  }
  func.func @transform_0(%arg0: i32) -> (i32, i32, i32) {
    %c0_i32 = arith.constant 0 : i32
    %c0_i32_0 = arith.constant 0 : i32
    %c0_i32_1 = arith.constant 0 : i32
    return %arg0, %c0_i32, %c0_i32_0 : i32, i32, i32
  }
  func.func @transform_1(%arg0: i32) -> (i32, i32) {
    %c0_i32 = arith.constant 0 : i32
    %c0_i32_0 = arith.constant 0 : i32
    %c0_i32_1 = arith.constant 0 : i32
    return %c0_i32, %c0_i32_0 : i32, i32
  }
  func.func @transform_2(%arg0: i32) -> i32 {
    %c0_i32 = arith.constant 0 : i32
    %c0_i32_0 = arith.constant 0 : i32
    return %c0_i32 : i32
  }
  func.func @transform_3(%arg0: i32) -> i32 {
    %c0_i32 = arith.constant 0 : i32
    %c0_i32_0 = arith.constant 0 : i32
    return %c0_i32 : i32
  }
  func.func @transform_4(%arg0: i32) -> i32 {
    %c0_i32 = arith.constant 0 : i32
    %c0_i32_0 = arith.constant 0 : i32
    return %c0_i32 : i32
  }
  func.func @transform_5(%arg0: i32) -> (i32, i32, i32) {
    %c0_i32 = arith.constant 0 : i32
    %c0_i32_0 = arith.constant 0 : i32
    %c0_i32_1 = arith.constant 0 : i32
    return %arg0, %c0_i32, %c0_i32_0 : i32, i32, i32
  }
  func.func @transform_6(%arg0: i32) -> (i32, i32, i32) {
    %c0_i32 = arith.constant 0 : i32
    %c0_i32_0 = arith.constant 0 : i32
    %c0_i32_1 = arith.constant 0 : i32
    return %arg0, %c0_i32, %c0_i32_0 : i32, i32, i32
  }
}

module attributes {stable_mosaic.version = 11 : i64} {
  func.func @_half1_kernel(%arg0: i32, %arg1: memref<2x4x16x16xf32, #tpu.memory_space<vmem>>, %arg2: memref<9x256xf32, #tpu.memory_space<vmem>>, %arg3: memref<16xf32, #tpu.memory_space<smem>>, %arg4: memref<1x16x256xf32, #tpu.memory_space<vmem>>, %arg5: memref<1x8x128xf32, #tpu.memory_space<vmem>>, %arg6: memref<18x384xf32, #tpu.memory_space<vmem>>) attributes {dimension_semantics = [#tpu.dimension_semantics<parallel>], iteration_bounds = array<i64: 1>, scalar_prefetch = 0 : i64, scratch_operands = 1 : i64, tpu.core_type = #tpu.core_type<tc>, window_params = [{transform_indices = @transform_0, window_bounds = array<i64: 2, 4, 16, 16>}, {pipeline_mode = #tpu.pipeline_mode<synchronous>, transform_indices = @transform_1, window_bounds = array<i64: 9, 256>}, {transform_indices = @transform_2, window_bounds = array<i64: 16>}, {transform_indices = @transform_3, window_bounds = array<i64: 1, 16, 256>}, {transform_indices = @transform_4, window_bounds = array<i64: 1, 8, 128>}]} {
    %cst = arith.constant 0.000000e+00 : f32
    %0 = vector.broadcast %cst : f32 to vector<18x384xf32>
    %c0 = arith.constant 0 : index
    %c0_0 = arith.constant 0 : index
    %1 = vector.load %arg6[%c0, %c0_0] : memref<18x384xf32, #tpu.memory_space<vmem>>, vector<18x384xf32>
    tpu.vector_store %arg6[%c0, %c0_0], %0 {strides = array<i32>} : memref<18x384xf32, #tpu.memory_space<vmem>>, vector<18x384xf32>,
    %c0_1 = arith.constant 0 : index
    %c0_2 = arith.constant 0 : index
    %c0_3 = arith.constant 0 : index
    %c0_4 = arith.constant 0 : index
    %2 = vector.load %arg1[%c0_1, %c0_2, %c0_3, %c0_4] : memref<2x4x16x16xf32, #tpu.memory_space<vmem>>, vector<1x1x16x16xf32>
    %3 = vector.shape_cast %2 : vector<1x1x16x16xf32> to vector<16x16xf32>
    %cst_5 = arith.constant 0.000000e+00 : f32
    %4 = vector.broadcast %cst_5 : f32 to vector<16x16xf32>
    %5 = arith.maximumf %3, %4 : vector<16x16xf32>
    %c1 = arith.constant 1 : index
    %c1_6 = arith.constant 1 : index
    %6 = vector.load %arg6[%c1, %c1_6] : memref<18x384xf32, #tpu.memory_space<vmem>>, vector<16x16xf32>
    tpu.vector_store %arg6[%c1, %c1_6], %5 {strides = array<i32>} : memref<18x384xf32, #tpu.memory_space<vmem>>, vector<16x16xf32>,
    %c0_7 = arith.constant 0 : index
    %c1_8 = arith.constant 1 : index
    %c0_9 = arith.constant 0 : index
    %c0_10 = arith.constant 0 : index
    %7 = vector.load %arg1[%c0_7, %c1_8, %c0_9, %c0_10] : memref<2x4x16x16xf32, #tpu.memory_space<vmem>>, vector<1x1x16x16xf32>
    %8 = vector.shape_cast %7 : vector<1x1x16x16xf32> to vector<16x16xf32>
    %cst_11 = arith.constant 0.000000e+00 : f32
    %9 = vector.broadcast %cst_11 : f32 to vector<16x16xf32>
    %10 = arith.maximumf %8, %9 : vector<16x16xf32>
    %c1_12 = arith.constant 1 : index
    %c37 = arith.constant 37 : index
    %11 = vector.load %arg6[%c1_12, %c37] : memref<18x384xf32, #tpu.memory_space<vmem>>, vector<16x16xf32>
    tpu.vector_store %arg6[%c1_12, %c37], %10 {strides = array<i32>} : memref<18x384xf32, #tpu.memory_space<vmem>>, vector<16x16xf32>,
    %c0_13 = arith.constant 0 : index
    %c2 = arith.constant 2 : index
    %c0_14 = arith.constant 0 : index
    %c0_15 = arith.constant 0 : index
    %12 = vector.load %arg1[%c0_13, %c2, %c0_14, %c0_15] : memref<2x4x16x16xf32, #tpu.memory_space<vmem>>, vector<1x1x16x16xf32>
    %13 = vector.shape_cast %12 : vector<1x1x16x16xf32> to vector<16x16xf32>
    %cst_16 = arith.constant 0.000000e+00 : f32
    %14 = vector.broadcast %cst_16 : f32 to vector<16x16xf32>
    %15 = arith.maximumf %13, %14 : vector<16x16xf32>
    %c1_17 = arith.constant 1 : index
    %c73 = arith.constant 73 : index
    %16 = vector.load %arg6[%c1_17, %c73] : memref<18x384xf32, #tpu.memory_space<vmem>>, vector<16x16xf32>
    tpu.vector_store %arg6[%c1_17, %c73], %15 {strides = array<i32>} : memref<18x384xf32, #tpu.memory_space<vmem>>, vector<16x16xf32>,
    %c0_18 = arith.constant 0 : index
    %c3 = arith.constant 3 : index
    %c0_19 = arith.constant 0 : index
    %c0_20 = arith.constant 0 : index
    %17 = vector.load %arg1[%c0_18, %c3, %c0_19, %c0_20] : memref<2x4x16x16xf32, #tpu.memory_space<vmem>>, vector<1x1x16x16xf32>
    %18 = vector.shape_cast %17 : vector<1x1x16x16xf32> to vector<16x16xf32>
    %cst_21 = arith.constant 0.000000e+00 : f32
    %19 = vector.broadcast %cst_21 : f32 to vector<16x16xf32>
    %20 = arith.maximumf %18, %19 : vector<16x16xf32>
    %c1_22 = arith.constant 1 : index
    %c109 = arith.constant 109 : index
    %21 = vector.load %arg6[%c1_22, %c109] : memref<18x384xf32, #tpu.memory_space<vmem>>, vector<16x16xf32>
    tpu.vector_store %arg6[%c1_22, %c109], %20 {strides = array<i32>} : memref<18x384xf32, #tpu.memory_space<vmem>>, vector<16x16xf32>,
    %c1_23 = arith.constant 1 : index
    %c0_24 = arith.constant 0 : index
    %c0_25 = arith.constant 0 : index
    %c0_26 = arith.constant 0 : index
    %22 = vector.load %arg1[%c1_23, %c0_24, %c0_25, %c0_26] : memref<2x4x16x16xf32, #tpu.memory_space<vmem>>, vector<1x1x16x16xf32>
    %23 = vector.shape_cast %22 : vector<1x1x16x16xf32> to vector<16x16xf32>
    %cst_27 = arith.constant 0.000000e+00 : f32
    %24 = vector.broadcast %cst_27 : f32 to vector<16x16xf32>
    %25 = arith.maximumf %23, %24 : vector<16x16xf32>
    %c1_28 = arith.constant 1 : index
    %c19 = arith.constant 19 : index
    %26 = vector.load %arg6[%c1_28, %c19] : memref<18x384xf32, #tpu.memory_space<vmem>>, vector<16x16xf32>
    tpu.vector_store %arg6[%c1_28, %c19], %25 {strides = array<i32>} : memref<18x384xf32, #tpu.memory_space<vmem>>, vector<16x16xf32>,
    %c1_29 = arith.constant 1 : index
    %c1_30 = arith.constant 1 : index
    %c0_31 = arith.constant 0 : index
    %c0_32 = arith.constant 0 : index
    %27 = vector.load %arg1[%c1_29, %c1_30, %c0_31, %c0_32] : memref<2x4x16x16xf32, #tpu.memory_space<vmem>>, vector<1x1x16x16xf32>
    %28 = vector.shape_cast %27 : vector<1x1x16x16xf32> to vector<16x16xf32>
    %cst_33 = arith.constant 0.000000e+00 : f32
    %29 = vector.broadcast %cst_33 : f32 to vector<16x16xf32>
    %30 = arith.maximumf %28, %29 : vector<16x16xf32>
    %c1_34 = arith.constant 1 : index
    %c55 = arith.constant 55 : index
    %31 = vector.load %arg6[%c1_34, %c55] : memref<18x384xf32, #tpu.memory_space<vmem>>, vector<16x16xf32>
    tpu.vector_store %arg6[%c1_34, %c55], %30 {strides = array<i32>} : memref<18x384xf32, #tpu.memory_space<vmem>>, vector<16x16xf32>,
    %c1_35 = arith.constant 1 : index
    %c2_36 = arith.constant 2 : index
    %c0_37 = arith.constant 0 : index
    %c0_38 = arith.constant 0 : index
    %32 = vector.load %arg1[%c1_35, %c2_36, %c0_37, %c0_38] : memref<2x4x16x16xf32, #tpu.memory_space<vmem>>, vector<1x1x16x16xf32>
    %33 = vector.shape_cast %32 : vector<1x1x16x16xf32> to vector<16x16xf32>
    %cst_39 = arith.constant 0.000000e+00 : f32
    %34 = vector.broadcast %cst_39 : f32 to vector<16x16xf32>
    %35 = arith.maximumf %33, %34 : vector<16x16xf32>
    %c1_40 = arith.constant 1 : index
    %c91 = arith.constant 91 : index
    %36 = vector.load %arg6[%c1_40, %c91] : memref<18x384xf32, #tpu.memory_space<vmem>>, vector<16x16xf32>
    tpu.vector_store %arg6[%c1_40, %c91], %35 {strides = array<i32>} : memref<18x384xf32, #tpu.memory_space<vmem>>, vector<16x16xf32>,
    %c1_41 = arith.constant 1 : index
    %c3_42 = arith.constant 3 : index
    %c0_43 = arith.constant 0 : index
    %c0_44 = arith.constant 0 : index
    %37 = vector.load %arg1[%c1_41, %c3_42, %c0_43, %c0_44] : memref<2x4x16x16xf32, #tpu.memory_space<vmem>>, vector<1x1x16x16xf32>
    %38 = vector.shape_cast %37 : vector<1x1x16x16xf32> to vector<16x16xf32>
    %cst_45 = arith.constant 0.000000e+00 : f32
    %39 = vector.broadcast %cst_45 : f32 to vector<16x16xf32>
    %40 = arith.maximumf %38, %39 : vector<16x16xf32>
    %c1_46 = arith.constant 1 : index
    %c127 = arith.constant 127 : index
    %41 = vector.load %arg6[%c1_46, %c127] : memref<18x384xf32, #tpu.memory_space<vmem>>, vector<16x16xf32>
    tpu.vector_store %arg6[%c1_46, %c127], %40 {strides = array<i32>} : memref<18x384xf32, #tpu.memory_space<vmem>>, vector<16x16xf32>,
    %cst_47 = arith.constant 0.000000e+00 : f32
    %42 = vector.broadcast %cst_47 : f32 to vector<16x256xf32>
    %c0_48 = arith.constant 0 : index
    %c0_49 = arith.constant 0 : index
    %43 = vector.load %arg6[%c0_48, %c0_49] : memref<18x384xf32, #tpu.memory_space<vmem>>, vector<16x256xf32>
    %c0_50 = arith.constant 0 : index
    %c0_51 = arith.constant 0 : index
    %44 = vector.load %arg2[%c0_50, %c0_51] : memref<9x256xf32, #tpu.memory_space<vmem>>, vector<1x256xf32>
    %45 = vector.broadcast %44 : vector<1x256xf32> to vector<16x256xf32>
    %46 = arith.mulf %43, %45 : vector<16x256xf32>
    %47 = arith.addf %42, %46 : vector<16x256xf32>
    %c0_52 = arith.constant 0 : index
    %c1_53 = arith.constant 1 : index
    %48 = vector.load %arg6[%c0_52, %c1_53] : memref<18x384xf32, #tpu.memory_space<vmem>>, vector<16x256xf32>
    %c1_54 = arith.constant 1 : index
    %c0_55 = arith.constant 0 : index
    %49 = vector.load %arg2[%c1_54, %c0_55] : memref<9x256xf32, #tpu.memory_space<vmem>>, vector<1x256xf32>
    %50 = vector.broadcast %49 : vector<1x256xf32> to vector<16x256xf32>
    %51 = arith.mulf %48, %50 : vector<16x256xf32>
    %52 = arith.addf %47, %51 : vector<16x256xf32>
    %c0_56 = arith.constant 0 : index
    %c2_57 = arith.constant 2 : index
    %53 = vector.load %arg6[%c0_56, %c2_57] : memref<18x384xf32, #tpu.memory_space<vmem>>, vector<16x256xf32>
    %c2_58 = arith.constant 2 : index
    %c0_59 = arith.constant 0 : index
    %54 = vector.load %arg2[%c2_58, %c0_59] : memref<9x256xf32, #tpu.memory_space<vmem>>, vector<1x256xf32>
    %55 = vector.broadcast %54 : vector<1x256xf32> to vector<16x256xf32>
    %56 = arith.mulf %53, %55 : vector<16x256xf32>
    %57 = arith.addf %52, %56 : vector<16x256xf32>
    %c1_60 = arith.constant 1 : index
    %c0_61 = arith.constant 0 : index
    %58 = vector.load %arg6[%c1_60, %c0_61] : memref<18x384xf32, #tpu.memory_space<vmem>>, vector<16x256xf32>
    %c3_62 = arith.constant 3 : index
    %c0_63 = arith.constant 0 : index
    %59 = vector.load %arg2[%c3_62, %c0_63] : memref<9x256xf32, #tpu.memory_space<vmem>>, vector<1x256xf32>
    %60 = vector.broadcast %59 : vector<1x256xf32> to vector<16x256xf32>
    %61 = arith.mulf %58, %60 : vector<16x256xf32>
    %62 = arith.addf %57, %61 : vector<16x256xf32>
    %c1_64 = arith.constant 1 : index
    %c1_65 = arith.constant 1 : index
    %63 = vector.load %arg6[%c1_64, %c1_65] : memref<18x384xf32, #tpu.memory_space<vmem>>, vector<16x256xf32>
    %c4 = arith.constant 4 : index
    %c0_66 = arith.constant 0 : index
    %64 = vector.load %arg2[%c4, %c0_66] : memref<9x256xf32, #tpu.memory_space<vmem>>, vector<1x256xf32>
    %65 = vector.broadcast %64 : vector<1x256xf32> to vector<16x256xf32>
    %66 = arith.mulf %63, %65 : vector<16x256xf32>
    %67 = arith.addf %62, %66 : vector<16x256xf32>
    %c1_67 = arith.constant 1 : index
    %c2_68 = arith.constant 2 : index
    %68 = vector.load %arg6[%c1_67, %c2_68] : memref<18x384xf32, #tpu.memory_space<vmem>>, vector<16x256xf32>
    %c5 = arith.constant 5 : index
    %c0_69 = arith.constant 0 : index
    %69 = vector.load %arg2[%c5, %c0_69] : memref<9x256xf32, #tpu.memory_space<vmem>>, vector<1x256xf32>
    %70 = vector.broadcast %69 : vector<1x256xf32> to vector<16x256xf32>
    %71 = arith.mulf %68, %70 : vector<16x256xf32>
    %72 = arith.addf %67, %71 : vector<16x256xf32>
    %c2_70 = arith.constant 2 : index
    %c0_71 = arith.constant 0 : index
    %73 = vector.load %arg6[%c2_70, %c0_71] : memref<18x384xf32, #tpu.memory_space<vmem>>, vector<16x256xf32>
    %c6 = arith.constant 6 : index
    %c0_72 = arith.constant 0 : index
    %74 = vector.load %arg2[%c6, %c0_72] : memref<9x256xf32, #tpu.memory_space<vmem>>, vector<1x256xf32>
    %75 = vector.broadcast %74 : vector<1x256xf32> to vector<16x256xf32>
    %76 = arith.mulf %73, %75 : vector<16x256xf32>
    %77 = arith.addf %72, %76 : vector<16x256xf32>
    %c2_73 = arith.constant 2 : index
    %c1_74 = arith.constant 1 : index
    %78 = vector.load %arg6[%c2_73, %c1_74] : memref<18x384xf32, #tpu.memory_space<vmem>>, vector<16x256xf32>
    %c7 = arith.constant 7 : index
    %c0_75 = arith.constant 0 : index
    %79 = vector.load %arg2[%c7, %c0_75] : memref<9x256xf32, #tpu.memory_space<vmem>>, vector<1x256xf32>
    %80 = vector.broadcast %79 : vector<1x256xf32> to vector<16x256xf32>
    %81 = arith.mulf %78, %80 : vector<16x256xf32>
    %82 = arith.addf %77, %81 : vector<16x256xf32>
    %c2_76 = arith.constant 2 : index
    %c2_77 = arith.constant 2 : index
    %83 = vector.load %arg6[%c2_76, %c2_77] : memref<18x384xf32, #tpu.memory_space<vmem>>, vector<16x256xf32>
    %c8 = arith.constant 8 : index
    %c0_78 = arith.constant 0 : index
    %84 = vector.load %arg2[%c8, %c0_78] : memref<9x256xf32, #tpu.memory_space<vmem>>, vector<1x256xf32>
    %85 = vector.broadcast %84 : vector<1x256xf32> to vector<16x256xf32>
    %86 = arith.mulf %83, %85 : vector<16x256xf32>
    %87 = arith.addf %82, %86 : vector<16x256xf32>
    %88 = vector.extract_strided_slice %87 {offsets = [0, 0], sizes = [16, 36], strides = [1, 1]} : vector<16x256xf32> to vector<16x36xf32>
    %89 = vector.extract_strided_slice %87 {offsets = [0, 36], sizes = [16, 36], strides = [1, 1]} : vector<16x256xf32> to vector<16x36xf32>
    %90 = vector.extract_strided_slice %87 {offsets = [0, 72], sizes = [16, 36], strides = [1, 1]} : vector<16x256xf32> to vector<16x36xf32>
    %91 = vector.extract_strided_slice %87 {offsets = [0, 108], sizes = [16, 36], strides = [1, 1]} : vector<16x256xf32> to vector<16x36xf32>
    %c0_79 = arith.constant 0 : index
    %92 = memref.load %arg3[%c0_79] : memref<16xf32, #tpu.memory_space<smem>>
    %93 = vector.broadcast %92 : f32 to vector<16x36xf32>
    %94 = arith.mulf %88, %93 : vector<16x36xf32>
    %c4_80 = arith.constant 4 : index
    %95 = memref.load %arg3[%c4_80] : memref<16xf32, #tpu.memory_space<smem>>
    %96 = vector.broadcast %95 : f32 to vector<16x36xf32>
    %97 = arith.mulf %89, %96 : vector<16x36xf32>
    %98 = arith.addf %94, %97 : vector<16x36xf32>
    %c8_81 = arith.constant 8 : index
    %99 = memref.load %arg3[%c8_81] : memref<16xf32, #tpu.memory_space<smem>>
    %100 = vector.broadcast %99 : f32 to vector<16x36xf32>
    %101 = arith.mulf %90, %100 : vector<16x36xf32>
    %102 = arith.addf %98, %101 : vector<16x36xf32>
    %c12 = arith.constant 12 : index
    %103 = memref.load %arg3[%c12] : memref<16xf32, #tpu.memory_space<smem>>
    %104 = vector.broadcast %103 : f32 to vector<16x36xf32>
    %105 = arith.mulf %91, %104 : vector<16x36xf32>
    %106 = arith.addf %102, %105 : vector<16x36xf32>
    %c1_82 = arith.constant 1 : index
    %107 = memref.load %arg3[%c1_82] : memref<16xf32, #tpu.memory_space<smem>>
    %108 = vector.broadcast %107 : f32 to vector<16x36xf32>
    %109 = arith.mulf %88, %108 : vector<16x36xf32>
    %c5_83 = arith.constant 5 : index
    %110 = memref.load %arg3[%c5_83] : memref<16xf32, #tpu.memory_space<smem>>
    %111 = vector.broadcast %110 : f32 to vector<16x36xf32>
    %112 = arith.mulf %89, %111 : vector<16x36xf32>
    %113 = arith.addf %109, %112 : vector<16x36xf32>
    %c9 = arith.constant 9 : index
    %114 = memref.load %arg3[%c9] : memref<16xf32, #tpu.memory_space<smem>>
    %115 = vector.broadcast %114 : f32 to vector<16x36xf32>
    %116 = arith.mulf %90, %115 : vector<16x36xf32>
    %117 = arith.addf %113, %116 : vector<16x36xf32>
    %c13 = arith.constant 13 : index
    %118 = memref.load %arg3[%c13] : memref<16xf32, #tpu.memory_space<smem>>
    %119 = vector.broadcast %118 : f32 to vector<16x36xf32>
    %120 = arith.mulf %91, %119 : vector<16x36xf32>
    %121 = arith.addf %117, %120 : vector<16x36xf32>
    %c2_84 = arith.constant 2 : index
    %122 = memref.load %arg3[%c2_84] : memref<16xf32, #tpu.memory_space<smem>>
    %123 = vector.broadcast %122 : f32 to vector<16x36xf32>
    %124 = arith.mulf %88, %123 : vector<16x36xf32>
    %c6_85 = arith.constant 6 : index
    %125 = memref.load %arg3[%c6_85] : memref<16xf32, #tpu.memory_space<smem>>
    %126 = vector.broadcast %125 : f32 to vector<16x36xf32>
    %127 = arith.mulf %89, %126 : vector<16x36xf32>
    %128 = arith.addf %124, %127 : vector<16x36xf32>
    %c10 = arith.constant 10 : index
    %129 = memref.load %arg3[%c10] : memref<16xf32, #tpu.memory_space<smem>>
    %130 = vector.broadcast %129 : f32 to vector<16x36xf32>
    %131 = arith.mulf %90, %130 : vector<16x36xf32>
    %132 = arith.addf %128, %131 : vector<16x36xf32>
    %c14 = arith.constant 14 : index
    %133 = memref.load %arg3[%c14] : memref<16xf32, #tpu.memory_space<smem>>
    %134 = vector.broadcast %133 : f32 to vector<16x36xf32>
    %135 = arith.mulf %91, %134 : vector<16x36xf32>
    %136 = arith.addf %132, %135 : vector<16x36xf32>
    %c3_86 = arith.constant 3 : index
    %137 = memref.load %arg3[%c3_86] : memref<16xf32, #tpu.memory_space<smem>>
    %138 = vector.broadcast %137 : f32 to vector<16x36xf32>
    %139 = arith.mulf %88, %138 : vector<16x36xf32>
    %c7_87 = arith.constant 7 : index
    %140 = memref.load %arg3[%c7_87] : memref<16xf32, #tpu.memory_space<smem>>
    %141 = vector.broadcast %140 : f32 to vector<16x36xf32>
    %142 = arith.mulf %89, %141 : vector<16x36xf32>
    %143 = arith.addf %139, %142 : vector<16x36xf32>
    %c11 = arith.constant 11 : index
    %144 = memref.load %arg3[%c11] : memref<16xf32, #tpu.memory_space<smem>>
    %145 = vector.broadcast %144 : f32 to vector<16x36xf32>
    %146 = arith.mulf %90, %145 : vector<16x36xf32>
    %147 = arith.addf %143, %146 : vector<16x36xf32>
    %c15 = arith.constant 15 : index
    %148 = memref.load %arg3[%c15] : memref<16xf32, #tpu.memory_space<smem>>
    %149 = vector.broadcast %148 : f32 to vector<16x36xf32>
    %150 = arith.mulf %91, %149 : vector<16x36xf32>
    %151 = arith.addf %147, %150 : vector<16x36xf32>
    %cst_88 = arith.constant dense<0.000000e+00> : vector<36xf32>
    %152 = vector.multi_reduction <add>, %106, %cst_88 [0] : vector<16x36xf32> to vector<36xf32>
    %153 = vector.shape_cast %152 : vector<36xf32> to vector<1x36xf32>
    %c0_89 = arith.constant 0 : index
    %c0_90 = arith.constant 0 : index
    %c0_91 = arith.constant 0 : index
    %154 = vector.load %arg5[%c0_89, %c0_90, %c0_91] : memref<1x8x128xf32, #tpu.memory_space<vmem>>, vector<1x1x36xf32>
    %155 = vector.shape_cast %154 : vector<1x1x36xf32> to vector<1x36xf32>
    %156 = vector.shape_cast %153 : vector<1x36xf32> to vector<1x1x36xf32>
    tpu.vector_store %arg5[%c0_89, %c0_90, %c0_91], %156 {strides = array<i32>} : memref<1x8x128xf32, #tpu.memory_space<vmem>>, vector<1x1x36xf32>,
    %157 = arith.mulf %106, %106 : vector<16x36xf32>
    %cst_92 = arith.constant dense<0.000000e+00> : vector<36xf32>
    %158 = vector.multi_reduction <add>, %157, %cst_92 [0] : vector<16x36xf32> to vector<36xf32>
    %159 = vector.shape_cast %158 : vector<36xf32> to vector<1x36xf32>
    %c0_93 = arith.constant 0 : index
    %c4_94 = arith.constant 4 : index
    %c0_95 = arith.constant 0 : index
    %160 = vector.load %arg5[%c0_93, %c4_94, %c0_95] : memref<1x8x128xf32, #tpu.memory_space<vmem>>, vector<1x1x36xf32>
    %161 = vector.shape_cast %160 : vector<1x1x36xf32> to vector<1x36xf32>
    %162 = vector.shape_cast %159 : vector<1x36xf32> to vector<1x1x36xf32>
    tpu.vector_store %arg5[%c0_93, %c4_94, %c0_95], %162 {strides = array<i32>} : memref<1x8x128xf32, #tpu.memory_space<vmem>>, vector<1x1x36xf32>,
    %c0_96 = arith.constant 0 : index
    %c0_97 = arith.constant 0 : index
    %c0_98 = arith.constant 0 : index
    %163 = vector.load %arg4[%c0_96, %c0_97, %c0_98] : memref<1x16x256xf32, #tpu.memory_space<vmem>>, vector<1x16x36xf32>
    %164 = vector.shape_cast %163 : vector<1x16x36xf32> to vector<16x36xf32>
    %165 = vector.shape_cast %106 : vector<16x36xf32> to vector<1x16x36xf32>
    tpu.vector_store %arg4[%c0_96, %c0_97, %c0_98], %165 {strides = array<i32>} : memref<1x16x256xf32, #tpu.memory_space<vmem>>, vector<1x16x36xf32>,
    %cst_99 = arith.constant dense<0.000000e+00> : vector<36xf32>
    %166 = vector.multi_reduction <add>, %121, %cst_99 [0] : vector<16x36xf32> to vector<36xf32>
    %167 = vector.shape_cast %166 : vector<36xf32> to vector<1x36xf32>
    %c0_100 = arith.constant 0 : index
    %c1_101 = arith.constant 1 : index
    %c0_102 = arith.constant 0 : index
    %168 = vector.load %arg5[%c0_100, %c1_101, %c0_102] : memref<1x8x128xf32, #tpu.memory_space<vmem>>, vector<1x1x36xf32>
    %169 = vector.shape_cast %168 : vector<1x1x36xf32> to vector<1x36xf32>
    %170 = vector.shape_cast %167 : vector<1x36xf32> to vector<1x1x36xf32>
    tpu.vector_store %arg5[%c0_100, %c1_101, %c0_102], %170 {strides = array<i32>} : memref<1x8x128xf32, #tpu.memory_space<vmem>>, vector<1x1x36xf32>,
    %171 = arith.mulf %121, %121 : vector<16x36xf32>
    %cst_103 = arith.constant dense<0.000000e+00> : vector<36xf32>
    %172 = vector.multi_reduction <add>, %171, %cst_103 [0] : vector<16x36xf32> to vector<36xf32>
    %173 = vector.shape_cast %172 : vector<36xf32> to vector<1x36xf32>
    %c0_104 = arith.constant 0 : index
    %c5_105 = arith.constant 5 : index
    %c0_106 = arith.constant 0 : index
    %174 = vector.load %arg5[%c0_104, %c5_105, %c0_106] : memref<1x8x128xf32, #tpu.memory_space<vmem>>, vector<1x1x36xf32>
    %175 = vector.shape_cast %174 : vector<1x1x36xf32> to vector<1x36xf32>
    %176 = vector.shape_cast %173 : vector<1x36xf32> to vector<1x1x36xf32>
    tpu.vector_store %arg5[%c0_104, %c5_105, %c0_106], %176 {strides = array<i32>} : memref<1x8x128xf32, #tpu.memory_space<vmem>>, vector<1x1x36xf32>,
    %c0_107 = arith.constant 0 : index
    %c0_108 = arith.constant 0 : index
    %c36 = arith.constant 36 : index
    %177 = vector.load %arg4[%c0_107, %c0_108, %c36] : memref<1x16x256xf32, #tpu.memory_space<vmem>>, vector<1x16x36xf32>
    %178 = vector.shape_cast %177 : vector<1x16x36xf32> to vector<16x36xf32>
    %179 = vector.shape_cast %121 : vector<16x36xf32> to vector<1x16x36xf32>
    tpu.vector_store %arg4[%c0_107, %c0_108, %c36], %179 {strides = array<i32>} : memref<1x16x256xf32, #tpu.memory_space<vmem>>, vector<1x16x36xf32>,
    %cst_109 = arith.constant dense<0.000000e+00> : vector<36xf32>
    %180 = vector.multi_reduction <add>, %136, %cst_109 [0] : vector<16x36xf32> to vector<36xf32>
    %181 = vector.shape_cast %180 : vector<36xf32> to vector<1x36xf32>
    %c0_110 = arith.constant 0 : index
    %c2_111 = arith.constant 2 : index
    %c0_112 = arith.constant 0 : index
    %182 = vector.load %arg5[%c0_110, %c2_111, %c0_112] : memref<1x8x128xf32, #tpu.memory_space<vmem>>, vector<1x1x36xf32>
    %183 = vector.shape_cast %182 : vector<1x1x36xf32> to vector<1x36xf32>
    %184 = vector.shape_cast %181 : vector<1x36xf32> to vector<1x1x36xf32>
    tpu.vector_store %arg5[%c0_110, %c2_111, %c0_112], %184 {strides = array<i32>} : memref<1x8x128xf32, #tpu.memory_space<vmem>>, vector<1x1x36xf32>,
    %185 = arith.mulf %136, %136 : vector<16x36xf32>
    %cst_113 = arith.constant dense<0.000000e+00> : vector<36xf32>
    %186 = vector.multi_reduction <add>, %185, %cst_113 [0] : vector<16x36xf32> to vector<36xf32>
    %187 = vector.shape_cast %186 : vector<36xf32> to vector<1x36xf32>
    %c0_114 = arith.constant 0 : index
    %c6_115 = arith.constant 6 : index
    %c0_116 = arith.constant 0 : index
    %188 = vector.load %arg5[%c0_114, %c6_115, %c0_116] : memref<1x8x128xf32, #tpu.memory_space<vmem>>, vector<1x1x36xf32>
    %189 = vector.shape_cast %188 : vector<1x1x36xf32> to vector<1x36xf32>
    %190 = vector.shape_cast %187 : vector<1x36xf32> to vector<1x1x36xf32>
    tpu.vector_store %arg5[%c0_114, %c6_115, %c0_116], %190 {strides = array<i32>} : memref<1x8x128xf32, #tpu.memory_space<vmem>>, vector<1x1x36xf32>,
    %c0_117 = arith.constant 0 : index
    %c0_118 = arith.constant 0 : index
    %c72 = arith.constant 72 : index
    %191 = vector.load %arg4[%c0_117, %c0_118, %c72] : memref<1x16x256xf32, #tpu.memory_space<vmem>>, vector<1x16x36xf32>
    %192 = vector.shape_cast %191 : vector<1x16x36xf32> to vector<16x36xf32>
    %193 = vector.shape_cast %136 : vector<16x36xf32> to vector<1x16x36xf32>
    tpu.vector_store %arg4[%c0_117, %c0_118, %c72], %193 {strides = array<i32>} : memref<1x16x256xf32, #tpu.memory_space<vmem>>, vector<1x16x36xf32>,
    %cst_119 = arith.constant dense<0.000000e+00> : vector<36xf32>
    %194 = vector.multi_reduction <add>, %151, %cst_119 [0] : vector<16x36xf32> to vector<36xf32>
    %195 = vector.shape_cast %194 : vector<36xf32> to vector<1x36xf32>
    %c0_120 = arith.constant 0 : index
    %c3_121 = arith.constant 3 : index
    %c0_122 = arith.constant 0 : index
    %196 = vector.load %arg5[%c0_120, %c3_121, %c0_122] : memref<1x8x128xf32, #tpu.memory_space<vmem>>, vector<1x1x36xf32>
    %197 = vector.shape_cast %196 : vector<1x1x36xf32> to vector<1x36xf32>
    %198 = vector.shape_cast %195 : vector<1x36xf32> to vector<1x1x36xf32>
    tpu.vector_store %arg5[%c0_120, %c3_121, %c0_122], %198 {strides = array<i32>} : memref<1x8x128xf32, #tpu.memory_space<vmem>>, vector<1x1x36xf32>,
    %199 = arith.mulf %151, %151 : vector<16x36xf32>
    %cst_123 = arith.constant dense<0.000000e+00> : vector<36xf32>
    %200 = vector.multi_reduction <add>, %199, %cst_123 [0] : vector<16x36xf32> to vector<36xf32>
    %201 = vector.shape_cast %200 : vector<36xf32> to vector<1x36xf32>
    %c0_124 = arith.constant 0 : index
    %c7_125 = arith.constant 7 : index
    %c0_126 = arith.constant 0 : index
    %202 = vector.load %arg5[%c0_124, %c7_125, %c0_126] : memref<1x8x128xf32, #tpu.memory_space<vmem>>, vector<1x1x36xf32>
    %203 = vector.shape_cast %202 : vector<1x1x36xf32> to vector<1x36xf32>
    %204 = vector.shape_cast %201 : vector<1x36xf32> to vector<1x1x36xf32>
    tpu.vector_store %arg5[%c0_124, %c7_125, %c0_126], %204 {strides = array<i32>} : memref<1x8x128xf32, #tpu.memory_space<vmem>>, vector<1x1x36xf32>,
    %c0_127 = arith.constant 0 : index
    %c0_128 = arith.constant 0 : index
    %c108 = arith.constant 108 : index
    %205 = vector.load %arg4[%c0_127, %c0_128, %c108] : memref<1x16x256xf32, #tpu.memory_space<vmem>>, vector<1x16x36xf32>
    %206 = vector.shape_cast %205 : vector<1x16x36xf32> to vector<16x36xf32>
    %207 = vector.shape_cast %151 : vector<16x36xf32> to vector<1x16x36xf32>
    tpu.vector_store %arg4[%c0_127, %c0_128, %c108], %207 {strides = array<i32>} : memref<1x16x256xf32, #tpu.memory_space<vmem>>, vector<1x16x36xf32>,
    %cst_129 = arith.constant 0.000000e+00 : f32
    %208 = vector.broadcast %cst_129 : f32 to vector<16x112xf32>
    %c0_130 = arith.constant 0 : index
    %c0_131 = arith.constant 0 : index
    %c144 = arith.constant 144 : index
    %209 = vector.load %arg4[%c0_130, %c0_131, %c144] : memref<1x16x256xf32, #tpu.memory_space<vmem>>, vector<1x16x112xf32>
    %210 = vector.shape_cast %209 : vector<1x16x112xf32> to vector<16x112xf32>
    %211 = vector.shape_cast %208 : vector<16x112xf32> to vector<1x16x112xf32>
    tpu.vector_store %arg4[%c0_130, %c0_131, %c144], %211 {strides = array<i32>} : memref<1x16x256xf32, #tpu.memory_space<vmem>>, vector<1x16x112xf32>,
    %cst_132 = arith.constant 0.000000e+00 : f32
    %212 = vector.broadcast %cst_132 : f32 to vector<8x92xf32>
    %c0_133 = arith.constant 0 : index
    %c0_134 = arith.constant 0 : index
    %c36_135 = arith.constant 36 : index
    %213 = vector.load %arg5[%c0_133, %c0_134, %c36_135] : memref<1x8x128xf32, #tpu.memory_space<vmem>>, vector<1x8x92xf32>
    %214 = vector.shape_cast %213 : vector<1x8x92xf32> to vector<8x92xf32>
    %215 = vector.shape_cast %212 : vector<8x92xf32> to vector<1x8x92xf32>
    tpu.vector_store %arg5[%c0_133, %c0_134, %c36_135], %215 {strides = array<i32>} : memref<1x8x128xf32, #tpu.memory_space<vmem>>, vector<1x8x92xf32>,
    return
  }
  func.func @transform_0(%arg0: i32) -> (i32, i32, i32, i32) {
    %c0_i32 = arith.constant 0 : i32
    %c0_i32_0 = arith.constant 0 : i32
    %c0_i32_1 = arith.constant 0 : i32
    %c0_i32_2 = arith.constant 0 : i32
    return %arg0, %c0_i32, %c0_i32_0, %c0_i32_1 : i32, i32, i32, i32
  }
  func.func @transform_1(%arg0: i32) -> (i32, i32) {
    %c0_i32 = arith.constant 0 : i32
    %c0_i32_0 = arith.constant 0 : i32
    %c0_i32_1 = arith.constant 0 : i32
    return %c0_i32, %c0_i32_0 : i32, i32
  }
  func.func @transform_2(%arg0: i32) -> i32 {
    %c0_i32 = arith.constant 0 : i32
    %c0_i32_0 = arith.constant 0 : i32
    return %c0_i32 : i32
  }
  func.func @transform_3(%arg0: i32) -> (i32, i32, i32) {
    %c0_i32 = arith.constant 0 : i32
    %c0_i32_0 = arith.constant 0 : i32
    %c0_i32_1 = arith.constant 0 : i32
    return %arg0, %c0_i32, %c0_i32_0 : i32, i32, i32
  }
  func.func @transform_4(%arg0: i32) -> (i32, i32, i32) {
    %c0_i32 = arith.constant 0 : i32
    %c0_i32_0 = arith.constant 0 : i32
    %c0_i32_1 = arith.constant 0 : i32
    return %arg0, %c0_i32, %c0_i32_0 : i32, i32, i32
  }
}

module attributes {stable_mosaic.version = 11 : i64} {
  func.func @_bn_apply_kernel(%arg0: i32, %arg1: memref<1x16x384xf32, #tpu.memory_space<vmem>>, %arg2: memref<8xf32, #tpu.memory_space<smem>>, %arg3: memref<8xf32, #tpu.memory_space<smem>>, %arg4: memref<2x16x128xf32, #tpu.memory_space<vmem>>) attributes {dimension_semantics = [#tpu.dimension_semantics<parallel>], iteration_bounds = array<i64: 1>, scalar_prefetch = 0 : i64, scratch_operands = 0 : i64, tpu.core_type = #tpu.core_type<tc>, window_params = [{transform_indices = @transform_0, window_bounds = array<i64: 1, 16, 384>}, {transform_indices = @transform_1, window_bounds = array<i64: 8>}, {transform_indices = @transform_2, window_bounds = array<i64: 8>}, {transform_indices = @transform_3, window_bounds = array<i64: 2, 16, 128>}]} {
    %c0 = arith.constant 0 : index
    %c0_0 = arith.constant 0 : index
    %c0_1 = arith.constant 0 : index
    %0 = vector.load %arg1[%c0, %c0_0, %c0_1] : memref<1x16x384xf32, #tpu.memory_space<vmem>>, vector<1x16x16xf32>
    %1 = vector.shape_cast %0 : vector<1x16x16xf32> to vector<16x16xf32>
    %c0_2 = arith.constant 0 : index
    %2 = memref.load %arg2[%c0_2] : memref<8xf32, #tpu.memory_space<smem>>
    %3 = vector.broadcast %2 : f32 to vector<16x16xf32>
    %4 = arith.mulf %1, %3 : vector<16x16xf32>
    %c0_3 = arith.constant 0 : index
    %5 = memref.load %arg3[%c0_3] : memref<8xf32, #tpu.memory_space<smem>>
    %6 = vector.broadcast %5 : f32 to vector<16x16xf32>
    %7 = arith.addf %4, %6 : vector<16x16xf32>
    %c0_4 = arith.constant 0 : index
    %c0_5 = arith.constant 0 : index
    %c0_6 = arith.constant 0 : index
    %8 = vector.load %arg4[%c0_4, %c0_5, %c0_6] : memref<2x16x128xf32, #tpu.memory_space<vmem>>, vector<1x16x16xf32>
    %9 = vector.shape_cast %8 : vector<1x16x16xf32> to vector<16x16xf32>
    %10 = vector.shape_cast %7 : vector<16x16xf32> to vector<1x16x16xf32>
    tpu.vector_store %arg4[%c0_4, %c0_5, %c0_6], %10 {strides = array<i32>} : memref<2x16x128xf32, #tpu.memory_space<vmem>>, vector<1x16x16xf32>,
    %c0_7 = arith.constant 0 : index
    %c0_8 = arith.constant 0 : index
    %c36 = arith.constant 36 : index
    %11 = vector.load %arg1[%c0_7, %c0_8, %c36] : memref<1x16x384xf32, #tpu.memory_space<vmem>>, vector<1x16x16xf32>
    %12 = vector.shape_cast %11 : vector<1x16x16xf32> to vector<16x16xf32>
    %c1 = arith.constant 1 : index
    %13 = memref.load %arg2[%c1] : memref<8xf32, #tpu.memory_space<smem>>
    %14 = vector.broadcast %13 : f32 to vector<16x16xf32>
    %15 = arith.mulf %12, %14 : vector<16x16xf32>
    %c1_9 = arith.constant 1 : index
    %16 = memref.load %arg3[%c1_9] : memref<8xf32, #tpu.memory_space<smem>>
    %17 = vector.broadcast %16 : f32 to vector<16x16xf32>
    %18 = arith.addf %15, %17 : vector<16x16xf32>
    %c0_10 = arith.constant 0 : index
    %c0_11 = arith.constant 0 : index
    %c16 = arith.constant 16 : index
    %19 = vector.load %arg4[%c0_10, %c0_11, %c16] : memref<2x16x128xf32, #tpu.memory_space<vmem>>, vector<1x16x16xf32>
    %20 = vector.shape_cast %19 : vector<1x16x16xf32> to vector<16x16xf32>
    %21 = vector.shape_cast %18 : vector<16x16xf32> to vector<1x16x16xf32>
    tpu.vector_store %arg4[%c0_10, %c0_11, %c16], %21 {strides = array<i32>} : memref<2x16x128xf32, #tpu.memory_space<vmem>>, vector<1x16x16xf32>,
    %c0_12 = arith.constant 0 : index
    %c0_13 = arith.constant 0 : index
    %c72 = arith.constant 72 : index
    %22 = vector.load %arg1[%c0_12, %c0_13, %c72] : memref<1x16x384xf32, #tpu.memory_space<vmem>>, vector<1x16x16xf32>
    %23 = vector.shape_cast %22 : vector<1x16x16xf32> to vector<16x16xf32>
    %c2 = arith.constant 2 : index
    %24 = memref.load %arg2[%c2] : memref<8xf32, #tpu.memory_space<smem>>
    %25 = vector.broadcast %24 : f32 to vector<16x16xf32>
    %26 = arith.mulf %23, %25 : vector<16x16xf32>
    %c2_14 = arith.constant 2 : index
    %27 = memref.load %arg3[%c2_14] : memref<8xf32, #tpu.memory_space<smem>>
    %28 = vector.broadcast %27 : f32 to vector<16x16xf32>
    %29 = arith.addf %26, %28 : vector<16x16xf32>
    %c0_15 = arith.constant 0 : index
    %c0_16 = arith.constant 0 : index
    %c32 = arith.constant 32 : index
    %30 = vector.load %arg4[%c0_15, %c0_16, %c32] : memref<2x16x128xf32, #tpu.memory_space<vmem>>, vector<1x16x16xf32>
    %31 = vector.shape_cast %30 : vector<1x16x16xf32> to vector<16x16xf32>
    %32 = vector.shape_cast %29 : vector<16x16xf32> to vector<1x16x16xf32>
    tpu.vector_store %arg4[%c0_15, %c0_16, %c32], %32 {strides = array<i32>} : memref<2x16x128xf32, #tpu.memory_space<vmem>>, vector<1x16x16xf32>,
    %c0_17 = arith.constant 0 : index
    %c0_18 = arith.constant 0 : index
    %c108 = arith.constant 108 : index
    %33 = vector.load %arg1[%c0_17, %c0_18, %c108] : memref<1x16x384xf32, #tpu.memory_space<vmem>>, vector<1x16x16xf32>
    %34 = vector.shape_cast %33 : vector<1x16x16xf32> to vector<16x16xf32>
    %c3 = arith.constant 3 : index
    %35 = memref.load %arg2[%c3] : memref<8xf32, #tpu.memory_space<smem>>
    %36 = vector.broadcast %35 : f32 to vector<16x16xf32>
    %37 = arith.mulf %34, %36 : vector<16x16xf32>
    %c3_19 = arith.constant 3 : index
    %38 = memref.load %arg3[%c3_19] : memref<8xf32, #tpu.memory_space<smem>>
    %39 = vector.broadcast %38 : f32 to vector<16x16xf32>
    %40 = arith.addf %37, %39 : vector<16x16xf32>
    %c0_20 = arith.constant 0 : index
    %c0_21 = arith.constant 0 : index
    %c48 = arith.constant 48 : index
    %41 = vector.load %arg4[%c0_20, %c0_21, %c48] : memref<2x16x128xf32, #tpu.memory_space<vmem>>, vector<1x16x16xf32>
    %42 = vector.shape_cast %41 : vector<1x16x16xf32> to vector<16x16xf32>
    %43 = vector.shape_cast %40 : vector<16x16xf32> to vector<1x16x16xf32>
    tpu.vector_store %arg4[%c0_20, %c0_21, %c48], %43 {strides = array<i32>} : memref<2x16x128xf32, #tpu.memory_space<vmem>>, vector<1x16x16xf32>,
    %c0_22 = arith.constant 0 : index
    %c0_23 = arith.constant 0 : index
    %c144 = arith.constant 144 : index
    %44 = vector.load %arg1[%c0_22, %c0_23, %c144] : memref<1x16x384xf32, #tpu.memory_space<vmem>>, vector<1x16x16xf32>
    %45 = vector.shape_cast %44 : vector<1x16x16xf32> to vector<16x16xf32>
    %c4 = arith.constant 4 : index
    %46 = memref.load %arg2[%c4] : memref<8xf32, #tpu.memory_space<smem>>
    %47 = vector.broadcast %46 : f32 to vector<16x16xf32>
    %48 = arith.mulf %45, %47 : vector<16x16xf32>
    %c4_24 = arith.constant 4 : index
    %49 = memref.load %arg3[%c4_24] : memref<8xf32, #tpu.memory_space<smem>>
    %50 = vector.broadcast %49 : f32 to vector<16x16xf32>
    %51 = arith.addf %48, %50 : vector<16x16xf32>
    %c0_25 = arith.constant 0 : index
    %c0_26 = arith.constant 0 : index
    %c64 = arith.constant 64 : index
    %52 = vector.load %arg4[%c0_25, %c0_26, %c64] : memref<2x16x128xf32, #tpu.memory_space<vmem>>, vector<1x16x16xf32>
    %53 = vector.shape_cast %52 : vector<1x16x16xf32> to vector<16x16xf32>
    %54 = vector.shape_cast %51 : vector<16x16xf32> to vector<1x16x16xf32>
    tpu.vector_store %arg4[%c0_25, %c0_26, %c64], %54 {strides = array<i32>} : memref<2x16x128xf32, #tpu.memory_space<vmem>>, vector<1x16x16xf32>,
    %c0_27 = arith.constant 0 : index
    %c0_28 = arith.constant 0 : index
    %c180 = arith.constant 180 : index
    %55 = vector.load %arg1[%c0_27, %c0_28, %c180] : memref<1x16x384xf32, #tpu.memory_space<vmem>>, vector<1x16x16xf32>
    %56 = vector.shape_cast %55 : vector<1x16x16xf32> to vector<16x16xf32>
    %c5 = arith.constant 5 : index
    %57 = memref.load %arg2[%c5] : memref<8xf32, #tpu.memory_space<smem>>
    %58 = vector.broadcast %57 : f32 to vector<16x16xf32>
    %59 = arith.mulf %56, %58 : vector<16x16xf32>
    %c5_29 = arith.constant 5 : index
    %60 = memref.load %arg3[%c5_29] : memref<8xf32, #tpu.memory_space<smem>>
    %61 = vector.broadcast %60 : f32 to vector<16x16xf32>
    %62 = arith.addf %59, %61 : vector<16x16xf32>
    %c0_30 = arith.constant 0 : index
    %c0_31 = arith.constant 0 : index
    %c80 = arith.constant 80 : index
    %63 = vector.load %arg4[%c0_30, %c0_31, %c80] : memref<2x16x128xf32, #tpu.memory_space<vmem>>, vector<1x16x16xf32>
    %64 = vector.shape_cast %63 : vector<1x16x16xf32> to vector<16x16xf32>
    %65 = vector.shape_cast %62 : vector<16x16xf32> to vector<1x16x16xf32>
    tpu.vector_store %arg4[%c0_30, %c0_31, %c80], %65 {strides = array<i32>} : memref<2x16x128xf32, #tpu.memory_space<vmem>>, vector<1x16x16xf32>,
    %c0_32 = arith.constant 0 : index
    %c0_33 = arith.constant 0 : index
    %c216 = arith.constant 216 : index
    %66 = vector.load %arg1[%c0_32, %c0_33, %c216] : memref<1x16x384xf32, #tpu.memory_space<vmem>>, vector<1x16x16xf32>
    %67 = vector.shape_cast %66 : vector<1x16x16xf32> to vector<16x16xf32>
    %c6 = arith.constant 6 : index
    %68 = memref.load %arg2[%c6] : memref<8xf32, #tpu.memory_space<smem>>
    %69 = vector.broadcast %68 : f32 to vector<16x16xf32>
    %70 = arith.mulf %67, %69 : vector<16x16xf32>
    %c6_34 = arith.constant 6 : index
    %71 = memref.load %arg3[%c6_34] : memref<8xf32, #tpu.memory_space<smem>>
    %72 = vector.broadcast %71 : f32 to vector<16x16xf32>
    %73 = arith.addf %70, %72 : vector<16x16xf32>
    %c0_35 = arith.constant 0 : index
    %c0_36 = arith.constant 0 : index
    %c96 = arith.constant 96 : index
    %74 = vector.load %arg4[%c0_35, %c0_36, %c96] : memref<2x16x128xf32, #tpu.memory_space<vmem>>, vector<1x16x16xf32>
    %75 = vector.shape_cast %74 : vector<1x16x16xf32> to vector<16x16xf32>
    %76 = vector.shape_cast %73 : vector<16x16xf32> to vector<1x16x16xf32>
    tpu.vector_store %arg4[%c0_35, %c0_36, %c96], %76 {strides = array<i32>} : memref<2x16x128xf32, #tpu.memory_space<vmem>>, vector<1x16x16xf32>,
    %c0_37 = arith.constant 0 : index
    %c0_38 = arith.constant 0 : index
    %c252 = arith.constant 252 : index
    %77 = vector.load %arg1[%c0_37, %c0_38, %c252] : memref<1x16x384xf32, #tpu.memory_space<vmem>>, vector<1x16x16xf32>
    %78 = vector.shape_cast %77 : vector<1x16x16xf32> to vector<16x16xf32>
    %c7 = arith.constant 7 : index
    %79 = memref.load %arg2[%c7] : memref<8xf32, #tpu.memory_space<smem>>
    %80 = vector.broadcast %79 : f32 to vector<16x16xf32>
    %81 = arith.mulf %78, %80 : vector<16x16xf32>
    %c7_39 = arith.constant 7 : index
    %82 = memref.load %arg3[%c7_39] : memref<8xf32, #tpu.memory_space<smem>>
    %83 = vector.broadcast %82 : f32 to vector<16x16xf32>
    %84 = arith.addf %81, %83 : vector<16x16xf32>
    %c0_40 = arith.constant 0 : index
    %c0_41 = arith.constant 0 : index
    %c112 = arith.constant 112 : index
    %85 = vector.load %arg4[%c0_40, %c0_41, %c112] : memref<2x16x128xf32, #tpu.memory_space<vmem>>, vector<1x16x16xf32>
    %86 = vector.shape_cast %85 : vector<1x16x16xf32> to vector<16x16xf32>
    %87 = vector.shape_cast %84 : vector<16x16xf32> to vector<1x16x16xf32>
    tpu.vector_store %arg4[%c0_40, %c0_41, %c112], %87 {strides = array<i32>} : memref<2x16x128xf32, #tpu.memory_space<vmem>>, vector<1x16x16xf32>,
    %c0_42 = arith.constant 0 : index
    %c0_43 = arith.constant 0 : index
    %c18 = arith.constant 18 : index
    %88 = vector.load %arg1[%c0_42, %c0_43, %c18] : memref<1x16x384xf32, #tpu.memory_space<vmem>>, vector<1x16x16xf32>
    %89 = vector.shape_cast %88 : vector<1x16x16xf32> to vector<16x16xf32>
    %c0_44 = arith.constant 0 : index
    %90 = memref.load %arg2[%c0_44] : memref<8xf32, #tpu.memory_space<smem>>
    %91 = vector.broadcast %90 : f32 to vector<16x16xf32>
    %92 = arith.mulf %89, %91 : vector<16x16xf32>
    %c0_45 = arith.constant 0 : index
    %93 = memref.load %arg3[%c0_45] : memref<8xf32, #tpu.memory_space<smem>>
    %94 = vector.broadcast %93 : f32 to vector<16x16xf32>
    %95 = arith.addf %92, %94 : vector<16x16xf32>
    %c1_46 = arith.constant 1 : index
    %c0_47 = arith.constant 0 : index
    %c0_48 = arith.constant 0 : index
    %96 = vector.load %arg4[%c1_46, %c0_47, %c0_48] : memref<2x16x128xf32, #tpu.memory_space<vmem>>, vector<1x16x16xf32>
    %97 = vector.shape_cast %96 : vector<1x16x16xf32> to vector<16x16xf32>
    %98 = vector.shape_cast %95 : vector<16x16xf32> to vector<1x16x16xf32>
    tpu.vector_store %arg4[%c1_46, %c0_47, %c0_48], %98 {strides = array<i32>} : memref<2x16x128xf32, #tpu.memory_space<vmem>>, vector<1x16x16xf32>,
    %c0_49 = arith.constant 0 : index
    %c0_50 = arith.constant 0 : index
    %c54 = arith.constant 54 : index
    %99 = vector.load %arg1[%c0_49, %c0_50, %c54] : memref<1x16x384xf32, #tpu.memory_space<vmem>>, vector<1x16x16xf32>
    %100 = vector.shape_cast %99 : vector<1x16x16xf32> to vector<16x16xf32>
    %c1_51 = arith.constant 1 : index
    %101 = memref.load %arg2[%c1_51] : memref<8xf32, #tpu.memory_space<smem>>
    %102 = vector.broadcast %101 : f32 to vector<16x16xf32>
    %103 = arith.mulf %100, %102 : vector<16x16xf32>
    %c1_52 = arith.constant 1 : index
    %104 = memref.load %arg3[%c1_52] : memref<8xf32, #tpu.memory_space<smem>>
    %105 = vector.broadcast %104 : f32 to vector<16x16xf32>
    %106 = arith.addf %103, %105 : vector<16x16xf32>
    %c1_53 = arith.constant 1 : index
    %c0_54 = arith.constant 0 : index
    %c16_55 = arith.constant 16 : index
    %107 = vector.load %arg4[%c1_53, %c0_54, %c16_55] : memref<2x16x128xf32, #tpu.memory_space<vmem>>, vector<1x16x16xf32>
    %108 = vector.shape_cast %107 : vector<1x16x16xf32> to vector<16x16xf32>
    %109 = vector.shape_cast %106 : vector<16x16xf32> to vector<1x16x16xf32>
    tpu.vector_store %arg4[%c1_53, %c0_54, %c16_55], %109 {strides = array<i32>} : memref<2x16x128xf32, #tpu.memory_space<vmem>>, vector<1x16x16xf32>,
    %c0_56 = arith.constant 0 : index
    %c0_57 = arith.constant 0 : index
    %c90 = arith.constant 90 : index
    %110 = vector.load %arg1[%c0_56, %c0_57, %c90] : memref<1x16x384xf32, #tpu.memory_space<vmem>>, vector<1x16x16xf32>
    %111 = vector.shape_cast %110 : vector<1x16x16xf32> to vector<16x16xf32>
    %c2_58 = arith.constant 2 : index
    %112 = memref.load %arg2[%c2_58] : memref<8xf32, #tpu.memory_space<smem>>
    %113 = vector.broadcast %112 : f32 to vector<16x16xf32>
    %114 = arith.mulf %111, %113 : vector<16x16xf32>
    %c2_59 = arith.constant 2 : index
    %115 = memref.load %arg3[%c2_59] : memref<8xf32, #tpu.memory_space<smem>>
    %116 = vector.broadcast %115 : f32 to vector<16x16xf32>
    %117 = arith.addf %114, %116 : vector<16x16xf32>
    %c1_60 = arith.constant 1 : index
    %c0_61 = arith.constant 0 : index
    %c32_62 = arith.constant 32 : index
    %118 = vector.load %arg4[%c1_60, %c0_61, %c32_62] : memref<2x16x128xf32, #tpu.memory_space<vmem>>, vector<1x16x16xf32>
    %119 = vector.shape_cast %118 : vector<1x16x16xf32> to vector<16x16xf32>
    %120 = vector.shape_cast %117 : vector<16x16xf32> to vector<1x16x16xf32>
    tpu.vector_store %arg4[%c1_60, %c0_61, %c32_62], %120 {strides = array<i32>} : memref<2x16x128xf32, #tpu.memory_space<vmem>>, vector<1x16x16xf32>,
    %c0_63 = arith.constant 0 : index
    %c0_64 = arith.constant 0 : index
    %c126 = arith.constant 126 : index
    %121 = vector.load %arg1[%c0_63, %c0_64, %c126] : memref<1x16x384xf32, #tpu.memory_space<vmem>>, vector<1x16x16xf32>
    %122 = vector.shape_cast %121 : vector<1x16x16xf32> to vector<16x16xf32>
    %c3_65 = arith.constant 3 : index
    %123 = memref.load %arg2[%c3_65] : memref<8xf32, #tpu.memory_space<smem>>
    %124 = vector.broadcast %123 : f32 to vector<16x16xf32>
    %125 = arith.mulf %122, %124 : vector<16x16xf32>
    %c3_66 = arith.constant 3 : index
    %126 = memref.load %arg3[%c3_66] : memref<8xf32, #tpu.memory_space<smem>>
    %127 = vector.broadcast %126 : f32 to vector<16x16xf32>
    %128 = arith.addf %125, %127 : vector<16x16xf32>
    %c1_67 = arith.constant 1 : index
    %c0_68 = arith.constant 0 : index
    %c48_69 = arith.constant 48 : index
    %129 = vector.load %arg4[%c1_67, %c0_68, %c48_69] : memref<2x16x128xf32, #tpu.memory_space<vmem>>, vector<1x16x16xf32>
    %130 = vector.shape_cast %129 : vector<1x16x16xf32> to vector<16x16xf32>
    %131 = vector.shape_cast %128 : vector<16x16xf32> to vector<1x16x16xf32>
    tpu.vector_store %arg4[%c1_67, %c0_68, %c48_69], %131 {strides = array<i32>} : memref<2x16x128xf32, #tpu.memory_space<vmem>>, vector<1x16x16xf32>,
    %c0_70 = arith.constant 0 : index
    %c0_71 = arith.constant 0 : index
    %c162 = arith.constant 162 : index
    %132 = vector.load %arg1[%c0_70, %c0_71, %c162] : memref<1x16x384xf32, #tpu.memory_space<vmem>>, vector<1x16x16xf32>
    %133 = vector.shape_cast %132 : vector<1x16x16xf32> to vector<16x16xf32>
    %c4_72 = arith.constant 4 : index
    %134 = memref.load %arg2[%c4_72] : memref<8xf32, #tpu.memory_space<smem>>
    %135 = vector.broadcast %134 : f32 to vector<16x16xf32>
    %136 = arith.mulf %133, %135 : vector<16x16xf32>
    %c4_73 = arith.constant 4 : index
    %137 = memref.load %arg3[%c4_73] : memref<8xf32, #tpu.memory_space<smem>>
    %138 = vector.broadcast %137 : f32 to vector<16x16xf32>
    %139 = arith.addf %136, %138 : vector<16x16xf32>
    %c1_74 = arith.constant 1 : index
    %c0_75 = arith.constant 0 : index
    %c64_76 = arith.constant 64 : index
    %140 = vector.load %arg4[%c1_74, %c0_75, %c64_76] : memref<2x16x128xf32, #tpu.memory_space<vmem>>, vector<1x16x16xf32>
    %141 = vector.shape_cast %140 : vector<1x16x16xf32> to vector<16x16xf32>
    %142 = vector.shape_cast %139 : vector<16x16xf32> to vector<1x16x16xf32>
    tpu.vector_store %arg4[%c1_74, %c0_75, %c64_76], %142 {strides = array<i32>} : memref<2x16x128xf32, #tpu.memory_space<vmem>>, vector<1x16x16xf32>,
    %c0_77 = arith.constant 0 : index
    %c0_78 = arith.constant 0 : index
    %c198 = arith.constant 198 : index
    %143 = vector.load %arg1[%c0_77, %c0_78, %c198] : memref<1x16x384xf32, #tpu.memory_space<vmem>>, vector<1x16x16xf32>
    %144 = vector.shape_cast %143 : vector<1x16x16xf32> to vector<16x16xf32>
    %c5_79 = arith.constant 5 : index
    %145 = memref.load %arg2[%c5_79] : memref<8xf32, #tpu.memory_space<smem>>
    %146 = vector.broadcast %145 : f32 to vector<16x16xf32>
    %147 = arith.mulf %144, %146 : vector<16x16xf32>
    %c5_80 = arith.constant 5 : index
    %148 = memref.load %arg3[%c5_80] : memref<8xf32, #tpu.memory_space<smem>>
    %149 = vector.broadcast %148 : f32 to vector<16x16xf32>
    %150 = arith.addf %147, %149 : vector<16x16xf32>
    %c1_81 = arith.constant 1 : index
    %c0_82 = arith.constant 0 : index
    %c80_83 = arith.constant 80 : index
    %151 = vector.load %arg4[%c1_81, %c0_82, %c80_83] : memref<2x16x128xf32, #tpu.memory_space<vmem>>, vector<1x16x16xf32>
    %152 = vector.shape_cast %151 : vector<1x16x16xf32> to vector<16x16xf32>
    %153 = vector.shape_cast %150 : vector<16x16xf32> to vector<1x16x16xf32>
    tpu.vector_store %arg4[%c1_81, %c0_82, %c80_83], %153 {strides = array<i32>} : memref<2x16x128xf32, #tpu.memory_space<vmem>>, vector<1x16x16xf32>,
    %c0_84 = arith.constant 0 : index
    %c0_85 = arith.constant 0 : index
    %c234 = arith.constant 234 : index
    %154 = vector.load %arg1[%c0_84, %c0_85, %c234] : memref<1x16x384xf32, #tpu.memory_space<vmem>>, vector<1x16x16xf32>
    %155 = vector.shape_cast %154 : vector<1x16x16xf32> to vector<16x16xf32>
    %c6_86 = arith.constant 6 : index
    %156 = memref.load %arg2[%c6_86] : memref<8xf32, #tpu.memory_space<smem>>
    %157 = vector.broadcast %156 : f32 to vector<16x16xf32>
    %158 = arith.mulf %155, %157 : vector<16x16xf32>
    %c6_87 = arith.constant 6 : index
    %159 = memref.load %arg3[%c6_87] : memref<8xf32, #tpu.memory_space<smem>>
    %160 = vector.broadcast %159 : f32 to vector<16x16xf32>
    %161 = arith.addf %158, %160 : vector<16x16xf32>
    %c1_88 = arith.constant 1 : index
    %c0_89 = arith.constant 0 : index
    %c96_90 = arith.constant 96 : index
    %162 = vector.load %arg4[%c1_88, %c0_89, %c96_90] : memref<2x16x128xf32, #tpu.memory_space<vmem>>, vector<1x16x16xf32>
    %163 = vector.shape_cast %162 : vector<1x16x16xf32> to vector<16x16xf32>
    %164 = vector.shape_cast %161 : vector<16x16xf32> to vector<1x16x16xf32>
    tpu.vector_store %arg4[%c1_88, %c0_89, %c96_90], %164 {strides = array<i32>} : memref<2x16x128xf32, #tpu.memory_space<vmem>>, vector<1x16x16xf32>,
    %c0_91 = arith.constant 0 : index
    %c0_92 = arith.constant 0 : index
    %c270 = arith.constant 270 : index
    %165 = vector.load %arg1[%c0_91, %c0_92, %c270] : memref<1x16x384xf32, #tpu.memory_space<vmem>>, vector<1x16x16xf32>
    %166 = vector.shape_cast %165 : vector<1x16x16xf32> to vector<16x16xf32>
    %c7_93 = arith.constant 7 : index
    %167 = memref.load %arg2[%c7_93] : memref<8xf32, #tpu.memory_space<smem>>
    %168 = vector.broadcast %167 : f32 to vector<16x16xf32>
    %169 = arith.mulf %166, %168 : vector<16x16xf32>
    %c7_94 = arith.constant 7 : index
    %170 = memref.load %arg3[%c7_94] : memref<8xf32, #tpu.memory_space<smem>>
    %171 = vector.broadcast %170 : f32 to vector<16x16xf32>
    %172 = arith.addf %169, %171 : vector<16x16xf32>
    %c1_95 = arith.constant 1 : index
    %c0_96 = arith.constant 0 : index
    %c112_97 = arith.constant 112 : index
    %173 = vector.load %arg4[%c1_95, %c0_96, %c112_97] : memref<2x16x128xf32, #tpu.memory_space<vmem>>, vector<1x16x16xf32>
    %174 = vector.shape_cast %173 : vector<1x16x16xf32> to vector<16x16xf32>
    %175 = vector.shape_cast %172 : vector<16x16xf32> to vector<1x16x16xf32>
    tpu.vector_store %arg4[%c1_95, %c0_96, %c112_97], %175 {strides = array<i32>} : memref<2x16x128xf32, #tpu.memory_space<vmem>>, vector<1x16x16xf32>,
    return
  }
  func.func @transform_0(%arg0: i32) -> (i32, i32, i32) {
    %c0_i32 = arith.constant 0 : i32
    %c0_i32_0 = arith.constant 0 : i32
    %c0_i32_1 = arith.constant 0 : i32
    return %arg0, %c0_i32, %c0_i32_0 : i32, i32, i32
  }
  func.func @transform_1(%arg0: i32) -> i32 {
    %c0_i32 = arith.constant 0 : i32
    %c0_i32_0 = arith.constant 0 : i32
    return %c0_i32 : i32
  }
  func.func @transform_2(%arg0: i32) -> i32 {
    %c0_i32 = arith.constant 0 : i32
    %c0_i32_0 = arith.constant 0 : i32
    return %c0_i32 : i32
  }
  func.func @transform_3(%arg0: i32) -> (i32, i32, i32) {
    %c0_i32 = arith.constant 0 : i32
    %c0_i32_0 = arith.constant 0 : i32
    %c0_i32_1 = arith.constant 0 : i32
    return %arg0, %c0_i32, %c0_i32_0 : i32, i32, i32
  }
}

</mosaic_0001>

<llo_original>
// kernel: sepconv_forward.5
$region0: #{sepconv_forward.5}
  #allocation0 [shape = 'u32[]', space=smem, size = 0x4, offset = 0x4, fixed_abs, tag = 'smem constant byte address 0x4 - core index']
  #allocation1 [shape = 'u32[144,128]{1,0:T(1,128)}', space=vmem, size = 0x12000, scoped, tag = 'internal scratch']
  %s0 = inlined_call_operand.vmem [shape: f32[1,16,384], index: 0, kind: input, shape index: {}]
  %s1 = inlined_call_operand.vmem [shape: f32[8], index: 1, kind: input, shape index: {}]
  %s2 = inlined_call_operand.vmem [shape: f32[8], index: 2, kind: input, shape index: {}]
  %s3 = inlined_call_operand.vmem [shape: f32[2,16,128], index: 3, kind: output, shape index: {}]
  %s4 = sld [smem:[#allocation0]]
  $region30: #{sepconv_forward.5} parent=0
    _
  %s6 = ssub.s32 1, %s4
  %s7 = scalar_select 0, %s6, %s4
  $region1: #{sepconv_forward.5} parent=0
    #allocation2 [shape = 'u8[512]{0}', space=smem, size = 0x200, scoped, tag = 'input window, operand 1, single buffered']
    #allocation3 [shape = 's32[1]{0}', space=sflag, size = 0x4, scoped, tag = 'scoped memory for sepconv_forward.5']
    #allocation4 [shape = 'u8[512]{0}', space=smem, size = 0x200, scoped, tag = 'input window, operand 2, single buffered']
    #allocation5 [shape = 's32[1]{0}', space=sflag, size = 0x4, scoped, tag = 'scoped memory for sepconv_forward.5']
    %8 = vsyncpa [#allocation3], 0
    %9 = vsyncpa [#allocation5], 0
    // Predicated region
    $region2: #{sepconv_forward.5} parent=1 // pred_check
      _
    $region3: #{sepconv_forward.5} parent=1 // pred_check_branch
      %11 = sbr.rel (0) target = $region5
    $region4: #{sepconv_forward.5} parent=1 // pred_region
      _
    $region5: #{sepconv_forward.5} parent=1 // pred_fallthru
      _
    // Predicated region
    $region6: #{sepconv_forward.5} parent=1 // pred_check
      _
    $region7: #{sepconv_forward.5} parent=1 // pred_check_branch
      %13 = sbr.rel (0) target = $region9
    $region8: #{sepconv_forward.5} parent=1 // pred_region
      %s15 = ssub.s32 16, 16
      %16 = vsyncadd [#allocation3], %s15
      %s18 = sshll.u32 %s1, 4
      %s19 = int_to_ptr.vmem [resolvable:$true] %s18
      %21 = dma.vmem_to_smem %s19, 16, [#allocation2], [#allocation3]
    $region9: #{sepconv_forward.5} parent=1 // pred_fallthru
      _
    // Predicated region
    $region10: #{sepconv_forward.5} parent=1 // pred_check
      _
    $region11: #{sepconv_forward.5} parent=1 // pred_check_branch
      %23 = sbr.rel (0) target = $region13
    $region12: #{sepconv_forward.5} parent=1 // pred_region
      %s25 = ssub.s32 16, 16
      %26 = vsyncadd [#allocation5], %s25
      %s28 = sshll.u32 %s2, 4
      %s29 = int_to_ptr.vmem [resolvable:$true] %s28
      %31 = dma.vmem_to_smem %s29, 16, [#allocation4], [#allocation5]
    $region13: #{sepconv_forward.5} parent=1 // pred_fallthru
      _
    // Predicated region
    $region14: #{sepconv_forward.5} parent=1 // pred_check
      _
    $region15: #{sepconv_forward.5} parent=1 // pred_check_branch
      %33 = sbr.rel (0) target = $region17
    $region16: #{sepconv_forward.5} parent=1 // pred_region
      %34 = dma.done [#allocation3], 16
    $region17: #{sepconv_forward.5} parent=1 // pred_fallthru
      _
    // Predicated region
    $region18: #{sepconv_forward.5} parent=1 // pred_check
      _
    $region19: #{sepconv_forward.5} parent=1 // pred_check_branch
      %36 = sbr.rel (0) target = $region21
    $region20: #{sepconv_forward.5} parent=1 // pred_region
      %37 = dma.done [#allocation5], 16
    $region21: #{sepconv_forward.5} parent=1 // pred_fallthru
      _
    %38 = sfence
    %v39 = vld [vmem:[%s0] sm:$0xff]
    %v40 = vld [vmem:[%s0 + $0x18] sm:$0xff]
    %s41 = sld [smem:[#allocation2]]
    %v42 = vstv %s41
    %v43 = vmul.f32 %v39, %v42
    %v44 = vmul.f32 %v40, %v42
    %s45 = sld [smem:[#allocation4]]
    %v46 = vstv %s45
    %v47 = vadd.f32 %v43, %v46
    %v48 = vadd.f32 %v44, %v46
    %vm49 = vcmask 130048
    %50 = vst.msk [vmem:[%s3] sm:$0xff] %vm49, %v47
    %51 = vst.msk [vmem:[%s3 + $0x8] sm:$0xff] %vm49, %v48
    %v52 = vld [vmem:[%s0] sm:$0xff]
    %v53 = vld [vmem:[%s0 + $0x18] sm:$0xff]
    %s54 = sld [smem:[#allocation2 + $0x1]]
    %v55 = vstv %s54
    %v56 = vmul.f32 %v52, %v55
    %v57 = vmul.f32 %v53, %v55
    %s58 = sld [smem:[#allocation4 + $0x1]]
    %v59 = vstv %s58
    %v60 = vadd.f32 %v56, %v59
    %v61 = vadd.f32 %v57, %v59
    %64 = vrot.lane.b32.xlu0 %v60, 108
    %v65 = vpop.permute.xlu0 %64
    %66 = vrot.lane.b32.xlu0 %v61, 108
    %v67 = vpop.permute.xlu0 %66
    %vm70 = vcmask 261248
    %71 = vst.msk [vmem:[%s3] sm:$0xff] %vm70, %v65
    %72 = vst.msk [vmem:[%s3 + $0x8] sm:$0xff] %vm70, %v67
    %v73 = vld [vmem:[%s0] sm:$0xff]
    %v74 = vld [vmem:[%s0 + $0x18] sm:$0xff]
    %s75 = sld [smem:[#allocation2 + $0x2]]
    %v76 = vstv %s75
    %v77 = vmul.f32 %v73, %v76
    %v78 = vmul.f32 %v74, %v76
    %s79 = sld [smem:[#allocation4 + $0x2]]
    %v80 = vstv %s79
    %v81 = vadd.f32 %v77, %v80
    %v82 = vadd.f32 %v78, %v80
    %85 = vrot.lane.b32.xlu0 %v81, 88
    %v86 = vpop.permute.xlu0 %85
    %87 = vrot.lane.b32.xlu0 %v82, 88
    %v88 = vpop.permute.xlu0 %87
    %vm91 = vcmask 392448
    %92 = vst.msk [vmem:[%s3] sm:$0xff] %vm91, %v86
    %93 = vst.msk [vmem:[%s3 + $0x8] sm:$0xff] %vm91, %v88
    %v94 = vld [vmem:[%s0] sm:$0xff]
    %v95 = vld [vmem:[%s0 + $0x18] sm:$0xff]
    %s96 = sld [smem:[#allocation2 + $0x3]]
    %v97 = vstv %s96
    %v98 = vmul.f32 %v94, %v97
    %v99 = vmul.f32 %v95, %v97
    %s100 = sld [smem:[#allocation4 + $0x3]]
    %v101 = vstv %s100
    %v102 = vadd.f32 %v98, %v101
    %v103 = vadd.f32 %v99, %v101
    %106 = vrot.lane.b32.xlu0 %v102, 68
    %v107 = vpop.permute.xlu0 %106
    %108 = vrot.lane.b32.xlu0 %v103, 68
    %v109 = vpop.permute.xlu0 %108
    %vm112 = vcmask 523648
    %113 = vst.msk [vmem:[%s3] sm:$0xff] %vm112, %v107
    %114 = vst.msk [vmem:[%s3 + $0x8] sm:$0xff] %vm112, %v109
    %v115 = vld [vmem:[%s0 + $0x8] sm:$0xff]
    %v116 = vld [vmem:[%s0 + $0x20] sm:$0xff]
    %s117 = sld [smem:[#allocation2 + $0x4]]
    %v118 = vstv %s117
    %v119 = vmul.f32 %v115, %v118
    %v120 = vmul.f32 %v116, %v118
    %s121 = sld [smem:[#allocation4 + $0x4]]
    %v122 = vstv %s121
    %v123 = vadd.f32 %v119, %v122
    %v124 = vadd.f32 %v120, %v122
    %127 = vrot.lane.b32.xlu0 %v123, 48
    %v128 = vpop.permute.xlu0 %127
    %129 = vrot.lane.b32.xlu0 %v124, 48
    %v130 = vpop.permute.xlu0 %129
    %vm133 = vcmask 654848
    %134 = vst.msk [vmem:[%s3] sm:$0xff] %vm133, %v128
    %135 = vst.msk [vmem:[%s3 + $0x8] sm:$0xff] %vm133, %v130
    %v136 = vld [vmem:[%s0 + $0x8] sm:$0xff]
    %v137 = vld [vmem:[%s0 + $0x20] sm:$0xff]
    %s138 = sld [smem:[#allocation2 + $0x5]]
    %v139 = vstv %s138
    %v140 = vmul.f32 %v136, %v139
    %v141 = vmul.f32 %v137, %v139
    %s142 = sld [smem:[#allocation4 + $0x5]]
    %v143 = vstv %s142
    %v144 = vadd.f32 %v140, %v143
    %v145 = vadd.f32 %v141, %v143
    %148 = vrot.lane.b32.xlu0 %v144, 28
    %v149 = vpop.permute.xlu0 %148
    %150 = vrot.lane.b32.xlu0 %v145, 28
    %v151 = vpop.permute.xlu0 %150
    %vm154 = vcmask 786048
    %155 = vst.msk [vmem:[%s3] sm:$0xff] %vm154, %v149
    %156 = vst.msk [vmem:[%s3 + $0x8] sm:$0xff] %vm154, %v151
    %v157 = vld [vmem:[%s0 + $0x8] sm:$0xff]
    %v158 = vld [vmem:[%s0 + $0x20] sm:$0xff]
    %s159 = sld [smem:[#allocation2 + $0x6]]
    %v160 = vstv %s159
    %v161 = vmul.f32 %v157, %v160
    %v162 = vmul.f32 %v158, %v160
    %s163 = sld [smem:[#allocation4 + $0x6]]
    %v164 = vstv %s163
    %v165 = vadd.f32 %v161, %v164
    %v166 = vadd.f32 %v162, %v164
    %169 = vrot.lane.b32.xlu0 %v165, 8
    %v170 = vpop.permute.xlu0 %169
    %171 = vrot.lane.b32.xlu0 %v166, 8
    %v172 = vpop.permute.xlu0 %171
    %vm175 = vcmask 917248
    %176 = vst.msk [vmem:[%s3] sm:$0xff] %vm175, %v170
    %177 = vst.msk [vmem:[%s3 + $0x8] sm:$0xff] %vm175, %v172
    %v178 = vld [vmem:[%s0 + $0x8] sm:$0xff]
    %v179 = vld [vmem:[%s0 + $0x10] sm:$0xff]
    %v180 = vld [vmem:[%s0 + $0x20] sm:$0xff]
    %v181 = vld [vmem:[%s0 + $0x28] sm:$0xff]
    %s182 = sld [smem:[#allocation2 + $0x7]]
    %v183 = vstv %s182
    %v184 = vmul.f32 %v178, %v183
    %v185 = vmul.f32 %v179, %v183
    %v186 = vmul.f32 %v180, %v183
    %v187 = vmul.f32 %v181, %v183
    %s188 = sld [smem:[#allocation4 + $0x7]]
    %v189 = vstv %s188
    %v190 = vadd.f32 %v184, %v189
    %v191 = vadd.f32 %v185, %v189
    %v192 = vadd.f32 %v186, %v189
    %v193 = vadd.f32 %v187, %v189
    %198 = vrot.lane.b32.xlu0 %v190, 116
    %v199 = vpop.permute.xlu0 %198
    %200 = vrot.lane.b32.xlu0 %v191, 116
    %v201 = vpop.permute.xlu0 %200
    %202 = vrot.lane.b32.xlu0 %v192, 116
    %v203 = vpop.permute.xlu0 %202
    %204 = vrot.lane.b32.xlu0 %v193, 116
    %v205 = vpop.permute.xlu0 %204
    %vm206 = vcmask 949248
    %v207 = vsel %vm206, %v199, %v201
    %v208 = vsel %vm206, %v203, %v205
    %vm211 = vcmask 1048448
    %212 = vst.msk [vmem:[%s3] sm:$0xff] %vm211, %v207
    %213 = vst.msk [vmem:[%s3 + $0x8] sm:$0xff] %vm211, %v208
    %v214 = vld [vmem:[%s0] sm:$0xff]
    %v215 = vld [vmem:[%s0 + $0x18] sm:$0xff]
    %s216 = sld [smem:[#allocation2]]
    %v217 = vstv %s216
    %v218 = vmul.f32 %v214, %v217
    %v219 = vmul.f32 %v215, %v217
    %s220 = sld [smem:[#allocation4]]
    %v221 = vstv %s220
    %v222 = vadd.f32 %v218, %v221
    %v223 = vadd.f32 %v219, %v221
    %226 = vrot.lane.b32.xlu0 %v222, 110
    %v227 = vpop.permute.xlu0 %226
    %228 = vrot.lane.b32.xlu0 %v223, 110
    %v229 = vpop.permute.xlu0 %228
    %s232 = scalar_lea.vmem %s3, 16
    %233 = vst.msk [vmem:[%s232] sm:$0xff] %vm49, %v227
    %234 = vst.msk [vmem:[%s232 + $0x8] sm:$0xff] %vm49, %v229
    %v235 = vld [vmem:[%s0] sm:$0xff]
    %v236 = vld [vmem:[%s0 + $0x18] sm:$0xff]
    %s237 = sld [smem:[#allocation2 + $0x1]]
    %v238 = vstv %s237
    %v239 = vmul.f32 %v235, %v238
    %v240 = vmul.f32 %v236, %v238
    %s241 = sld [smem:[#allocation4 + $0x1]]
    %v242 = vstv %s241
    %v243 = vadd.f32 %v239, %v242
    %v244 = vadd.f32 %v240, %v242
    %247 = vrot.lane.b32.xlu0 %v243, 90
    %v248 = vpop.permute.xlu0 %247
    %249 = vrot.lane.b32.xlu0 %v244, 90
    %v250 = vpop.permute.xlu0 %249
    %253 = vst.msk [vmem:[%s232] sm:$0xff] %vm70, %v248
    %254 = vst.msk [vmem:[%s232 + $0x8] sm:$0xff] %vm70, %v250
    %v255 = vld [vmem:[%s0] sm:$0xff]
    %v256 = vld [vmem:[%s0 + $0x18] sm:$0xff]
    %s257 = sld [smem:[#allocation2 + $0x2]]
    %v258 = vstv %s257
    %v259 = vmul.f32 %v255, %v258
    %v260 = vmul.f32 %v256, %v258
    %s261 = sld [smem:[#allocation4 + $0x2]]
    %v262 = vstv %s261
    %v263 = vadd.f32 %v259, %v262
    %v264 = vadd.f32 %v260, %v262
    %267 = vrot.lane.b32.xlu0 %v263, 70
    %v268 = vpop.permute.xlu0 %267
    %269 = vrot.lane.b32.xlu0 %v264, 70
    %v270 = vpop.permute.xlu0 %269
    %273 = vst.msk [vmem:[%s232] sm:$0xff] %vm91, %v268
    %274 = vst.msk [vmem:[%s232 + $0x8] sm:$0xff] %vm91, %v270
    %v275 = vld [vmem:[%s0] sm:$0xff]
    %v276 = vld [vmem:[%s0 + $0x8] sm:$0xff]
    %v277 = vld [vmem:[%s0 + $0x18] sm:$0xff]
    %v278 = vld [vmem:[%s0 + $0x20] sm:$0xff]
    %s279 = sld [smem:[#allocation2 + $0x3]]
    %v280 = vstv %s279
    %v281 = vmul.f32 %v275, %v280
    %v282 = vmul.f32 %v276, %v280
    %v283 = vmul.f32 %v277, %v280
    %v284 = vmul.f32 %v278, %v280
    %s285 = sld [smem:[#allocation4 + $0x3]]
    %v286 = vstv %s285
    %v287 = vadd.f32 %v281, %v286
    %v288 = vadd.f32 %v282, %v286
    %v289 = vadd.f32 %v283, %v286
    %v290 = vadd.f32 %v284, %v286
    %295 = vrot.lane.b32.xlu0 %v287, 50
    %v296 = vpop.permute.xlu0 %295
    %297 = vrot.lane.b32.xlu0 %v288, 50
    %v298 = vpop.permute.xlu0 %297
    %299 = vrot.lane.b32.xlu0 %v289, 50
    %v300 = vpop.permute.xlu0 %299
    %301 = vrot.lane.b32.xlu0 %v290, 50
    %v302 = vpop.permute.xlu0 %301
    %vm303 = vcmask 408576
    %v304 = vsel %vm303, %v296, %v298
    %v305 = vsel %vm303, %v300, %v302
    %308 = vst.msk [vmem:[%s232] sm:$0xff] %vm112, %v304
    %309 = vst.msk [vmem:[%s232 + $0x8] sm:$0xff] %vm112, %v305
    %v310 = vld [vmem:[%s0 + $0x8] sm:$0xff]
    %v311 = vld [vmem:[%s0 + $0x20] sm:$0xff]
    %s312 = sld [smem:[#allocation2 + $0x4]]
    %v313 = vstv %s312
    %v314 = vmul.f32 %v310, %v313
    %v315 = vmul.f32 %v311, %v313
    %s316 = sld [smem:[#allocation4 + $0x4]]
    %v317 = vstv %s316
    %v318 = vadd.f32 %v314, %v317
    %v319 = vadd.f32 %v315, %v317
    %322 = vrot.lane.b32.xlu0 %v318, 30
    %v323 = vpop.permute.xlu0 %322
    %324 = vrot.lane.b32.xlu0 %v319, 30
    %v325 = vpop.permute.xlu0 %324
    %328 = vst.msk [vmem:[%s232] sm:$0xff] %vm133, %v323
    %329 = vst.msk [vmem:[%s232 + $0x8] sm:$0xff] %vm133, %v325
    %v330 = vld [vmem:[%s0 + $0x8] sm:$0xff]
    %v331 = vld [vmem:[%s0 + $0x20] sm:$0xff]
    %s332 = sld [smem:[#allocation2 + $0x5]]
    %v333 = vstv %s332
    %v334 = vmul.f32 %v330, %v333
    %v335 = vmul.f32 %v331, %v333
    %s336 = sld [smem:[#allocation4 + $0x5]]
    %v337 = vstv %s336
    %v338 = vadd.f32 %v334, %v337
    %v339 = vadd.f32 %v335, %v337
    %342 = vrot.lane.b32.xlu0 %v338, 10
    %v343 = vpop.permute.xlu0 %342
    %344 = vrot.lane.b32.xlu0 %v339, 10
    %v345 = vpop.permute.xlu0 %344
    %348 = vst.msk [vmem:[%s232] sm:$0xff] %vm154, %v343
    %349 = vst.msk [vmem:[%s232 + $0x8] sm:$0xff] %vm154, %v345
    %v350 = vld [vmem:[%s0 + $0x8] sm:$0xff]
    %v351 = vld [vmem:[%s0 + $0x20] sm:$0xff]
    %s352 = sld [smem:[#allocation2 + $0x6]]
    %v353 = vstv %s352
    %v354 = vmul.f32 %v350, %v353
    %v355 = vmul.f32 %v351, %v353
    %s356 = sld [smem:[#allocation4 + $0x6]]
    %v357 = vstv %s356
    %v358 = vadd.f32 %v354, %v357
    %v359 = vadd.f32 %v355, %v357
    %362 = vrot.lane.b32.xlu0 %v358, 118
    %v363 = vpop.permute.xlu0 %362
    %364 = vrot.lane.b32.xlu0 %v359, 118
    %v365 = vpop.permute.xlu0 %364
    %368 = vst.msk [vmem:[%s232] sm:$0xff] %vm175, %v363
    %369 = vst.msk [vmem:[%s232 + $0x8] sm:$0xff] %vm175, %v365
    %v370 = vld [vmem:[%s0 + $0x10] sm:$0xff]
    %v371 = vld [vmem:[%s0 + $0x28] sm:$0xff]
    %s372 = sld [smem:[#allocation2 + $0x7]]
    %v373 = vstv %s372
    %v374 = vmul.f32 %v370, %v373
    %v375 = vmul.f32 %v371, %v373
    %s376 = sld [smem:[#allocation4 + $0x7]]
    %v377 = vstv %s376
    %v378 = vadd.f32 %v374, %v377
    %v379 = vadd.f32 %v375, %v377
    %382 = vrot.lane.b32.xlu0 %v378, 98
    %v383 = vpop.permute.xlu0 %382
    %384 = vrot.lane.b32.xlu0 %v379, 98
    %v385 = vpop.permute.xlu0 %384
    %388 = vst.msk [vmem:[%s232] sm:$0xff] %vm211, %v383
    %389 = vst.msk [vmem:[%s232 + $0x8] sm:$0xff] %vm211, %v385
    // Predicated region
    $region22: #{sepconv_forward.5} parent=1 // pred_check
      _
    $region23: #{sepconv_forward.5} parent=1 // pred_check_branch
      %391 = sbr.rel (0) target = $region25
    $region24: #{sepconv_forward.5} parent=1 // pred_region
      _
    $region25: #{sepconv_forward.5} parent=1 // pred_fallthru
      _
    // Predicated region
    $region26: #{sepconv_forward.5} parent=1 // pred_check
      _
    $region27: #{sepconv_forward.5} parent=1 // pred_check_branch
      %393 = sbr.rel (0) target = $region29
    $region28: #{sepconv_forward.5} parent=1 // pred_region
      _
    $region29: #{sepconv_forward.5} parent=1 // pred_fallthru
      _
    %394 = vsyncpa [#allocation3], 1
    %395 = vsyncpa [#allocation5], 1

// kernel: sepconv_forward.3
$region0: #{sepconv_forward.3}
  #allocation0 [shape = 'u32[]', space=smem, size = 0x4, offset = 0x4, fixed_abs, tag = 'smem constant byte address 0x4 - core index']
  #allocation1 [shape = 'u32[144,128]{1,0:T(1,128)}', space=vmem, size = 0x12000, scoped, tag = 'internal scratch']
  #allocation2 [shape = 'f32[18,384]{1,0:T(8,128)}', space=vmem, size = 0x9000, scoped, tag = 'scratch operand']
  %s0 = inlined_call_operand.vmem [shape: f32[2,4,16,16], index: 0, kind: input, shape index: {}]
  %s1 = inlined_call_operand.vmem [shape: f32[9,256], index: 1, kind: input, shape index: {}]
  %s2 = inlined_call_operand.vmem [shape: f32[16], index: 2, kind: input, shape index: {}]
  %s3 = inlined_call_operand.vmem [shape: f32[1,16,256], index: 3, kind: output, shape index: {0}]
  %s4 = inlined_call_operand.vmem [shape: f32[1,8,128], index: 4, kind: output, shape index: {1}]
  %5 = xla_tuple %s3, %s4
  %s6 = sld [smem:[#allocation0]]
  $region34: #{sepconv_forward.3} parent=0
    _
  %s8 = ssub.s32 1, %s6
  %s9 = scalar_select 0, %s8, %s6
  $region1: #{sepconv_forward.3} parent=0
    #allocation3 [shape = 'u8[512]{0}', space=smem, size = 0x200, scoped, tag = 'input window, operand 2, single buffered']
    #allocation4 [shape = 's32[1]{0}', space=sflag, size = 0x4, scoped, tag = 'scoped memory for sepconv_forward.3']
    %10 = vsyncpa [#allocation4], 0
    // Predicated region
    $region2: #{sepconv_forward.3} parent=1 // pred_check
      _
    $region3: #{sepconv_forward.3} parent=1 // pred_check_branch
      %12 = sbr.rel (0) target = $region5
    $region4: #{sepconv_forward.3} parent=1 // pred_region
      _
    $region5: #{sepconv_forward.3} parent=1 // pred_fallthru
      _
    // Predicated region
    $region6: #{sepconv_forward.3} parent=1 // pred_check
      _
    $region7: #{sepconv_forward.3} parent=1 // pred_check_branch
      %14 = sbr.rel (0) target = $region9
    $region8: #{sepconv_forward.3} parent=1 // pred_region
      _
    $region9: #{sepconv_forward.3} parent=1 // pred_fallthru
      _
    // Predicated region
    $region10: #{sepconv_forward.3} parent=1 // pred_check
      _
    $region11: #{sepconv_forward.3} parent=1 // pred_check_branch
      %16 = sbr.rel (0) target = $region13
    $region12: #{sepconv_forward.3} parent=1 // pred_region
      %s18 = ssub.s32 16, 16
      %19 = vsyncadd [#allocation4], %s18
      %s21 = sshll.u32 %s2, 4
      %s22 = int_to_ptr.vmem [resolvable:$true] %s21
      %24 = dma.vmem_to_smem %s22, 16, [#allocation3], [#allocation4]
    $region13: #{sepconv_forward.3} parent=1 // pred_fallthru
      _
    // Predicated region
    $region14: #{sepconv_forward.3} parent=1 // pred_check
      _
    $region15: #{sepconv_forward.3} parent=1 // pred_check_branch
      %26 = sbr.rel (0) target = $region17
    $region16: #{sepconv_forward.3} parent=1 // pred_region
      %27 = dma.done [#allocation4], 16
    $region17: #{sepconv_forward.3} parent=1 // pred_fallthru
      _
    %28 = sfence
    %29 = vst [vmem:[#allocation2] sm:$0xff] 0.0
    %30 = vst [vmem:[#allocation2 + $0x8] sm:$0xff] 0.0
    %31 = vst [vmem:[#allocation2 + $0x10] sm:$0xff] 0.0
    %32 = vst [vmem:[#allocation2 + $0x18] sm:$0xff] 0.0
    %33 = vst [vmem:[#allocation2 + $0x20] sm:$0xff] 0.0
    %34 = vst [vmem:[#allocation2 + $0x28] sm:$0xff] 0.0
    %35 = vst [vmem:[#allocation2 + $0x30] sm:$0x3] 0.0
    %36 = vst [vmem:[#allocation2 + $0x38] sm:$0x3] 0.0
    %37 = vst [vmem:[#allocation2 + $0x40] sm:$0x3] 0.0
    %v38 = vld [vmem:[%s0] sm:$0xff]
    %v39 = vld [vmem:[%s0 + $0x8] sm:$0xff]
    %v40 = vmax.f32 %v38, 0.0
    %v41 = vmax.f32 %v39, 0.0
    %vm44 = vcmask 1040384
    %v45 = vrot.slane %v40, 7
    %v46 = vrot.slane %v41, 7
    %v47 = vsel %vm44, %v45, %v46
    %48 = vrot.lane.b32.xlu0 %v45, 1
    %v49 = vpop.permute.xlu0 %48
    %50 = vrot.lane.b32.xlu0 %v47, 1
    %v51 = vpop.permute.xlu0 %50
    %52 = vrot.lane.b32.xlu0 %v46, 1
    %v53 = vpop.permute.xlu0 %52
    %vm57 = vcmask 138249
    %58 = vst.msk [vmem:[#allocation2] sm:$0xfe] %vm57, %v49
    %vm59 = vcmask 138248
    %60 = vst.msk [vmem:[#allocation2 + $0x18] sm:$0xff] %vm59, %v51
    %vm61 = vcmask 131080
    %62 = vst.msk [vmem:[#allocation2 + $0x30] sm:$0x1] %vm61, %v53
    %s63 = scalar_lea.vmem %s0, 16
    %v64 = vld [vmem:[%s63] sm:$0xff]
    %v65 = vld [vmem:[%s63 + $0x8] sm:$0xff]
    %v66 = vmax.f32 %v64, 0.0
    %v67 = vmax.f32 %v65, 0.0
    %v70 = vrot.slane %v66, 7
    %v71 = vrot.slane %v67, 7
    %v72 = vsel %vm44, %v70, %v71
    %73 = vrot.lane.b32.xlu0 %v70, 37
    %v74 = vpop.permute.xlu0 %73
    %75 = vrot.lane.b32.xlu0 %v72, 37
    %v76 = vpop.permute.xlu0 %75
    %77 = vrot.lane.b32.xlu0 %v71, 37
    %v78 = vpop.permute.xlu0 %77
    %vm82 = vcmask 433449
    %83 = vst.msk [vmem:[#allocation2] sm:$0xfe] %vm82, %v74
    %vm84 = vcmask 433448
    %85 = vst.msk [vmem:[#allocation2 + $0x18] sm:$0xff] %vm84, %v76
    %vm86 = vcmask 426280
    %87 = vst.msk [vmem:[#allocation2 + $0x30] sm:$0x1] %vm86, %v78
    %s88 = scalar_lea.vmem %s0, 32
    %v89 = vld [vmem:[%s88] sm:$0xff]
    %v90 = vld [vmem:[%s88 + $0x8] sm:$0xff]
    %v91 = vmax.f32 %v89, 0.0
    %v92 = vmax.f32 %v90, 0.0
    %v95 = vrot.slane %v91, 7
    %v96 = vrot.slane %v92, 7
    %v97 = vsel %vm44, %v95, %v96
    %98 = vrot.lane.b32.xlu0 %v95, 73
    %v99 = vpop.permute.xlu0 %98
    %100 = vrot.lane.b32.xlu0 %v97, 73
    %v101 = vpop.permute.xlu0 %100
    %102 = vrot.lane.b32.xlu0 %v96, 73
    %v103 = vpop.permute.xlu0 %102
    %vm107 = vcmask 728649
    %108 = vst.msk [vmem:[#allocation2] sm:$0xfe] %vm107, %v99
    %vm109 = vcmask 728648
    %110 = vst.msk [vmem:[#allocation2 + $0x18] sm:$0xff] %vm109, %v101
    %vm111 = vcmask 721480
    %112 = vst.msk [vmem:[#allocation2 + $0x30] sm:$0x1] %vm111, %v103
    %s113 = scalar_lea.vmem %s0, 48
    %v114 = vld [vmem:[%s113] sm:$0xff]
    %v115 = vld [vmem:[%s113 + $0x8] sm:$0xff]
    %v116 = vmax.f32 %v114, 0.0
    %v117 = vmax.f32 %v115, 0.0
    %v120 = vrot.slane %v116, 7
    %v121 = vrot.slane %v117, 7
    %v122 = vsel %vm44, %v120, %v121
    %123 = vrot.lane.b32.xlu0 %v120, 109
    %v124 = vpop.permute.xlu0 %123
    %125 = vrot.lane.b32.xlu0 %v122, 109
    %v126 = vpop.permute.xlu0 %125
    %127 = vrot.lane.b32.xlu0 %v121, 109
    %v128 = vpop.permute.xlu0 %127
    %vm132 = vcmask 1023849
    %133 = vst.msk [vmem:[#allocation2] sm:$0xfe] %vm132, %v124
    %vm134 = vcmask 1023848
    %135 = vst.msk [vmem:[#allocation2 + $0x18] sm:$0xff] %vm134, %v126
    %vm136 = vcmask 1016680
    %137 = vst.msk [vmem:[#allocation2 + $0x30] sm:$0x1] %vm136, %v128
    %s138 = scalar_lea.vmem %s0, 64
    %v139 = vld [vmem:[%s138] sm:$0xff]
    %v140 = vld [vmem:[%s138 + $0x8] sm:$0xff]
    %v141 = vmax.f32 %v139, 0.0
    %v142 = vmax.f32 %v140, 0.0
    %v145 = vrot.slane %v141, 7
    %v146 = vrot.slane %v142, 7
    %v147 = vsel %vm44, %v145, %v146
    %148 = vrot.lane.b32.xlu0 %v145, 19
    %v149 = vpop.permute.xlu0 %148
    %150 = vrot.lane.b32.xlu0 %v147, 19
    %v151 = vpop.permute.xlu0 %150
    %152 = vrot.lane.b32.xlu0 %v146, 19
    %v153 = vpop.permute.xlu0 %152
    %vm157 = vcmask 285849
    %158 = vst.msk [vmem:[#allocation2] sm:$0xfe] %vm157, %v149
    %vm159 = vcmask 285848
    %160 = vst.msk [vmem:[#allocation2 + $0x18] sm:$0xff] %vm159, %v151
    %vm161 = vcmask 278680
    %162 = vst.msk [vmem:[#allocation2 + $0x30] sm:$0x1] %vm161, %v153
    %s163 = scalar_lea.vmem %s0, 80
    %v164 = vld [vmem:[%s163] sm:$0xff]
    %v165 = vld [vmem:[%s163 + $0x8] sm:$0xff]
    %v166 = vmax.f32 %v164, 0.0
    %v167 = vmax.f32 %v165, 0.0
    %v170 = vrot.slane %v166, 7
    %v171 = vrot.slane %v167, 7
    %v172 = vsel %vm44, %v170, %v171
    %173 = vrot.lane.b32.xlu0 %v170, 55
    %v174 = vpop.permute.xlu0 %173
    %175 = vrot.lane.b32.xlu0 %v172, 55
    %v176 = vpop.permute.xlu0 %175
    %177 = vrot.lane.b32.xlu0 %v171, 55
    %v178 = vpop.permute.xlu0 %177
    %vm182 = vcmask 581049
    %183 = vst.msk [vmem:[#allocation2] sm:$0xfe] %vm182, %v174
    %vm184 = vcmask 581048
    %185 = vst.msk [vmem:[#allocation2 + $0x18] sm:$0xff] %vm184, %v176
    %vm186 = vcmask 573880
    %187 = vst.msk [vmem:[#allocation2 + $0x30] sm:$0x1] %vm186, %v178
    %s188 = scalar_lea.vmem %s0, 96
    %v189 = vld [vmem:[%s188] sm:$0xff]
    %v190 = vld [vmem:[%s188 + $0x8] sm:$0xff]
    %v191 = vmax.f32 %v189, 0.0
    %v192 = vmax.f32 %v190, 0.0
    %v195 = vrot.slane %v191, 7
    %v196 = vrot.slane %v192, 7
    %v197 = vsel %vm44, %v195, %v196
    %198 = vrot.lane.b32.xlu0 %v195, 91
    %v199 = vpop.permute.xlu0 %198
    %200 = vrot.lane.b32.xlu0 %v197, 91
    %v201 = vpop.permute.xlu0 %200
    %202 = vrot.lane.b32.xlu0 %v196, 91
    %v203 = vpop.permute.xlu0 %202
    %vm207 = vcmask 876249
    %208 = vst.msk [vmem:[#allocation2] sm:$0xfe] %vm207, %v199
    %vm209 = vcmask 876248
    %210 = vst.msk [vmem:[#allocation2 + $0x18] sm:$0xff] %vm209, %v201
    %vm211 = vcmask 869080
    %212 = vst.msk [vmem:[#allocation2 + $0x30] sm:$0x1] %vm211, %v203
    %s213 = scalar_lea.vmem %s0, 112
    %v214 = vld [vmem:[%s213] sm:$0xff]
    %v215 = vld [vmem:[%s213 + $0x8] sm:$0xff]
    %v216 = vmax.f32 %v214, 0.0
    %v217 = vmax.f32 %v215, 0.0
    %v220 = vrot.slane %v216, 7
    %v221 = vrot.slane %v217, 7
    %v222 = vsel %vm44, %v220, %v221
    %223 = vrot.lane.b32.xlu0 %v220, 127
    %v224 = vpop.permute.xlu0 %223
    %225 = vrot.lane.b32.xlu0 %v222, 127
    %v226 = vpop.permute.xlu0 %225
    %227 = vrot.lane.b32.xlu0 %v221, 127
    %v228 = vpop.permute.xlu0 %227
    %vm232 = vcmask 1048569
    %233 = vst.msk [vmem:[#allocation2] sm:$0xfe] %vm232, %v224
    %vm234 = vcmask 121857
    %235 = vst.msk [vmem:[#allocation2 + $0x8] sm:$0xfe] %vm234, %v224
    %vm236 = vcmask 1048568
    %237 = vst.msk [vmem:[#allocation2 + $0x18] sm:$0xff] %vm236, %v226
    %vm238 = vcmask 121856
    %239 = vst.msk [vmem:[#allocation2 + $0x20] sm:$0xff] %vm238, %v226
    %vm240 = vcmask 1041400
    %241 = vst.msk [vmem:[#allocation2 + $0x30] sm:$0x1] %vm240, %v228
    %vm242 = vcmask 114688
    %243 = vst.msk [vmem:[#allocation2 + $0x38] sm:$0x1] %vm242, %v228
    %v244 = vld [vmem:[#allocation2] sm:$0xff]
    %v245 = vld [vmem:[#allocation2 + $0x8] sm:$0xff]
    %v246 = vld [vmem:[#allocation2 + $0x18] sm:$0xff]
    %v247 = vld [vmem:[#allocation2 + $0x20] sm:$0xff]
    %v248 = vld [vmem:[%s1] ss:$8 sm:$0x3]
    %v250 = vlaneseq
    %v251 = vshrl.u32 %v250, 7
    %v252 = vsub.s32 0, %v251
    %v253 = vrot.slane %v248, %v252
    %v254 = vlaneseq
    %v255 = vshrl.u32 %v254, 7
    %v256 = vsub.s32 1, %v255
    %v257 = vrot.slane %v248, %v256
    %v260 = vmul.f32 %v244, %v253
    %v261 = vmul.f32 %v245, %v257
    %v262 = vmul.f32 %v246, %v253
    %v263 = vmul.f32 %v247, %v257
    %v264 = vadd.f32 %v260, 0.0
    %v265 = vadd.f32 %v261, 0.0
    %v266 = vadd.f32 %v262, 0.0
    %v267 = vadd.f32 %v263, 0.0
    %v268 = vld [vmem:[#allocation2 + $0x10] sm:$0xff]
    %v269 = vld [vmem:[#allocation2 + $0x28] sm:$0xff]
    %s270 = scalar_lea.vmem %s1, 1
    %v271 = vld [vmem:[%s270] ss:$8 sm:$0x3]
    %v273 = vlaneseq
    %v274 = vshrl.u32 %v273, 7
    %v275 = vsub.s32 0, %v274
    %v276 = vrot.slane %v271, %v275
    %v277 = vlaneseq
    %v278 = vshrl.u32 %v277, 7
    %v279 = vsub.s32 1, %v278
    %v280 = vrot.slane %v271, %v279
    %281 = vrot.lane.b32.xlu0 %v276, 1
    %v282 = vpop.permute.xlu0 %281
    %283 = vrot.lane.b32.xlu0 %v280, 1
    %v284 = vpop.permute.xlu0 %283
    %vm285 = vcmask 7168
    %v286 = vsel %vm285, %v282, %v284
    %v290 = vmul.f32 %v244, %v282
    %v291 = vmul.f32 %v245, %v286
    %v292 = vmul.f32 %v268, %v284
    %v293 = vmul.f32 %v246, %v282
    %v294 = vmul.f32 %v247, %v286
    %v295 = vmul.f32 %v269, %v284
    %302 = vrot.lane.b32.xlu0 %v290, 127
    %v303 = vpop.permute.xlu0 %302
    %304 = vrot.lane.b32.xlu0 %v291, 127
    %v305 = vpop.permute.xlu0 %304
    %306 = vrot.lane.b32.xlu0 %v292, 127
    %v307 = vpop.permute.xlu0 %306
    %308 = vrot.lane.b32.xlu0 %v293, 127
    %v309 = vpop.permute.xlu0 %308
    %310 = vrot.lane.b32.xlu0 %v294, 127
    %v311 = vpop.permute.xlu0 %310
    %312 = vrot.lane.b32.xlu0 %v295, 127
    %v313 = vpop.permute.xlu0 %312
    %vm314 = vcmask 1039360
    %v315 = vsel %vm314, %v303, %v305
    %v316 = vsel %vm314, %v305, %v307
    %v317 = vsel %vm314, %v309, %v311
    %v318 = vsel %vm314, %v311, %v313
    %v323 = vadd.f32 %v264, %v315
    %v324 = vadd.f32 %v265, %v316
    %v325 = vadd.f32 %v266, %v317
    %v326 = vadd.f32 %v267, %v318
    %s327 = scalar_lea.vmem %s1, 2
    %v328 = vld [vmem:[%s327] ss:$8 sm:$0x3]
    %v330 = vlaneseq
    %v331 = vshrl.u32 %v330, 7
    %v332 = vsub.s32 0, %v331
    %v333 = vrot.slane %v328, %v332
    %v334 = vlaneseq
    %v335 = vshrl.u32 %v334, 7
    %v336 = vsub.s32 1, %v335
    %v337 = vrot.slane %v328, %v336
    %338 = vrot.lane.b32.xlu0 %v333, 2
    %v339 = vpop.permute.xlu0 %338
    %340 = vrot.lane.b32.xlu0 %v337, 2
    %v341 = vpop.permute.xlu0 %340
    %vm342 = vcmask 15360
    %v343 = vsel %vm342, %v339, %v341
    %v347 = vmul.f32 %v244, %v339
    %v348 = vmul.f32 %v245, %v343
    %v349 = vmul.f32 %v268, %v341
    %v350 = vmul.f32 %v246, %v339
    %v351 = vmul.f32 %v247, %v343
    %v352 = vmul.f32 %v269, %v341
    %359 = vrot.lane.b32.xlu0 %v347, 126
    %v360 = vpop.permute.xlu0 %359
    %361 = vrot.lane.b32.xlu0 %v348, 126
    %v362 = vpop.permute.xlu0 %361
    %363 = vrot.lane.b32.xlu0 %v349, 126
    %v364 = vpop.permute.xlu0 %363
    %365 = vrot.lane.b32.xlu0 %v350, 126
    %v366 = vpop.permute.xlu0 %365
    %367 = vrot.lane.b32.xlu0 %v351, 126
    %v368 = vpop.permute.xlu0 %367
    %369 = vrot.lane.b32.xlu0 %v352, 126
    %v370 = vpop.permute.xlu0 %369
    %vm371 = vcmask 1031168
    %v372 = vsel %vm371, %v360, %v362
    %v373 = vsel %vm371, %v362, %v364
    %v374 = vsel %vm371, %v366, %v368
    %v375 = vsel %vm371, %v368, %v370
    %v380 = vadd.f32 %v323, %v372
    %v381 = vadd.f32 %v324, %v373
    %v382 = vadd.f32 %v325, %v374
    %v383 = vadd.f32 %v326, %v375
    %v384 = vld [vmem:[#allocation2] sm:$0xfe]
    %v385 = vld [vmem:[#allocation2 + $0x8] sm:$0xfe]
    %v386 = vld [vmem:[#allocation2 + $0x30] sm:$0x1]
    %v387 = vld [vmem:[#allocation2 + $0x38] sm:$0x1]
    %s388 = scalar_lea.vmem %s1, 3
    %v389 = vld [vmem:[%s388] ss:$8 sm:$0x3]
    %v391 = vlaneseq
    %v392 = vshrl.u32 %v391, 7
    %v393 = vsub.s32 0, %v392
    %v394 = vrot.slane %v389, %v393
    %v395 = vlaneseq
    %v396 = vshrl.u32 %v395, 7
    %v397 = vsub.s32 1, %v396
    %v398 = vrot.slane %v389, %v397
    %v401 = vmul.f32 %v384, %v394
    %v402 = vmul.f32 %v385, %v398
    %v403 = vmul.f32 %v246, %v394
    %v404 = vmul.f32 %v247, %v398
    %v405 = vmul.f32 %v386, %v394
    %v406 = vmul.f32 %v387, %v398
    %vm413 = vcmask 1046528
    %v414 = vrot.slane %v401, 1
    %v415 = vrot.slane %v403, 1
    %v416 = vsel %vm413, %v414, %v415
    %v417 = vrot.slane %v402, 1
    %v418 = vrot.slane %v404, 1
    %v419 = vsel %vm413, %v417, %v418
    %v420 = vrot.slane %v405, 1
    %v421 = vsel %vm413, %v415, %v420
    %v422 = vrot.slane %v406, 1
    %v423 = vsel %vm413, %v418, %v422
    %v428 = vadd.f32 %v380, %v416
    %v429 = vadd.f32 %v381, %v419
    %v430 = vadd.f32 %v382, %v421
    %v431 = vadd.f32 %v383, %v423
    %v432 = vld [vmem:[#allocation2 + $0x10] sm:$0xfe]
    %v433 = vld [vmem:[#allocation2 + $0x40] sm:$0x1]
    %s434 = scalar_lea.vmem %s1, 4
    %v435 = vld [vmem:[%s434] ss:$8 sm:$0x3]
    %v437 = vlaneseq
    %v438 = vshrl.u32 %v437, 7
    %v439 = vsub.s32 0, %v438
    %v440 = vrot.slane %v435, %v439
    %v441 = vlaneseq
    %v442 = vshrl.u32 %v441, 7
    %v443 = vsub.s32 1, %v442
    %v444 = vrot.slane %v435, %v443
    %445 = vrot.lane.b32.xlu0 %v440, 1
    %v446 = vpop.permute.xlu0 %445
    %447 = vrot.lane.b32.xlu0 %v444, 1
    %v448 = vpop.permute.xlu0 %447
    %v449 = vsel %vm285, %v446, %v448
    %v453 = vmul.f32 %v384, %v446
    %v454 = vmul.f32 %v385, %v449
    %v455 = vmul.f32 %v432, %v448
    %v456 = vmul.f32 %v246, %v446
    %v457 = vmul.f32 %v247, %v449
    %v458 = vmul.f32 %v269, %v448
    %v459 = vmul.f32 %v386, %v446
    %v460 = vmul.f32 %v387, %v449
    %v461 = vmul.f32 %v433, %v448
    %v471 = vrot.slane %v453, 1
    %v472 = vrot.slane %v456, 1
    %v473 = vsel %vm413, %v471, %v472
    %v474 = vrot.slane %v454, 1
    %v475 = vrot.slane %v457, 1
    %v476 = vsel %vm413, %v474, %v475
    %v477 = vrot.slane %v455, 1
    %v478 = vrot.slane %v458, 1
    %v479 = vsel %vm413, %v477, %v478
    %v480 = vrot.slane %v459, 1
    %v481 = vsel %vm413, %v472, %v480
    %v482 = vrot.slane %v460, 1
    %v483 = vsel %vm413, %v475, %v482
    %v484 = vrot.slane %v461, 1
    %v485 = vsel %vm413, %v478, %v484
    %486 = vrot.lane.b32.xlu0 %v473, 127
    %v487 = vpop.permute.xlu0 %486
    %488 = vrot.lane.b32.xlu0 %v476, 127
    %v489 = vpop.permute.xlu0 %488
    %490 = vrot.lane.b32.xlu0 %v479, 127
    %v491 = vpop.permute.xlu0 %490
    %492 = vrot.lane.b32.xlu0 %v481, 127
    %v493 = vpop.permute.xlu0 %492
    %494 = vrot.lane.b32.xlu0 %v483, 127
    %v495 = vpop.permute.xlu0 %494
    %496 = vrot.lane.b32.xlu0 %v485, 127
    %v497 = vpop.permute.xlu0 %496
    %v498 = vsel %vm314, %v487, %v489
    %v499 = vsel %vm314, %v489, %v491
    %v500 = vsel %vm314, %v493, %v495
    %v501 = vsel %vm314, %v495, %v497
    %v506 = vadd.f32 %v428, %v498
    %v507 = vadd.f32 %v429, %v499
    %v508 = vadd.f32 %v430, %v500
    %v509 = vadd.f32 %v431, %v501
    %s510 = scalar_lea.vmem %s1, 5
    %v511 = vld [vmem:[%s510] ss:$8 sm:$0x3]
    %v513 = vlaneseq
    %v514 = vshrl.u32 %v513, 7
    %v515 = vsub.s32 0, %v514
    %v516 = vrot.slane %v511, %v515
    %v517 = vlaneseq
    %v518 = vshrl.u32 %v517, 7
    %v519 = vsub.s32 1, %v518
    %v520 = vrot.slane %v511, %v519
    %521 = vrot.lane.b32.xlu0 %v516, 2
    %v522 = vpop.permute.xlu0 %521
    %523 = vrot.lane.b32.xlu0 %v520, 2
    %v524 = vpop.permute.xlu0 %523
    %v525 = vsel %vm342, %v522, %v524
    %v529 = vmul.f32 %v384, %v522
    %v530 = vmul.f32 %v385, %v525
    %v531 = vmul.f32 %v432, %v524
    %v532 = vmul.f32 %v246, %v522
    %v533 = vmul.f32 %v247, %v525
    %v534 = vmul.f32 %v269, %v524
    %v535 = vmul.f32 %v386, %v522
    %v536 = vmul.f32 %v387, %v525
    %v537 = vmul.f32 %v433, %v524
    %v547 = vrot.slane %v529, 1
    %v548 = vrot.slane %v532, 1
    %v549 = vsel %vm413, %v547, %v548
    %v550 = vrot.slane %v530, 1
    %v551 = vrot.slane %v533, 1
    %v552 = vsel %vm413, %v550, %v551
    %v553 = vrot.slane %v531, 1
    %v554 = vrot.slane %v534, 1
    %v555 = vsel %vm413, %v553, %v554
    %v556 = vrot.slane %v535, 1
    %v557 = vsel %vm413, %v548, %v556
    %v558 = vrot.slane %v536, 1
    %v559 = vsel %vm413, %v551, %v558
    %v560 = vrot.slane %v537, 1
    %v561 = vsel %vm413, %v554, %v560
    %562 = vrot.lane.b32.xlu0 %v549, 126
    %v563 = vpop.permute.xlu0 %562
    %564 = vrot.lane.b32.xlu0 %v552, 126
    %v565 = vpop.permute.xlu0 %564
    %566 = vrot.lane.b32.xlu0 %v555, 126
    %v567 = vpop.permute.xlu0 %566
    %568 = vrot.lane.b32.xlu0 %v557, 126
    %v569 = vpop.permute.xlu0 %568
    %570 = vrot.lane.b32.xlu0 %v559, 126
    %v571 = vpop.permute.xlu0 %570
    %572 = vrot.lane.b32.xlu0 %v561, 126
    %v573 = vpop.permute.xlu0 %572
    %v574 = vsel %vm371, %v563, %v565
    %v575 = vsel %vm371, %v565, %v567
    %v576 = vsel %vm371, %v569, %v571
    %v577 = vsel %vm371, %v571, %v573
    %v582 = vadd.f32 %v506, %v574
    %v583 = vadd.f32 %v507, %v575
    %v584 = vadd.f32 %v508, %v576
    %v585 = vadd.f32 %v509, %v577
    %v586 = vld [vmem:[#allocation2] sm:$0xfc]
    %v587 = vld [vmem:[#allocation2 + $0x8] sm:$0xfc]
    %v588 = vld [vmem:[#allocation2 + $0x30] sm:$0x3]
    %v589 = vld [vmem:[#allocation2 + $0x38] sm:$0x3]
    %s590 = scalar_lea.vmem %s1, 6
    %v591 = vld [vmem:[%s590] ss:$8 sm:$0x3]
    %v593 = vlaneseq
    %v594 = vshrl.u32 %v593, 7
    %v595 = vsub.s32 0, %v594
    %v596 = vrot.slane %v591, %v595
    %v597 = vlaneseq
    %v598 = vshrl.u32 %v597, 7
    %v599 = vsub.s32 1, %v598
    %v600 = vrot.slane %v591, %v599
    %v603 = vmul.f32 %v586, %v596
    %v604 = vmul.f32 %v587, %v600
    %v605 = vmul.f32 %v246, %v596
    %v606 = vmul.f32 %v247, %v600
    %v607 = vmul.f32 %v588, %v596
    %v608 = vmul.f32 %v589, %v600
    %vm615 = vcmask 1045504
    %v616 = vrot.slane %v603, 2
    %v617 = vrot.slane %v605, 2
    %v618 = vsel %vm615, %v616, %v617
    %v619 = vrot.slane %v604, 2
    %v620 = vrot.slane %v606, 2
    %v621 = vsel %vm615, %v619, %v620
    %v622 = vrot.slane %v607, 2
    %v623 = vsel %vm615, %v617, %v622
    %v624 = vrot.slane %v608, 2
    %v625 = vsel %vm615, %v620, %v624
    %v630 = vadd.f32 %v582, %v618
    %v631 = vadd.f32 %v583, %v621
    %v632 = vadd.f32 %v584, %v623
    %v633 = vadd.f32 %v585, %v625
    %v634 = vld [vmem:[#allocation2 + $0x10] sm:$0xfc]
    %v635 = vld [vmem:[#allocation2 + $0x40] sm:$0x3]
    %s636 = scalar_lea.vmem %s1, 7
    %v637 = vld [vmem:[%s636] ss:$8 sm:$0x3]
    %v639 = vlaneseq
    %v640 = vshrl.u32 %v639, 7
    %v641 = vsub.s32 0, %v640
    %v642 = vrot.slane %v637, %v641
    %v643 = vlaneseq
    %v644 = vshrl.u32 %v643, 7
    %v645 = vsub.s32 1, %v644
    %v646 = vrot.slane %v637, %v645
    %647 = vrot.lane.b32.xlu0 %v642, 1
    %v648 = vpop.permute.xlu0 %647
    %649 = vrot.lane.b32.xlu0 %v646, 1
    %v650 = vpop.permute.xlu0 %649
    %v651 = vsel %vm285, %v648, %v650
    %v655 = vmul.f32 %v586, %v648
    %v656 = vmul.f32 %v587, %v651
    %v657 = vmul.f32 %v634, %v650
    %v658 = vmul.f32 %v246, %v648
    %v659 = vmul.f32 %v247, %v651
    %v660 = vmul.f32 %v269, %v650
    %v661 = vmul.f32 %v588, %v648
    %v662 = vmul.f32 %v589, %v651
    %v663 = vmul.f32 %v635, %v650
    %v673 = vrot.slane %v655, 2
    %v674 = vrot.slane %v658, 2
    %v675 = vsel %vm615, %v673, %v674
    %v676 = vrot.slane %v656, 2
    %v677 = vrot.slane %v659, 2
    %v678 = vsel %vm615, %v676, %v677
    %v679 = vrot.slane %v657, 2
    %v680 = vrot.slane %v660, 2
    %v681 = vsel %vm615, %v679, %v680
    %v682 = vrot.slane %v661, 2
    %v683 = vsel %vm615, %v674, %v682
    %v684 = vrot.slane %v662, 2
    %v685 = vsel %vm615, %v677, %v684
    %v686 = vrot.slane %v663, 2
    %v687 = vsel %vm615, %v680, %v686
    %688 = vrot.lane.b32.xlu0 %v675, 127
    %v689 = vpop.permute.xlu0 %688
    %690 = vrot.lane.b32.xlu0 %v678, 127
    %v691 = vpop.permute.xlu0 %690
    %692 = vrot.lane.b32.xlu0 %v681, 127
    %v693 = vpop.permute.xlu0 %692
    %694 = vrot.lane.b32.xlu0 %v683, 127
    %v695 = vpop.permute.xlu0 %694
    %696 = vrot.lane.b32.xlu0 %v685, 127
    %v697 = vpop.permute.xlu0 %696
    %698 = vrot.lane.b32.xlu0 %v687, 127
    %v699 = vpop.permute.xlu0 %698
    %v700 = vsel %vm314, %v689, %v691
    %v701 = vsel %vm314, %v691, %v693
    %v702 = vsel %vm314, %v695, %v697
    %v703 = vsel %vm314, %v697, %v699
    %v708 = vadd.f32 %v630, %v700
    %v709 = vadd.f32 %v631, %v701
    %v710 = vadd.f32 %v632, %v702
    %v711 = vadd.f32 %v633, %v703
    %s712 = scalar_lea.vmem %s1, 16
    %v713 = vld [vmem:[%s712] ss:$8 sm:$0x3]
    %v715 = vlaneseq
    %v716 = vshrl.u32 %v715, 7
    %v717 = vsub.s32 0, %v716
    %v718 = vrot.slane %v713, %v717
    %v719 = vlaneseq
    %v720 = vshrl.u32 %v719, 7
    %v721 = vsub.s32 1, %v720
    %v722 = vrot.slane %v713, %v721
    %723 = vrot.lane.b32.xlu0 %v718, 2
    %v724 = vpop.permute.xlu0 %723
    %725 = vrot.lane.b32.xlu0 %v722, 2
    %v726 = vpop.permute.xlu0 %725
    %v727 = vsel %vm342, %v724, %v726
    %v731 = vmul.f32 %v586, %v724
    %v732 = vmul.f32 %v587, %v727
    %v733 = vmul.f32 %v634, %v726
    %v734 = vmul.f32 %v246, %v724
    %v735 = vmul.f32 %v247, %v727
    %v736 = vmul.f32 %v269, %v726
    %v737 = vmul.f32 %v588, %v724
    %v738 = vmul.f32 %v589, %v727
    %v739 = vmul.f32 %v635, %v726
    %v749 = vrot.slane %v731, 2
    %v750 = vrot.slane %v734, 2
    %v751 = vsel %vm615, %v749, %v750
    %v752 = vrot.slane %v732, 2
    %v753 = vrot.slane %v735, 2
    %v754 = vsel %vm615, %v752, %v753
    %v755 = vrot.slane %v733, 2
    %v756 = vrot.slane %v736, 2
    %v757 = vsel %vm615, %v755, %v756
    %v758 = vrot.slane %v737, 2
    %v759 = vsel %vm615, %v750, %v758
    %v760 = vrot.slane %v738, 2
    %v761 = vsel %vm615, %v753, %v760
    %v762 = vrot.slane %v739, 2
    %v763 = vsel %vm615, %v756, %v762
    %764 = vrot.lane.b32.xlu0 %v751, 126
    %v765 = vpop.permute.xlu0 %764
    %766 = vrot.lane.b32.xlu0 %v754, 126
    %v767 = vpop.permute.xlu0 %766
    %768 = vrot.lane.b32.xlu0 %v757, 126
    %v769 = vpop.permute.xlu0 %768
    %770 = vrot.lane.b32.xlu0 %v759, 126
    %v771 = vpop.permute.xlu0 %770
    %772 = vrot.lane.b32.xlu0 %v761, 126
    %v773 = vpop.permute.xlu0 %772
    %774 = vrot.lane.b32.xlu0 %v763, 126
    %v775 = vpop.permute.xlu0 %774
    %v776 = vsel %vm371, %v765, %v767
    %v777 = vsel %vm371, %v767, %v769
    %v778 = vsel %vm371, %v771, %v773
    %v779 = vsel %vm371, %v773, %v775
    %v784 = vadd.f32 %v708, %v776
    %v785 = vadd.f32 %v709, %v777
    %v786 = vadd.f32 %v710, %v778
    %v787 = vadd.f32 %v711, %v779
    %s788 = sld [smem:[#allocation3]]
    %v789 = vstv %s788
    %v790 = vmul.f32 %v784, %v789
    %v791 = vmul.f32 %v786, %v789
    %s792 = sld [smem:[#allocation3 + $0x4]]
    %v793 = vstv %s792
    %v794 = vmul.f32 %v784, %v793
    %v795 = vmul.f32 %v786, %v793
    %798 = vrot.lane.b32.xlu0 %v794, 92
    %v799 = vpop.permute.xlu0 %798
    %800 = vrot.lane.b32.xlu0 %v795, 92
    %v801 = vpop.permute.xlu0 %800
    %v804 = vadd.f32 %v790, %v799
    %v805 = vadd.f32 %v791, %v801
    %s806 = sld [smem:[#allocation3 + $0x8]]
    %v807 = vstv %s806
    %v808 = vmul.f32 %v784, %v807
    %v809 = vmul.f32 %v786, %v807
    %812 = vrot.lane.b32.xlu0 %v808, 56
    %v813 = vpop.permute.xlu0 %812
    %814 = vrot.lane.b32.xlu0 %v809, 56
    %v815 = vpop.permute.xlu0 %814
    %v818 = vadd.f32 %v804, %v813
    %v819 = vadd.f32 %v805, %v815
    %s820 = sld [smem:[#allocation3 + $0xc]]
    %v821 = vstv %s820
    %v822 = vmul.f32 %v784, %v821
    %v823 = vmul.f32 %v785, %v821
    %v824 = vmul.f32 %v786, %v821
    %v825 = vmul.f32 %v787, %v821
    %830 = vrot.lane.b32.xlu0 %v822, 20
    %v831 = vpop.permute.xlu0 %830
    %832 = vrot.lane.b32.xlu0 %v823, 20
    %v833 = vpop.permute.xlu0 %832
    %834 = vrot.lane.b32.xlu0 %v824, 20
    %v835 = vpop.permute.xlu0 %834
    %836 = vrot.lane.b32.xlu0 %v825, 20
    %v837 = vpop.permute.xlu0 %836
    %vm838 = vcmask 162816
    %v839 = vsel %vm838, %v831, %v833
    %v840 = vsel %vm838, %v835, %v837
    %v843 = vadd.f32 %v818, %v839
    %v844 = vadd.f32 %v819, %v840
    %s845 = sld [smem:[#allocation3 + $0x1]]
    %v846 = vstv %s845
    %v847 = vmul.f32 %v784, %v846
    %v848 = vmul.f32 %v786, %v846
    %s849 = sld [smem:[#allocation3 + $0x5]]
    %v850 = vstv %s849
    %v851 = vmul.f32 %v784, %v850
    %v852 = vmul.f32 %v786, %v850
    %855 = vrot.lane.b32.xlu0 %v851, 92
    %v856 = vpop.permute.xlu0 %855
    %857 = vrot.lane.b32.xlu0 %v852, 92
    %v858 = vpop.permute.xlu0 %857
    %v861 = vadd.f32 %v847, %v856
    %v862 = vadd.f32 %v848, %v858
    %s863 = sld [smem:[#allocation3 + $0x9]]
    %v864 = vstv %s863
    %v865 = vmul.f32 %v784, %v864
    %v866 = vmul.f32 %v786, %v864
    %869 = vrot.lane.b32.xlu0 %v865, 56
    %v870 = vpop.permute.xlu0 %869
    %871 = vrot.lane.b32.xlu0 %v866, 56
    %v872 = vpop.permute.xlu0 %871
    %v875 = vadd.f32 %v861, %v870
    %v876 = vadd.f32 %v862, %v872
    %s877 = sld [smem:[#allocation3 + $0xd]]
    %v878 = vstv %s877
    %v879 = vmul.f32 %v784, %v878
    %v880 = vmul.f32 %v785, %v878
    %v881 = vmul.f32 %v786, %v878
    %v882 = vmul.f32 %v787, %v878
    %887 = vrot.lane.b32.xlu0 %v879, 20
    %v888 = vpop.permute.xlu0 %887
    %889 = vrot.lane.b32.xlu0 %v880, 20
    %v890 = vpop.permute.xlu0 %889
    %891 = vrot.lane.b32.xlu0 %v881, 20
    %v892 = vpop.permute.xlu0 %891
    %893 = vrot.lane.b32.xlu0 %v882, 20
    %v894 = vpop.permute.xlu0 %893
    %v895 = vsel %vm838, %v888, %v890
    %v896 = vsel %vm838, %v892, %v894
    %v899 = vadd.f32 %v875, %v895
    %v900 = vadd.f32 %v876, %v896
    %s901 = sld [smem:[#allocation3 + $0x2]]
    %v902 = vstv %s901
    %v903 = vmul.f32 %v784, %v902
    %v904 = vmul.f32 %v786, %v902
    %s905 = sld [smem:[#allocation3 + $0x6]]
    %v906 = vstv %s905
    %v907 = vmul.f32 %v784, %v906
    %v908 = vmul.f32 %v786, %v906
    %911 = vrot.lane.b32.xlu0 %v907, 92
    %v912 = vpop.permute.xlu0 %911
    %913 = vrot.lane.b32.xlu0 %v908, 92
    %v914 = vpop.permute.xlu0 %913
    %v917 = vadd.f32 %v903, %v912
    %v918 = vadd.f32 %v904, %v914
    %s919 = sld [smem:[#allocation3 + $0xa]]
    %v920 = vstv %s919
    %v921 = vmul.f32 %v784, %v920
    %v922 = vmul.f32 %v786, %v920
    %925 = vrot.lane.b32.xlu0 %v921, 56
    %v926 = vpop.permute.xlu0 %925
    %927 = vrot.lane.b32.xlu0 %v922, 56
    %v928 = vpop.permute.xlu0 %927
    %v931 = vadd.f32 %v917, %v926
    %v932 = vadd.f32 %v918, %v928
    %s933 = sld [smem:[#allocation3 + $0xe]]
    %v934 = vstv %s933
    %v935 = vmul.f32 %v784, %v934
    %v936 = vmul.f32 %v785, %v934
    %v937 = vmul.f32 %v786, %v934
    %v938 = vmul.f32 %v787, %v934
    %943 = vrot.lane.b32.xlu0 %v935, 20
    %v944 = vpop.permute.xlu0 %943
    %945 = vrot.lane.b32.xlu0 %v936, 20
    %v946 = vpop.permute.xlu0 %945
    %947 = vrot.lane.b32.xlu0 %v937, 20
    %v948 = vpop.permute.xlu0 %947
    %949 = vrot.lane.b32.xlu0 %v938, 20
    %v950 = vpop.permute.xlu0 %949
    %v951 = vsel %vm838, %v944, %v946
    %v952 = vsel %vm838, %v948, %v950
    %v955 = vadd.f32 %v931, %v951
    %v956 = vadd.f32 %v932, %v952
    %s957 = sld [smem:[#allocation3 + $0x3]]
    %v958 = vstv %s957
    %v959 = vmul.f32 %v784, %v958
    %v960 = vmul.f32 %v786, %v958
    %s961 = sld [smem:[#allocation3 + $0x7]]
    %v962 = vstv %s961
    %v963 = vmul.f32 %v784, %v962
    %v964 = vmul.f32 %v786, %v962
    %967 = vrot.lane.b32.xlu0 %v963, 92
    %v968 = vpop.permute.xlu0 %967
    %969 = vrot.lane.b32.xlu0 %v964, 92
    %v970 = vpop.permute.xlu0 %969
    %v973 = vadd.f32 %v959, %v968
    %v974 = vadd.f32 %v960, %v970
    %s975 = sld [smem:[#allocation3 + $0xb]]
    %v976 = vstv %s975
    %v977 = vmul.f32 %v784, %v976
    %v978 = vmul.f32 %v786, %v976
    %981 = vrot.lane.b32.xlu0 %v977, 56
    %v982 = vpop.permute.xlu0 %981
    %983 = vrot.lane.b32.xlu0 %v978, 56
    %v984 = vpop.permute.xlu0 %983
    %v987 = vadd.f32 %v973, %v982
    %v988 = vadd.f32 %v974, %v984
    %s989 = sld [smem:[#allocation3 + $0xf]]
    %v990 = vstv %s989
    %v991 = vmul.f32 %v784, %v990
    %v992 = vmul.f32 %v785, %v990
    %v993 = vmul.f32 %v786, %v990
    %v994 = vmul.f32 %v787, %v990
    %999 = vrot.lane.b32.xlu0 %v991, 20
    %v1000 = vpop.permute.xlu0 %999
    %1001 = vrot.lane.b32.xlu0 %v992, 20
    %v1002 = vpop.permute.xlu0 %1001
    %1003 = vrot.lane.b32.xlu0 %v993, 20
    %v1004 = vpop.permute.xlu0 %1003
    %1005 = vrot.lane.b32.xlu0 %v994, 20
    %v1006 = vpop.permute.xlu0 %1005
    %v1007 = vsel %vm838, %v1000, %v1002
    %v1008 = vsel %vm838, %v1004, %v1006
    %v1011 = vadd.f32 %v987, %v1007
    %v1012 = vadd.f32 %v988, %v1008
    %vm1013 = vcmask 293888
    %v1014 = vsel %vm1013, %v843, 0.0
    %v1015 = vsel %vm1013, %v844, 0.0
    %v1016 = vadd.f32 %v1014, %v1015
    %v1017 = vrot.slane %v1016, 4
    %v1018 = vadd.f32 %v1016, %v1017
    %v1019 = vrot.slane %v1018, 2
    %v1020 = vadd.f32 %v1018, %v1019
    %v1021 = vrot.slane %v1020, 1
    %v1022 = vadd.f32 %v1020, %v1021
    %vm1023 = vcmask 286720
    %1024 = vst.msk [vmem:[%s4] sm:$0x1] %vm1023, %v1022
    %v1025 = vmul.f32 %v843, %v843
    %v1026 = vmul.f32 %v844, %v844
    %v1027 = vsel %vm1013, %v1025, 0.0
    %v1028 = vsel %vm1013, %v1026, 0.0
    %v1029 = vadd.f32 %v1027, %v1028
    %v1030 = vrot.slane %v1029, 4
    %v1031 = vadd.f32 %v1029, %v1030
    %v1032 = vrot.slane %v1031, 2
    %v1033 = vadd.f32 %v1031, %v1032
    %v1034 = vrot.slane %v1033, 1
    %v1035 = vadd.f32 %v1033, %v1034
    %1036 = vst.msk [vmem:[%s4 + $0x4] sm:$0x1] %vm1023, %v1035
    %1037 = vst.msk [vmem:[%s3] sm:$0xff] %vm1013, %v843
    %1038 = vst.msk [vmem:[%s3 + $0x10] sm:$0xff] %vm1013, %v844
    %v1039 = vsel %vm1013, %v899, 0.0
    %v1040 = vsel %vm1013, %v900, 0.0
    %v1041 = vadd.f32 %v1039, %v1040
    %v1042 = vrot.slane %v1041, 4
    %v1043 = vadd.f32 %v1041, %v1042
    %v1044 = vrot.slane %v1043, 2
    %v1045 = vadd.f32 %v1043, %v1044
    %v1046 = vrot.slane %v1045, 1
    %v1047 = vadd.f32 %v1045, %v1046
    %1048 = vst.msk [vmem:[%s4 + $0x1] sm:$0x1] %vm1023, %v1047
    %v1049 = vmul.f32 %v899, %v899
    %v1050 = vmul.f32 %v900, %v900
    %v1051 = vsel %vm1013, %v1049, 0.0
    %v1052 = vsel %vm1013, %v1050, 0.0
    %v1053 = vadd.f32 %v1051, %v1052
    %v1054 = vrot.slane %v1053, 4
    %v1055 = vadd.f32 %v1053, %v1054
    %v1056 = vrot.slane %v1055, 2
    %v1057 = vadd.f32 %v1055, %v1056
    %v1058 = vrot.slane %v1057, 1
    %v1059 = vadd.f32 %v1057, %v1058
    %1060 = vst.msk [vmem:[%s4 + $0x5] sm:$0x1] %vm1023, %v1059
    %1063 = vrot.lane.b32.xlu0 %v899, 36
    %v1064 = vpop.permute.xlu0 %1063
    %1065 = vrot.lane.b32.xlu0 %v900, 36
    %v1066 = vpop.permute.xlu0 %1065
    %vm1069 = vcmask 589088
    %1070 = vst.msk [vmem:[%s3] sm:$0xff] %vm1069, %v1064
    %1071 = vst.msk [vmem:[%s3 + $0x10] sm:$0xff] %vm1069, %v1066
    %v1072 = vsel %vm1013, %v955, 0.0
    %v1073 = vsel %vm1013, %v956, 0.0
    %v1074 = vadd.f32 %v1072, %v1073
    %v1075 = vrot.slane %v1074, 4
    %v1076 = vadd.f32 %v1074, %v1075
    %v1077 = vrot.slane %v1076, 2
    %v1078 = vadd.f32 %v1076, %v1077
    %v1079 = vrot.slane %v1078, 1
    %v1080 = vadd.f32 %v1078, %v1079
    %1081 = vst.msk [vmem:[%s4 + $0x2] sm:$0x1] %vm1023, %v1080
    %v1082 = vmul.f32 %v955, %v955
    %v1083 = vmul.f32 %v956, %v956
    %v1084 = vsel %vm1013, %v1082, 0.0
    %v1085 = vsel %vm1013, %v1083, 0.0
    %v1086 = vadd.f32 %v1084, %v1085
    %v1087 = vrot.slane %v1086, 4
    %v1088 = vadd.f32 %v1086, %v1087
    %v1089 = vrot.slane %v1088, 2
    %v1090 = vadd.f32 %v1088, %v1089
    %v1091 = vrot.slane %v1090, 1
    %v1092 = vadd.f32 %v1090, %v1091
    %1093 = vst.msk [vmem:[%s4 + $0x6] sm:$0x1] %vm1023, %v1092
    %1096 = vrot.lane.b32.xlu0 %v955, 72
    %v1097 = vpop.permute.xlu0 %1096
    %1098 = vrot.lane.b32.xlu0 %v956, 72
    %v1099 = vpop.permute.xlu0 %1098
    %vm1102 = vcmask 884288
    %1103 = vst.msk [vmem:[%s3] sm:$0xff] %vm1102, %v1097
    %1104 = vst.msk [vmem:[%s3 + $0x10] sm:$0xff] %vm1102, %v1099
    %v1105 = vsel %vm1013, %v1011, 0.0
    %v1106 = vsel %vm1013, %v1012, 0.0
    %v1107 = vadd.f32 %v1105, %v1106
    %v1108 = vrot.slane %v1107, 4
    %v1109 = vadd.f32 %v1107, %v1108
    %v1110 = vrot.slane %v1109, 2
    %v1111 = vadd.f32 %v1109, %v1110
    %v1112 = vrot.slane %v1111, 1
    %v1113 = vadd.f32 %v1111, %v1112
    %1114 = vst.msk [vmem:[%s4 + $0x3] sm:$0x1] %vm1023, %v1113
    %v1115 = vmul.f32 %v1011, %v1011
    %v1116 = vmul.f32 %v1012, %v1012
    %v1117 = vsel %vm1013, %v1115, 0.0
    %v1118 = vsel %vm1013, %v1116, 0.0
    %v1119 = vadd.f32 %v1117, %v1118
    %v1120 = vrot.slane %v1119, 4
    %v1121 = vadd.f32 %v1119, %v1120
    %v1122 = vrot.slane %v1121, 2
    %v1123 = vadd.f32 %v1121, %v1122
    %v1124 = vrot.slane %v1123, 1
    %v1125 = vadd.f32 %v1123, %v1124
    %1126 = vst.msk [vmem:[%s4 + $0x7] sm:$0x1] %vm1023, %v1125
    %1129 = vrot.lane.b32.xlu0 %v1011, 108
    %v1130 = vpop.permute.xlu0 %1129
    %1131 = vrot.lane.b32.xlu0 %v1012, 108
    %v1132 = vpop.permute.xlu0 %1131
    %vm1135 = vcmask 1048416
    %1136 = vst.msk [vmem:[%s3] sm:$0xff] %vm1135, %v1130
    %vm1137 = vcmask 130048
    %1138 = vst.msk [vmem:[%s3 + $0x8] sm:$0xff] %vm1137, %v1130
    %1139 = vst.msk [vmem:[%s3 + $0x10] sm:$0xff] %vm1135, %v1132
    %1140 = vst.msk [vmem:[%s3 + $0x18] sm:$0xff] %vm1137, %v1132
    %vm1141 = vcmask 1047680
    %1142 = vst.msk [vmem:[%s3 + $0x8] sm:$0xff] %vm1141, 0.0
    %1143 = vst.msk [vmem:[%s3 + $0x18] sm:$0xff] %vm1141, 0.0
    %vm1144 = vcmask 1047840
    %1145 = vst.msk [vmem:[%s4] sm:$0xff] %vm1144, 0.0
    // Predicated region
    $region18: #{sepconv_forward.3} parent=1 // pred_check
      _
    $region19: #{sepconv_forward.3} parent=1 // pred_check_branch
      %1147 = sbr.rel (0) target = $region21
    $region20: #{sepconv_forward.3} parent=1 // pred_region
      _
    $region21: #{sepconv_forward.3} parent=1 // pred_fallthru
      _
    // Predicated region
    $region22: #{sepconv_forward.3} parent=1 // pred_check
      _
    $region23: #{sepconv_forward.3} parent=1 // pred_check_branch
      %1149 = sbr.rel (0) target = $region25
    $region24: #{sepconv_forward.3} parent=1 // pred_region
      _
    $region25: #{sepconv_forward.3} parent=1 // pred_fallthru
      _
    // Predicated region
    $region26: #{sepconv_forward.3} parent=1 // pred_check
      _
    $region27: #{sepconv_forward.3} parent=1 // pred_check_branch
      %1151 = sbr.rel (0) target = $region29
    $region28: #{sepconv_forward.3} parent=1 // pred_region
      _
    $region29: #{sepconv_forward.3} parent=1 // pred_fallthru
      _
    // Predicated region
    $region30: #{sepconv_forward.3} parent=1 // pred_check
      _
    $region31: #{sepconv_forward.3} parent=1 // pred_check_branch
      %1153 = sbr.rel (0) target = $region33
    $region32: #{sepconv_forward.3} parent=1 // pred_region
      _
    $region33: #{sepconv_forward.3} parent=1 // pred_fallthru
      _
    %1154 = vsyncpa [#allocation4], 1

// kernel: sepconv_forward.4
$region0: #{sepconv_forward.4}
  #allocation0 [shape = 'u32[]', space=smem, size = 0x4, offset = 0x4, fixed_abs, tag = 'smem constant byte address 0x4 - core index']
  #allocation1 [shape = 'u32[144,128]{1,0:T(1,128)}', space=vmem, size = 0x12000, scoped, tag = 'internal scratch']
  #allocation2 [shape = 'f32[18,384]{1,0:T(8,128)}', space=vmem, size = 0x9000, scoped, tag = 'scratch operand']
  %s0 = inlined_call_operand.vmem [shape: f32[1,16,256], index: 0, kind: input, shape index: {}]
  %s1 = inlined_call_operand.vmem [shape: f32[9,256], index: 1, kind: input, shape index: {}]
  %s2 = inlined_call_operand.vmem [shape: f32[32], index: 2, kind: input, shape index: {}]
  %s3 = inlined_call_operand.vmem [shape: f32[4], index: 3, kind: input, shape index: {}]
  %s4 = inlined_call_operand.vmem [shape: f32[4], index: 4, kind: input, shape index: {}]
  %s5 = inlined_call_operand.vmem [shape: f32[1,16,384], index: 5, kind: output, shape index: {0}]
  %s6 = inlined_call_operand.vmem [shape: f32[1,16,128], index: 6, kind: output, shape index: {1}]
  %7 = xla_tuple %s5, %s6
  %s8 = sld [smem:[#allocation0]]
  $region50: #{sepconv_forward.4} parent=0
    _
  %s10 = ssub.s32 1, %s8
  %s11 = scalar_select 0, %s10, %s8
  $region1: #{sepconv_forward.4} parent=0
    #allocation3 [shape = 'u8[512]{0}', space=smem, size = 0x200, scoped, tag = 'input window, operand 2, single buffered']
    #allocation4 [shape = 's32[1]{0}', space=sflag, size = 0x4, scoped, tag = 'scoped memory for sepconv_forward.4']
    #allocation5 [shape = 'u8[512]{0}', space=smem, size = 0x200, scoped, tag = 'input window, operand 3, single buffered']
    #allocation6 [shape = 's32[1]{0}', space=sflag, size = 0x4, scoped, tag = 'scoped memory for sepconv_forward.4']
    #allocation7 [shape = 'u8[512]{0}', space=smem, size = 0x200, scoped, tag = 'input window, operand 4, single buffered']
    %12 = vsyncpa [#allocation4], 0
    %13 = vsyncpa [#allocation6], 0
    // Predicated region
    $region2: #{sepconv_forward.4} parent=1 // pred_check
      _
    $region3: #{sepconv_forward.4} parent=1 // pred_check_branch
      %15 = sbr.rel (0) target = $region5
    $region4: #{sepconv_forward.4} parent=1 // pred_region
      _
    $region5: #{sepconv_forward.4} parent=1 // pred_fallthru
      _
    // Predicated region
    $region6: #{sepconv_forward.4} parent=1 // pred_check
      _
    $region7: #{sepconv_forward.4} parent=1 // pred_check_branch
      %17 = sbr.rel (0) target = $region9
    $region8: #{sepconv_forward.4} parent=1 // pred_region
      _
    $region9: #{sepconv_forward.4} parent=1 // pred_fallthru
      _
    // Predicated region
    $region10: #{sepconv_forward.4} parent=1 // pred_check
      _
    $region11: #{sepconv_forward.4} parent=1 // pred_check_branch
      %19 = sbr.rel (0) target = $region13
    $region12: #{sepconv_forward.4} parent=1 // pred_region
      %s21 = ssub.s32 16, 16
      %22 = vsyncadd [#allocation4], %s21
      %s24 = sshll.u32 %s2, 4
      %s25 = int_to_ptr.vmem [resolvable:$true] %s24
      %27 = dma.vmem_to_smem %s25, 16, [#allocation3], [#allocation4]
    $region13: #{sepconv_forward.4} parent=1 // pred_fallthru
      _
    // Predicated region
    $region14: #{sepconv_forward.4} parent=1 // pred_check
      _
    $region15: #{sepconv_forward.4} parent=1 // pred_check_branch
      %29 = sbr.rel (0) target = $region17
    $region16: #{sepconv_forward.4} parent=1 // pred_region
      %s31 = ssub.s32 16, 16
      %32 = vsyncadd [#allocation6], %s31
      %s34 = sshll.u32 %s3, 4
      %s35 = int_to_ptr.vmem [resolvable:$true] %s34
      %37 = dma.vmem_to_smem %s35, 16, [#allocation5], [#allocation6]
    $region17: #{sepconv_forward.4} parent=1 // pred_fallthru
      _
    // Predicated region
    $region18: #{sepconv_forward.4} parent=1 // pred_check
      _
    $region19: #{sepconv_forward.4} parent=1 // pred_check_branch
      %39 = sbr.rel (0) target = $region21
    $region20: #{sepconv_forward.4} parent=1 // pred_region
      %s41 = ssub.s32 16, 16
      %42 = vsyncadd [#allocation6], %s41
      %s44 = sshll.u32 %s4, 4
      %s45 = int_to_ptr.vmem [resolvable:$true] %s44
      %47 = dma.vmem_to_smem %s45, 16, [#allocation7], [#allocation6]
    $region21: #{sepconv_forward.4} parent=1 // pred_fallthru
      _
    // Predicated region
    $region22: #{sepconv_forward.4} parent=1 // pred_check
      _
    $region23: #{sepconv_forward.4} parent=1 // pred_check_branch
      %49 = sbr.rel (0) target = $region25
    $region24: #{sepconv_forward.4} parent=1 // pred_region
      %50 = dma.done [#allocation4], 16
    $region25: #{sepconv_forward.4} parent=1 // pred_fallthru
      _
    // Predicated region
    $region26: #{sepconv_forward.4} parent=1 // pred_check
      _
    $region27: #{sepconv_forward.4} parent=1 // pred_check_branch
      %52 = sbr.rel (0) target = $region29
    $region28: #{sepconv_forward.4} parent=1 // pred_region
      %53 = dma.done [#allocation6], 16
    $region29: #{sepconv_forward.4} parent=1 // pred_fallthru
      _
    // Predicated region
    $region30: #{sepconv_forward.4} parent=1 // pred_check
      _
    $region31: #{sepconv_forward.4} parent=1 // pred_check_branch
      %55 = sbr.rel (0) target = $region33
    $region32: #{sepconv_forward.4} parent=1 // pred_region
      %56 = dma.done [#allocation6], 16
    $region33: #{sepconv_forward.4} parent=1 // pred_fallthru
      _
    %57 = sfence
    %58 = vst [vmem:[#allocation2] sm:$0xff] 0.0
    %59 = vst [vmem:[#allocation2 + $0x8] sm:$0xff] 0.0
    %60 = vst [vmem:[#allocation2 + $0x10] sm:$0xff] 0.0
    %61 = vst [vmem:[#allocation2 + $0x18] sm:$0xff] 0.0
    %62 = vst [vmem:[#allocation2 + $0x20] sm:$0xff] 0.0
    %63 = vst [vmem:[#allocation2 + $0x28] sm:$0xff] 0.0
    %64 = vst [vmem:[#allocation2 + $0x30] sm:$0x3] 0.0
    %65 = vst [vmem:[#allocation2 + $0x38] sm:$0x3] 0.0
    %66 = vst [vmem:[#allocation2 + $0x40] sm:$0x3] 0.0
    %v67 = vld [vmem:[%s0] sm:$0xff]
    %v68 = vld [vmem:[%s0 + $0x10] sm:$0xff]
    %s69 = sld [smem:[#allocation5]]
    %v70 = vstv %s69
    %v71 = vmul.f32 %v67, %v70
    %v72 = vmul.f32 %v68, %v70
    %s73 = sld [smem:[#allocation7]]
    %v74 = vstv %s73
    %v75 = vadd.f32 %v71, %v74
    %v76 = vadd.f32 %v72, %v74
    %v77 = vmax.f32 %v75, 0.0
    %v78 = vmax.f32 %v76, 0.0
    %vm81 = vcmask 1040384
    %v82 = vrot.slane %v77, 7
    %v83 = vrot.slane %v78, 7
    %v84 = vsel %vm81, %v82, %v83
    %85 = vrot.lane.b32.xlu0 %v82, 1
    %v86 = vpop.permute.xlu0 %85
    %87 = vrot.lane.b32.xlu0 %v84, 1
    %v88 = vpop.permute.xlu0 %87
    %89 = vrot.lane.b32.xlu0 %v83, 1
    %v90 = vpop.permute.xlu0 %89
    %vm94 = vcmask 138249
    %95 = vst.msk [vmem:[#allocation2] sm:$0xfe] %vm94, %v86
    %vm96 = vcmask 138248
    %97 = vst.msk [vmem:[#allocation2 + $0x18] sm:$0xff] %vm96, %v88
    %vm98 = vcmask 131080
    %99 = vst.msk [vmem:[#allocation2 + $0x30] sm:$0x1] %vm98, %v90
    %v100 = vld [vmem:[%s0] sm:$0xff]
    %v101 = vld [vmem:[%s0 + $0x10] sm:$0xff]
    %s102 = sld [smem:[#allocation5 + $0x1]]
    %v103 = vstv %s102
    %v104 = vmul.f32 %v100, %v103
    %v105 = vmul.f32 %v101, %v103
    %s106 = sld [smem:[#allocation7 + $0x1]]
    %v107 = vstv %s106
    %v108 = vadd.f32 %v104, %v107
    %v109 = vadd.f32 %v105, %v107
    %v110 = vmax.f32 %v108, 0.0
    %v111 = vmax.f32 %v109, 0.0
    %v114 = vrot.slane %v110, 7
    %v115 = vrot.slane %v111, 7
    %v116 = vsel %vm81, %v114, %v115
    %117 = vrot.lane.b32.xlu0 %v114, 1
    %v118 = vpop.permute.xlu0 %117
    %119 = vrot.lane.b32.xlu0 %v116, 1
    %v120 = vpop.permute.xlu0 %119
    %121 = vrot.lane.b32.xlu0 %v115, 1
    %v122 = vpop.permute.xlu0 %121
    %vm126 = vcmask 433449
    %127 = vst.msk [vmem:[#allocation2] sm:$0xfe] %vm126, %v118
    %vm128 = vcmask 433448
    %129 = vst.msk [vmem:[#allocation2 + $0x18] sm:$0xff] %vm128, %v120
    %vm130 = vcmask 426280
    %131 = vst.msk [vmem:[#allocation2 + $0x30] sm:$0x1] %vm130, %v122
    %v132 = vld [vmem:[%s0] sm:$0xff]
    %v133 = vld [vmem:[%s0 + $0x10] sm:$0xff]
    %s134 = sld [smem:[#allocation5 + $0x2]]
    %v135 = vstv %s134
    %v136 = vmul.f32 %v132, %v135
    %v137 = vmul.f32 %v133, %v135
    %s138 = sld [smem:[#allocation7 + $0x2]]
    %v139 = vstv %s138
    %v140 = vadd.f32 %v136, %v139
    %v141 = vadd.f32 %v137, %v139
    %v142 = vmax.f32 %v140, 0.0
    %v143 = vmax.f32 %v141, 0.0
    %v146 = vrot.slane %v142, 7
    %v147 = vrot.slane %v143, 7
    %v148 = vsel %vm81, %v146, %v147
    %149 = vrot.lane.b32.xlu0 %v146, 1
    %v150 = vpop.permute.xlu0 %149
    %151 = vrot.lane.b32.xlu0 %v148, 1
    %v152 = vpop.permute.xlu0 %151
    %153 = vrot.lane.b32.xlu0 %v147, 1
    %v154 = vpop.permute.xlu0 %153
    %vm158 = vcmask 728649
    %159 = vst.msk [vmem:[#allocation2] sm:$0xfe] %vm158, %v150
    %vm160 = vcmask 728648
    %161 = vst.msk [vmem:[#allocation2 + $0x18] sm:$0xff] %vm160, %v152
    %vm162 = vcmask 721480
    %163 = vst.msk [vmem:[#allocation2 + $0x30] sm:$0x1] %vm162, %v154
    %v164 = vld [vmem:[%s0] sm:$0xff]
    %v165 = vld [vmem:[%s0 + $0x10] sm:$0xff]
    %s166 = sld [smem:[#allocation5 + $0x3]]
    %v167 = vstv %s166
    %v168 = vmul.f32 %v164, %v167
    %v169 = vmul.f32 %v165, %v167
    %s170 = sld [smem:[#allocation7 + $0x3]]
    %v171 = vstv %s170
    %v172 = vadd.f32 %v168, %v171
    %v173 = vadd.f32 %v169, %v171
    %v174 = vmax.f32 %v172, 0.0
    %v175 = vmax.f32 %v173, 0.0
    %v178 = vrot.slane %v174, 7
    %v179 = vrot.slane %v175, 7
    %v180 = vsel %vm81, %v178, %v179
    %181 = vrot.lane.b32.xlu0 %v178, 1
    %v182 = vpop.permute.xlu0 %181
    %183 = vrot.lane.b32.xlu0 %v180, 1
    %v184 = vpop.permute.xlu0 %183
    %185 = vrot.lane.b32.xlu0 %v179, 1
    %v186 = vpop.permute.xlu0 %185
    %vm190 = vcmask 1023849
    %191 = vst.msk [vmem:[#allocation2] sm:$0xfe] %vm190, %v182
    %vm192 = vcmask 1023848
    %193 = vst.msk [vmem:[#allocation2 + $0x18] sm:$0xff] %vm192, %v184
    %vm194 = vcmask 1016680
    %195 = vst.msk [vmem:[#allocation2 + $0x30] sm:$0x1] %vm194, %v186
    %v196 = vld [vmem:[%s0] sm:$0xff]
    %v197 = vld [vmem:[%s0 + $0x10] sm:$0xff]
    %s198 = sld [smem:[#allocation5]]
    %v199 = vstv %s198
    %v200 = vmul.f32 %v196, %v199
    %v201 = vmul.f32 %v197, %v199
    %s202 = sld [smem:[#allocation7]]
    %v203 = vstv %s202
    %v204 = vadd.f32 %v200, %v203
    %v205 = vadd.f32 %v201, %v203
    %v206 = vmax.f32 %v204, 0.0
    %v207 = vmax.f32 %v205, 0.0
    %v210 = vrot.slane %v206, 7
    %v211 = vrot.slane %v207, 7
    %v212 = vsel %vm81, %v210, %v211
    %213 = vrot.lane.b32.xlu0 %v210, 1
    %v214 = vpop.permute.xlu0 %213
    %215 = vrot.lane.b32.xlu0 %v212, 1
    %v216 = vpop.permute.xlu0 %215
    %217 = vrot.lane.b32.xlu0 %v211, 1
    %v218 = vpop.permute.xlu0 %217
    %vm222 = vcmask 285849
    %223 = vst.msk [vmem:[#allocation2] sm:$0xfe] %vm222, %v214
    %vm224 = vcmask 285848
    %225 = vst.msk [vmem:[#allocation2 + $0x18] sm:$0xff] %vm224, %v216
    %vm226 = vcmask 278680
    %227 = vst.msk [vmem:[#allocation2 + $0x30] sm:$0x1] %vm226, %v218
    %v228 = vld [vmem:[%s0] sm:$0xff]
    %v229 = vld [vmem:[%s0 + $0x10] sm:$0xff]
    %s230 = sld [smem:[#allocation5 + $0x1]]
    %v231 = vstv %s230
    %v232 = vmul.f32 %v228, %v231
    %v233 = vmul.f32 %v229, %v231
    %s234 = sld [smem:[#allocation7 + $0x1]]
    %v235 = vstv %s234
    %v236 = vadd.f32 %v232, %v235
    %v237 = vadd.f32 %v233, %v235
    %v238 = vmax.f32 %v236, 0.0
    %v239 = vmax.f32 %v237, 0.0
    %v242 = vrot.slane %v238, 7
    %v243 = vrot.slane %v239, 7
    %v244 = vsel %vm81, %v242, %v243
    %245 = vrot.lane.b32.xlu0 %v242, 1
    %v246 = vpop.permute.xlu0 %245
    %247 = vrot.lane.b32.xlu0 %v244, 1
    %v248 = vpop.permute.xlu0 %247
    %249 = vrot.lane.b32.xlu0 %v243, 1
    %v250 = vpop.permute.xlu0 %249
    %vm254 = vcmask 581049
    %255 = vst.msk [vmem:[#allocation2] sm:$0xfe] %vm254, %v246
    %vm256 = vcmask 581048
    %257 = vst.msk [vmem:[#allocation2 + $0x18] sm:$0xff] %vm256, %v248
    %vm258 = vcmask 573880
    %259 = vst.msk [vmem:[#allocation2 + $0x30] sm:$0x1] %vm258, %v250
    %v260 = vld [vmem:[%s0] sm:$0xff]
    %v261 = vld [vmem:[%s0 + $0x10] sm:$0xff]
    %s262 = sld [smem:[#allocation5 + $0x2]]
    %v263 = vstv %s262
    %v264 = vmul.f32 %v260, %v263
    %v265 = vmul.f32 %v261, %v263
    %s266 = sld [smem:[#allocation7 + $0x2]]
    %v267 = vstv %s266
    %v268 = vadd.f32 %v264, %v267
    %v269 = vadd.f32 %v265, %v267
    %v270 = vmax.f32 %v268, 0.0
    %v271 = vmax.f32 %v269, 0.0
    %v274 = vrot.slane %v270, 7
    %v275 = vrot.slane %v271, 7
    %v276 = vsel %vm81, %v274, %v275
    %277 = vrot.lane.b32.xlu0 %v274, 1
    %v278 = vpop.permute.xlu0 %277
    %279 = vrot.lane.b32.xlu0 %v276, 1
    %v280 = vpop.permute.xlu0 %279
    %281 = vrot.lane.b32.xlu0 %v275, 1
    %v282 = vpop.permute.xlu0 %281
    %vm286 = vcmask 876249
    %287 = vst.msk [vmem:[#allocation2] sm:$0xfe] %vm286, %v278
    %vm288 = vcmask 876248
    %289 = vst.msk [vmem:[#allocation2 + $0x18] sm:$0xff] %vm288, %v280
    %vm290 = vcmask 869080
    %291 = vst.msk [vmem:[#allocation2 + $0x30] sm:$0x1] %vm290, %v282
    %v292 = vld [vmem:[%s0] sm:$0xff]
    %v293 = vld [vmem:[%s0 + $0x8] sm:$0xff]
    %v294 = vld [vmem:[%s0 + $0x10] sm:$0xff]
    %v295 = vld [vmem:[%s0 + $0x18] sm:$0xff]
    %s296 = sld [smem:[#allocation5 + $0x3]]
    %v297 = vstv %s296
    %v298 = vmul.f32 %v292, %v297
    %v299 = vmul.f32 %v293, %v297
    %v300 = vmul.f32 %v294, %v297
    %v301 = vmul.f32 %v295, %v297
    %s302 = sld [smem:[#allocation7 + $0x3]]
    %v303 = vstv %s302
    %v304 = vadd.f32 %v298, %v303
    %v305 = vadd.f32 %v299, %v303
    %v306 = vadd.f32 %v300, %v303
    %v307 = vadd.f32 %v301, %v303
    %v308 = vmax.f32 %v304, 0.0
    %v309 = vmax.f32 %v305, 0.0
    %v310 = vmax.f32 %v306, 0.0
    %v311 = vmax.f32 %v307, 0.0
    %v316 = vrot.slane %v308, 7
    %v317 = vrot.slane %v309, 7
    %v318 = vrot.slane %v310, 7
    %v319 = vsel %vm81, %v316, %v318
    %v320 = vrot.slane %v311, 7
    %v321 = vsel %vm81, %v317, %v320
    %322 = vrot.lane.b32.xlu0 %v316, 1
    %v323 = vpop.permute.xlu0 %322
    %324 = vrot.lane.b32.xlu0 %v317, 1
    %v325 = vpop.permute.xlu0 %324
    %326 = vrot.lane.b32.xlu0 %v319, 1
    %v327 = vpop.permute.xlu0 %326
    %328 = vrot.lane.b32.xlu0 %v321, 1
    %v329 = vpop.permute.xlu0 %328
    %330 = vrot.lane.b32.xlu0 %v318, 1
    %v331 = vpop.permute.xlu0 %330
    %332 = vrot.lane.b32.xlu0 %v320, 1
    %v333 = vpop.permute.xlu0 %332
    %vm334 = vcmask 7168
    %v335 = vsel %vm334, %v323, %v325
    %v336 = vsel %vm334, %v327, %v329
    %v337 = vsel %vm334, %v331, %v333
    %vm344 = vcmask 1048569
    %345 = vst.msk [vmem:[#allocation2] sm:$0xfe] %vm344, %v323
    %vm346 = vcmask 121857
    %347 = vst.msk [vmem:[#allocation2 + $0x8] sm:$0xfe] %vm346, %v335
    %vm348 = vcmask 1048568
    %349 = vst.msk [vmem:[#allocation2 + $0x18] sm:$0xff] %vm348, %v327
    %vm350 = vcmask 121856
    %351 = vst.msk [vmem:[#allocation2 + $0x20] sm:$0xff] %vm350, %v336
    %vm352 = vcmask 1041400
    %353 = vst.msk [vmem:[#allocation2 + $0x30] sm:$0x1] %vm352, %v331
    %vm354 = vcmask 114688
    %355 = vst.msk [vmem:[#allocation2 + $0x38] sm:$0x1] %vm354, %v337
    %v356 = vld [vmem:[#allocation2] sm:$0xff]
    %v357 = vld [vmem:[#allocation2 + $0x8] sm:$0xff]
    %v358 = vld [vmem:[#allocation2 + $0x18] sm:$0xff]
    %v359 = vld [vmem:[#allocation2 + $0x20] sm:$0xff]
    %v360 = vld [vmem:[%s1] ss:$8 sm:$0x3]
    %v362 = vlaneseq
    %v363 = vshrl.u32 %v362, 7
    %v364 = vsub.s32 0, %v363
    %v365 = vrot.slane %v360, %v364
    %v366 = vlaneseq
    %v367 = vshrl.u32 %v366, 7
    %v368 = vsub.s32 1, %v367
    %v369 = vrot.slane %v360, %v368
    %v372 = vmul.f32 %v356, %v365
    %v373 = vmul.f32 %v357, %v369
    %v374 = vmul.f32 %v358, %v365
    %v375 = vmul.f32 %v359, %v369
    %v376 = vadd.f32 %v372, 0.0
    %v377 = vadd.f32 %v373, 0.0
    %v378 = vadd.f32 %v374, 0.0
    %v379 = vadd.f32 %v375, 0.0
    %v380 = vld [vmem:[#allocation2 + $0x10] sm:$0xff]
    %v381 = vld [vmem:[#allocation2 + $0x28] sm:$0xff]
    %s382 = scalar_lea.vmem %s1, 1
    %v383 = vld [vmem:[%s382] ss:$8 sm:$0x3]
    %v385 = vlaneseq
    %v386 = vshrl.u32 %v385, 7
    %v387 = vsub.s32 0, %v386
    %v388 = vrot.slane %v383, %v387
    %v389 = vlaneseq
    %v390 = vshrl.u32 %v389, 7
    %v391 = vsub.s32 1, %v390
    %v392 = vrot.slane %v383, %v391
    %393 = vrot.lane.b32.xlu0 %v388, 1
    %v394 = vpop.permute.xlu0 %393
    %395 = vrot.lane.b32.xlu0 %v392, 1
    %v396 = vpop.permute.xlu0 %395
    %v397 = vsel %vm334, %v394, %v396
    %v401 = vmul.f32 %v356, %v394
    %v402 = vmul.f32 %v357, %v397
    %v403 = vmul.f32 %v380, %v396
    %v404 = vmul.f32 %v358, %v394
    %v405 = vmul.f32 %v359, %v397
    %v406 = vmul.f32 %v381, %v396
    %413 = vrot.lane.b32.xlu0 %v401, 127
    %v414 = vpop.permute.xlu0 %413
    %415 = vrot.lane.b32.xlu0 %v402, 127
    %v416 = vpop.permute.xlu0 %415
    %417 = vrot.lane.b32.xlu0 %v403, 127
    %v418 = vpop.permute.xlu0 %417
    %419 = vrot.lane.b32.xlu0 %v404, 127
    %v420 = vpop.permute.xlu0 %419
    %421 = vrot.lane.b32.xlu0 %v405, 127
    %v422 = vpop.permute.xlu0 %421
    %423 = vrot.lane.b32.xlu0 %v406, 127
    %v424 = vpop.permute.xlu0 %423
    %vm425 = vcmask 1039360
    %v426 = vsel %vm425, %v414, %v416
    %v427 = vsel %vm425, %v416, %v418
    %v428 = vsel %vm425, %v420, %v422
    %v429 = vsel %vm425, %v422, %v424
    %v434 = vadd.f32 %v376, %v426
    %v435 = vadd.f32 %v377, %v427
    %v436 = vadd.f32 %v378, %v428
    %v437 = vadd.f32 %v379, %v429
    %s438 = scalar_lea.vmem %s1, 2
    %v439 = vld [vmem:[%s438] ss:$8 sm:$0x3]
    %v441 = vlaneseq
    %v442 = vshrl.u32 %v441, 7
    %v443 = vsub.s32 0, %v442
    %v444 = vrot.slane %v439, %v443
    %v445 = vlaneseq
    %v446 = vshrl.u32 %v445, 7
    %v447 = vsub.s32 1, %v446
    %v448 = vrot.slane %v439, %v447
    %449 = vrot.lane.b32.xlu0 %v444, 2
    %v450 = vpop.permute.xlu0 %449
    %451 = vrot.lane.b32.xlu0 %v448, 2
    %v452 = vpop.permute.xlu0 %451
    %vm453 = vcmask 15360
    %v454 = vsel %vm453, %v450, %v452
    %v458 = vmul.f32 %v356, %v450
    %v459 = vmul.f32 %v357, %v454
    %v460 = vmul.f32 %v380, %v452
    %v461 = vmul.f32 %v358, %v450
    %v462 = vmul.f32 %v359, %v454
    %v463 = vmul.f32 %v381, %v452
    %470 = vrot.lane.b32.xlu0 %v458, 126
    %v471 = vpop.permute.xlu0 %470
    %472 = vrot.lane.b32.xlu0 %v459, 126
    %v473 = vpop.permute.xlu0 %472
    %474 = vrot.lane.b32.xlu0 %v460, 126
    %v475 = vpop.permute.xlu0 %474
    %476 = vrot.lane.b32.xlu0 %v461, 126
    %v477 = vpop.permute.xlu0 %476
    %478 = vrot.lane.b32.xlu0 %v462, 126
    %v479 = vpop.permute.xlu0 %478
    %480 = vrot.lane.b32.xlu0 %v463, 126
    %v481 = vpop.permute.xlu0 %480
    %vm482 = vcmask 1031168
    %v483 = vsel %vm482, %v471, %v473
    %v484 = vsel %vm482, %v473, %v475
    %v485 = vsel %vm482, %v477, %v479
    %v486 = vsel %vm482, %v479, %v481
    %v491 = vadd.f32 %v434, %v483
    %v492 = vadd.f32 %v435, %v484
    %v493 = vadd.f32 %v436, %v485
    %v494 = vadd.f32 %v437, %v486
    %v495 = vld [vmem:[#allocation2] sm:$0xfe]
    %v496 = vld [vmem:[#allocation2 + $0x8] sm:$0xfe]
    %v497 = vld [vmem:[#allocation2 + $0x30] sm:$0x1]
    %v498 = vld [vmem:[#allocation2 + $0x38] sm:$0x1]
    %s499 = scalar_lea.vmem %s1, 3
    %v500 = vld [vmem:[%s499] ss:$8 sm:$0x3]
    %v502 = vlaneseq
    %v503 = vshrl.u32 %v502, 7
    %v504 = vsub.s32 0, %v503
    %v505 = vrot.slane %v500, %v504
    %v506 = vlaneseq
    %v507 = vshrl.u32 %v506, 7
    %v508 = vsub.s32 1, %v507
    %v509 = vrot.slane %v500, %v508
    %v512 = vmul.f32 %v495, %v505
    %v513 = vmul.f32 %v496, %v509
    %v514 = vmul.f32 %v358, %v505
    %v515 = vmul.f32 %v359, %v509
    %v516 = vmul.f32 %v497, %v505
    %v517 = vmul.f32 %v498, %v509
    %vm524 = vcmask 1046528
    %v525 = vrot.slane %v512, 1
    %v526 = vrot.slane %v514, 1
    %v527 = vsel %vm524, %v525, %v526
    %v528 = vrot.slane %v513, 1
    %v529 = vrot.slane %v515, 1
    %v530 = vsel %vm524, %v528, %v529
    %v531 = vrot.slane %v516, 1
    %v532 = vsel %vm524, %v526, %v531
    %v533 = vrot.slane %v517, 1
    %v534 = vsel %vm524, %v529, %v533
    %v539 = vadd.f32 %v491, %v527
    %v540 = vadd.f32 %v492, %v530
    %v541 = vadd.f32 %v493, %v532
    %v542 = vadd.f32 %v494, %v534
    %v543 = vld [vmem:[#allocation2 + $0x10] sm:$0xfe]
    %v544 = vld [vmem:[#allocation2 + $0x40] sm:$0x1]
    %s545 = scalar_lea.vmem %s1, 4
    %v546 = vld [vmem:[%s545] ss:$8 sm:$0x3]
    %v548 = vlaneseq
    %v549 = vshrl.u32 %v548, 7
    %v550 = vsub.s32 0, %v549
    %v551 = vrot.slane %v546, %v550
    %v552 = vlaneseq
    %v553 = vshrl.u32 %v552, 7
    %v554 = vsub.s32 1, %v553
    %v555 = vrot.slane %v546, %v554
    %556 = vrot.lane.b32.xlu0 %v551, 1
    %v557 = vpop.permute.xlu0 %556
    %558 = vrot.lane.b32.xlu0 %v555, 1
    %v559 = vpop.permute.xlu0 %558
    %v560 = vsel %vm334, %v557, %v559
    %v564 = vmul.f32 %v495, %v557
    %v565 = vmul.f32 %v496, %v560
    %v566 = vmul.f32 %v543, %v559
    %v567 = vmul.f32 %v358, %v557
    %v568 = vmul.f32 %v359, %v560
    %v569 = vmul.f32 %v381, %v559
    %v570 = vmul.f32 %v497, %v557
    %v571 = vmul.f32 %v498, %v560
    %v572 = vmul.f32 %v544, %v559
    %v582 = vrot.slane %v564, 1
    %v583 = vrot.slane %v567, 1
    %v584 = vsel %vm524, %v582, %v583
    %v585 = vrot.slane %v565, 1
    %v586 = vrot.slane %v568, 1
    %v587 = vsel %vm524, %v585, %v586
    %v588 = vrot.slane %v566, 1
    %v589 = vrot.slane %v569, 1
    %v590 = vsel %vm524, %v588, %v589
    %v591 = vrot.slane %v570, 1
    %v592 = vsel %vm524, %v583, %v591
    %v593 = vrot.slane %v571, 1
    %v594 = vsel %vm524, %v586, %v593
    %v595 = vrot.slane %v572, 1
    %v596 = vsel %vm524, %v589, %v595
    %597 = vrot.lane.b32.xlu0 %v584, 127
    %v598 = vpop.permute.xlu0 %597
    %599 = vrot.lane.b32.xlu0 %v587, 127
    %v600 = vpop.permute.xlu0 %599
    %601 = vrot.lane.b32.xlu0 %v590, 127
    %v602 = vpop.permute.xlu0 %601
    %603 = vrot.lane.b32.xlu0 %v592, 127
    %v604 = vpop.permute.xlu0 %603
    %605 = vrot.lane.b32.xlu0 %v594, 127
    %v606 = vpop.permute.xlu0 %605
    %607 = vrot.lane.b32.xlu0 %v596, 127
    %v608 = vpop.permute.xlu0 %607
    %v609 = vsel %vm425, %v598, %v600
    %v610 = vsel %vm425, %v600, %v602
    %v611 = vsel %vm425, %v604, %v606
    %v612 = vsel %vm425, %v606, %v608
    %v617 = vadd.f32 %v539, %v609
    %v618 = vadd.f32 %v540, %v610
    %v619 = vadd.f32 %v541, %v611
    %v620 = vadd.f32 %v542, %v612
    %s621 = scalar_lea.vmem %s1, 5
    %v622 = vld [vmem:[%s621] ss:$8 sm:$0x3]
    %v624 = vlaneseq
    %v625 = vshrl.u32 %v624, 7
    %v626 = vsub.s32 0, %v625
    %v627 = vrot.slane %v622, %v626
    %v628 = vlaneseq
    %v629 = vshrl.u32 %v628, 7
    %v630 = vsub.s32 1, %v629
    %v631 = vrot.slane %v622, %v630
    %632 = vrot.lane.b32.xlu0 %v627, 2
    %v633 = vpop.permute.xlu0 %632
    %634 = vrot.lane.b32.xlu0 %v631, 2
    %v635 = vpop.permute.xlu0 %634
    %v636 = vsel %vm453, %v633, %v635
    %v640 = vmul.f32 %v495, %v633
    %v641 = vmul.f32 %v496, %v636
    %v642 = vmul.f32 %v543, %v635
    %v643 = vmul.f32 %v358, %v633
    %v644 = vmul.f32 %v359, %v636
    %v645 = vmul.f32 %v381, %v635
    %v646 = vmul.f32 %v497, %v633
    %v647 = vmul.f32 %v498, %v636
    %v648 = vmul.f32 %v544, %v635
    %v658 = vrot.slane %v640, 1
    %v659 = vrot.slane %v643, 1
    %v660 = vsel %vm524, %v658, %v659
    %v661 = vrot.slane %v641, 1
    %v662 = vrot.slane %v644, 1
    %v663 = vsel %vm524, %v661, %v662
    %v664 = vrot.slane %v642, 1
    %v665 = vrot.slane %v645, 1
    %v666 = vsel %vm524, %v664, %v665
    %v667 = vrot.slane %v646, 1
    %v668 = vsel %vm524, %v659, %v667
    %v669 = vrot.slane %v647, 1
    %v670 = vsel %vm524, %v662, %v669
    %v671 = vrot.slane %v648, 1
    %v672 = vsel %vm524, %v665, %v671
    %673 = vrot.lane.b32.xlu0 %v660, 126
    %v674 = vpop.permute.xlu0 %673
    %675 = vrot.lane.b32.xlu0 %v663, 126
    %v676 = vpop.permute.xlu0 %675
    %677 = vrot.lane.b32.xlu0 %v666, 126
    %v678 = vpop.permute.xlu0 %677
    %679 = vrot.lane.b32.xlu0 %v668, 126
    %v680 = vpop.permute.xlu0 %679
    %681 = vrot.lane.b32.xlu0 %v670, 126
    %v682 = vpop.permute.xlu0 %681
    %683 = vrot.lane.b32.xlu0 %v672, 126
    %v684 = vpop.permute.xlu0 %683
    %v685 = vsel %vm482, %v674, %v676
    %v686 = vsel %vm482, %v676, %v678
    %v687 = vsel %vm482, %v680, %v682
    %v688 = vsel %vm482, %v682, %v684
    %v693 = vadd.f32 %v617, %v685
    %v694 = vadd.f32 %v618, %v686
    %v695 = vadd.f32 %v619, %v687
    %v696 = vadd.f32 %v620, %v688
    %v697 = vld [vmem:[#allocation2] sm:$0xfc]
    %v698 = vld [vmem:[#allocation2 + $0x8] sm:$0xfc]
    %v699 = vld [vmem:[#allocation2 + $0x30] sm:$0x3]
    %v700 = vld [vmem:[#allocation2 + $0x38] sm:$0x3]
    %s701 = scalar_lea.vmem %s1, 6
    %v702 = vld [vmem:[%s701] ss:$8 sm:$0x3]
    %v704 = vlaneseq
    %v705 = vshrl.u32 %v704, 7
    %v706 = vsub.s32 0, %v705
    %v707 = vrot.slane %v702, %v706
    %v708 = vlaneseq
    %v709 = vshrl.u32 %v708, 7
    %v710 = vsub.s32 1, %v709
    %v711 = vrot.slane %v702, %v710
    %v714 = vmul.f32 %v697, %v707
    %v715 = vmul.f32 %v698, %v711
    %v716 = vmul.f32 %v358, %v707
    %v717 = vmul.f32 %v359, %v711
    %v718 = vmul.f32 %v699, %v707
    %v719 = vmul.f32 %v700, %v711
    %vm726 = vcmask 1045504
    %v727 = vrot.slane %v714, 2
    %v728 = vrot.slane %v716, 2
    %v729 = vsel %vm726, %v727, %v728
    %v730 = vrot.slane %v715, 2
    %v731 = vrot.slane %v717, 2
    %v732 = vsel %vm726, %v730, %v731
    %v733 = vrot.slane %v718, 2
    %v734 = vsel %vm726, %v728, %v733
    %v735 = vrot.slane %v719, 2
    %v736 = vsel %vm726, %v731, %v735
    %v741 = vadd.f32 %v693, %v729
    %v742 = vadd.f32 %v694, %v732
    %v743 = vadd.f32 %v695, %v734
    %v744 = vadd.f32 %v696, %v736
    %v745 = vld [vmem:[#allocation2 + $0x10] sm:$0xfc]
    %v746 = vld [vmem:[#allocation2 + $0x40] sm:$0x3]
    %s747 = scalar_lea.vmem %s1, 7
    %v748 = vld [vmem:[%s747] ss:$8 sm:$0x3]
    %v750 = vlaneseq
    %v751 = vshrl.u32 %v750, 7
    %v752 = vsub.s32 0, %v751
    %v753 = vrot.slane %v748, %v752
    %v754 = vlaneseq
    %v755 = vshrl.u32 %v754, 7
    %v756 = vsub.s32 1, %v755
    %v757 = vrot.slane %v748, %v756
    %758 = vrot.lane.b32.xlu0 %v753, 1
    %v759 = vpop.permute.xlu0 %758
    %760 = vrot.lane.b32.xlu0 %v757, 1
    %v761 = vpop.permute.xlu0 %760
    %v762 = vsel %vm334, %v759, %v761
    %v766 = vmul.f32 %v697, %v759
    %v767 = vmul.f32 %v698, %v762
    %v768 = vmul.f32 %v745, %v761
    %v769 = vmul.f32 %v358, %v759
    %v770 = vmul.f32 %v359, %v762
    %v771 = vmul.f32 %v381, %v761
    %v772 = vmul.f32 %v699, %v759
    %v773 = vmul.f32 %v700, %v762
    %v774 = vmul.f32 %v746, %v761
    %v784 = vrot.slane %v766, 2
    %v785 = vrot.slane %v769, 2
    %v786 = vsel %vm726, %v784, %v785
    %v787 = vrot.slane %v767, 2
    %v788 = vrot.slane %v770, 2
    %v789 = vsel %vm726, %v787, %v788
    %v790 = vrot.slane %v768, 2
    %v791 = vrot.slane %v771, 2
    %v792 = vsel %vm726, %v790, %v791
    %v793 = vrot.slane %v772, 2
    %v794 = vsel %vm726, %v785, %v793
    %v795 = vrot.slane %v773, 2
    %v796 = vsel %vm726, %v788, %v795
    %v797 = vrot.slane %v774, 2
    %v798 = vsel %vm726, %v791, %v797
    %799 = vrot.lane.b32.xlu0 %v786, 127
    %v800 = vpop.permute.xlu0 %799
    %801 = vrot.lane.b32.xlu0 %v789, 127
    %v802 = vpop.permute.xlu0 %801
    %803 = vrot.lane.b32.xlu0 %v792, 127
    %v804 = vpop.permute.xlu0 %803
    %805 = vrot.lane.b32.xlu0 %v794, 127
    %v806 = vpop.permute.xlu0 %805
    %807 = vrot.lane.b32.xlu0 %v796, 127
    %v808 = vpop.permute.xlu0 %807
    %809 = vrot.lane.b32.xlu0 %v798, 127
    %v810 = vpop.permute.xlu0 %809
    %v811 = vsel %vm425, %v800, %v802
    %v812 = vsel %vm425, %v802, %v804
    %v813 = vsel %vm425, %v806, %v808
    %v814 = vsel %vm425, %v808, %v810
    %v819 = vadd.f32 %v741, %v811
    %v820 = vadd.f32 %v742, %v812
    %v821 = vadd.f32 %v743, %v813
    %v822 = vadd.f32 %v744, %v814
    %s823 = scalar_lea.vmem %s1, 16
    %v824 = vld [vmem:[%s823] ss:$8 sm:$0x3]
    %v826 = vlaneseq
    %v827 = vshrl.u32 %v826, 7
    %v828 = vsub.s32 0, %v827
    %v829 = vrot.slane %v824, %v828
    %v830 = vlaneseq
    %v831 = vshrl.u32 %v830, 7
    %v832 = vsub.s32 1, %v831
    %v833 = vrot.slane %v824, %v832
    %834 = vrot.lane.b32.xlu0 %v829, 2
    %v835 = vpop.permute.xlu0 %834
    %836 = vrot.lane.b32.xlu0 %v833, 2
    %v837 = vpop.permute.xlu0 %836
    %v838 = vsel %vm453, %v835, %v837
    %v842 = vmul.f32 %v697, %v835
    %v843 = vmul.f32 %v698, %v838
    %v844 = vmul.f32 %v745, %v837
    %v845 = vmul.f32 %v358, %v835
    %v846 = vmul.f32 %v359, %v838
    %v847 = vmul.f32 %v381, %v837
    %v848 = vmul.f32 %v699, %v835
    %v849 = vmul.f32 %v700, %v838
    %v850 = vmul.f32 %v746, %v837
    %v860 = vrot.slane %v842, 2
    %v861 = vrot.slane %v845, 2
    %v862 = vsel %vm726, %v860, %v861
    %v863 = vrot.slane %v843, 2
    %v864 = vrot.slane %v846, 2
    %v865 = vsel %vm726, %v863, %v864
    %v866 = vrot.slane %v844, 2
    %v867 = vrot.slane %v847, 2
    %v868 = vsel %vm726, %v866, %v867
    %v869 = vrot.slane %v848, 2
    %v870 = vsel %vm726, %v861, %v869
    %v871 = vrot.slane %v849, 2
    %v872 = vsel %vm726, %v864, %v871
    %v873 = vrot.slane %v850, 2
    %v874 = vsel %vm726, %v867, %v873
    %875 = vrot.lane.b32.xlu0 %v862, 126
    %v876 = vpop.permute.xlu0 %875
    %877 = vrot.lane.b32.xlu0 %v865, 126
    %v878 = vpop.permute.xlu0 %877
    %879 = vrot.lane.b32.xlu0 %v868, 126
    %v880 = vpop.permute.xlu0 %879
    %881 = vrot.lane.b32.xlu0 %v870, 126
    %v882 = vpop.permute.xlu0 %881
    %883 = vrot.lane.b32.xlu0 %v872, 126
    %v884 = vpop.permute.xlu0 %883
    %885 = vrot.lane.b32.xlu0 %v874, 126
    %v886 = vpop.permute.xlu0 %885
    %v887 = vsel %vm482, %v876, %v878
    %v888 = vsel %vm482, %v878, %v880
    %v889 = vsel %vm482, %v882, %v884
    %v890 = vsel %vm482, %v884, %v886
    %v895 = vadd.f32 %v819, %v887
    %v896 = vadd.f32 %v820, %v888
    %v897 = vadd.f32 %v821, %v889
    %v898 = vadd.f32 %v822, %v890
    %s899 = sld [smem:[#allocation3]]
    %v900 = vstv %s899
    %v901 = vmul.f32 %v895, %v900
    %v902 = vmul.f32 %v897, %v900
    %s903 = sld [smem:[#allocation3 + $0x8]]
    %v904 = vstv %s903
    %v905 = vmul.f32 %v895, %v904
    %v906 = vmul.f32 %v897, %v904
    %909 = vrot.lane.b32.xlu0 %v905, 92
    %v910 = vpop.permute.xlu0 %909
    %911 = vrot.lane.b32.xlu0 %v906, 92
    %v912 = vpop.permute.xlu0 %911
    %v915 = vadd.f32 %v901, %v910
    %v916 = vadd.f32 %v902, %v912
    %s917 = sld [smem:[#allocation3 + $0x10]]
    %v918 = vstv %s917
    %v919 = vmul.f32 %v895, %v918
    %v920 = vmul.f32 %v897, %v918
    %923 = vrot.lane.b32.xlu0 %v919, 56
    %v924 = vpop.permute.xlu0 %923
    %925 = vrot.lane.b32.xlu0 %v920, 56
    %v926 = vpop.permute.xlu0 %925
    %v929 = vadd.f32 %v915, %v924
    %v930 = vadd.f32 %v916, %v926
    %s931 = sld [smem:[#allocation3 + $0x18]]
    %v932 = vstv %s931
    %v933 = vmul.f32 %v895, %v932
    %v934 = vmul.f32 %v896, %v932
    %v935 = vmul.f32 %v897, %v932
    %v936 = vmul.f32 %v898, %v932
    %941 = vrot.lane.b32.xlu0 %v933, 20
    %v942 = vpop.permute.xlu0 %941
    %943 = vrot.lane.b32.xlu0 %v934, 20
    %v944 = vpop.permute.xlu0 %943
    %945 = vrot.lane.b32.xlu0 %v935, 20
    %v946 = vpop.permute.xlu0 %945
    %947 = vrot.lane.b32.xlu0 %v936, 20
    %v948 = vpop.permute.xlu0 %947
    %vm949 = vcmask 162816
    %v950 = vsel %vm949, %v942, %v944
    %v951 = vsel %vm949, %v946, %v948
    %v954 = vadd.f32 %v929, %v950
    %v955 = vadd.f32 %v930, %v951
    %s956 = sld [smem:[#allocation3 + $0x1]]
    %v957 = vstv %s956
    %v958 = vmul.f32 %v895, %v957
    %v959 = vmul.f32 %v897, %v957
    %s960 = sld [smem:[#allocation3 + $0x9]]
    %v961 = vstv %s960
    %v962 = vmul.f32 %v895, %v961
    %v963 = vmul.f32 %v897, %v961
    %966 = vrot.lane.b32.xlu0 %v962, 92
    %v967 = vpop.permute.xlu0 %966
    %968 = vrot.lane.b32.xlu0 %v963, 92
    %v969 = vpop.permute.xlu0 %968
    %v972 = vadd.f32 %v958, %v967
    %v973 = vadd.f32 %v959, %v969
    %s974 = sld [smem:[#allocation3 + $0x11]]
    %v975 = vstv %s974
    %v976 = vmul.f32 %v895, %v975
    %v977 = vmul.f32 %v897, %v975
    %980 = vrot.lane.b32.xlu0 %v976, 56
    %v981 = vpop.permute.xlu0 %980
    %982 = vrot.lane.b32.xlu0 %v977, 56
    %v983 = vpop.permute.xlu0 %982
    %v986 = vadd.f32 %v972, %v981
    %v987 = vadd.f32 %v973, %v983
    %s988 = sld [smem:[#allocation3 + $0x19]]
    %v989 = vstv %s988
    %v990 = vmul.f32 %v895, %v989
    %v991 = vmul.f32 %v896, %v989
    %v992 = vmul.f32 %v897, %v989
    %v993 = vmul.f32 %v898, %v989
    %998 = vrot.lane.b32.xlu0 %v990, 20
    %v999 = vpop.permute.xlu0 %998
    %1000 = vrot.lane.b32.xlu0 %v991, 20
    %v1001 = vpop.permute.xlu0 %1000
    %1002 = vrot.lane.b32.xlu0 %v992, 20
    %v1003 = vpop.permute.xlu0 %1002
    %1004 = vrot.lane.b32.xlu0 %v993, 20
    %v1005 = vpop.permute.xlu0 %1004
    %v1006 = vsel %vm949, %v999, %v1001
    %v1007 = vsel %vm949, %v1003, %v1005
    %v1010 = vadd.f32 %v986, %v1006
    %v1011 = vadd.f32 %v987, %v1007
    %s1012 = sld [smem:[#allocation3 + $0x2]]
    %v1013 = vstv %s1012
    %v1014 = vmul.f32 %v895, %v1013
    %v1015 = vmul.f32 %v897, %v1013
    %s1016 = sld [smem:[#allocation3 + $0xa]]
    %v1017 = vstv %s1016
    %v1018 = vmul.f32 %v895, %v1017
    %v1019 = vmul.f32 %v897, %v1017
    %1022 = vrot.lane.b32.xlu0 %v1018, 92
    %v1023 = vpop.permute.xlu0 %1022
    %1024 = vrot.lane.b32.xlu0 %v1019, 92
    %v1025 = vpop.permute.xlu0 %1024
    %v1028 = vadd.f32 %v1014, %v1023
    %v1029 = vadd.f32 %v1015, %v1025
    %s1030 = sld [smem:[#allocation3 + $0x12]]
    %v1031 = vstv %s1030
    %v1032 = vmul.f32 %v895, %v1031
    %v1033 = vmul.f32 %v897, %v1031
    %1036 = vrot.lane.b32.xlu0 %v1032, 56
    %v1037 = vpop.permute.xlu0 %1036
    %1038 = vrot.lane.b32.xlu0 %v1033, 56
    %v1039 = vpop.permute.xlu0 %1038
    %v1042 = vadd.f32 %v1028, %v1037
    %v1043 = vadd.f32 %v1029, %v1039
    %s1044 = sld [smem:[#allocation3 + $0x1a]]
    %v1045 = vstv %s1044
    %v1046 = vmul.f32 %v895, %v1045
    %v1047 = vmul.f32 %v896, %v1045
    %v1048 = vmul.f32 %v897, %v1045
    %v1049 = vmul.f32 %v898, %v1045
    %1054 = vrot.lane.b32.xlu0 %v1046, 20
    %v1055 = vpop.permute.xlu0 %1054
    %1056 = vrot.lane.b32.xlu0 %v1047, 20
    %v1057 = vpop.permute.xlu0 %1056
    %1058 = vrot.lane.b32.xlu0 %v1048, 20
    %v1059 = vpop.permute.xlu0 %1058
    %1060 = vrot.lane.b32.xlu0 %v1049, 20
    %v1061 = vpop.permute.xlu0 %1060
    %v1062 = vsel %vm949, %v1055, %v1057
    %v1063 = vsel %vm949, %v1059, %v1061
    %v1066 = vadd.f32 %v1042, %v1062
    %v1067 = vadd.f32 %v1043, %v1063
    %s1068 = sld [smem:[#allocation3 + $0x3]]
    %v1069 = vstv %s1068
    %v1070 = vmul.f32 %v895, %v1069
    %v1071 = vmul.f32 %v897, %v1069
    %s1072 = sld [smem:[#allocation3 + $0xb]]
    %v1073 = vstv %s1072
    %v1074 = vmul.f32 %v895, %v1073
    %v1075 = vmul.f32 %v897, %v1073
    %1078 = vrot.lane.b32.xlu0 %v1074, 92
    %v1079 = vpop.permute.xlu0 %1078
    %1080 = vrot.lane.b32.xlu0 %v1075, 92
    %v1081 = vpop.permute.xlu0 %1080
    %v1084 = vadd.f32 %v1070, %v1079
    %v1085 = vadd.f32 %v1071, %v1081
    %s1086 = sld [smem:[#allocation3 + $0x13]]
    %v1087 = vstv %s1086
    %v1088 = vmul.f32 %v895, %v1087
    %v1089 = vmul.f32 %v897, %v1087
    %1092 = vrot.lane.b32.xlu0 %v1088, 56
    %v1093 = vpop.permute.xlu0 %1092
    %1094 = vrot.lane.b32.xlu0 %v1089, 56
    %v1095 = vpop.permute.xlu0 %1094
    %v1098 = vadd.f32 %v1084, %v1093
    %v1099 = vadd.f32 %v1085, %v1095
    %s1100 = sld [smem:[#allocation3 + $0x1b]]
    %v1101 = vstv %s1100
    %v1102 = vmul.f32 %v895, %v1101
    %v1103 = vmul.f32 %v896, %v1101
    %v1104 = vmul.f32 %v897, %v1101
    %v1105 = vmul.f32 %v898, %v1101
    %1110 = vrot.lane.b32.xlu0 %v1102, 20
    %v1111 = vpop.permute.xlu0 %1110
    %1112 = vrot.lane.b32.xlu0 %v1103, 20
    %v1113 = vpop.permute.xlu0 %1112
    %1114 = vrot.lane.b32.xlu0 %v1104, 20
    %v1115 = vpop.permute.xlu0 %1114
    %1116 = vrot.lane.b32.xlu0 %v1105, 20
    %v1117 = vpop.permute.xlu0 %1116
    %v1118 = vsel %vm949, %v1111, %v1113
    %v1119 = vsel %vm949, %v1115, %v1117
    %v1122 = vadd.f32 %v1098, %v1118
    %v1123 = vadd.f32 %v1099, %v1119
    %s1124 = sld [smem:[#allocation3 + $0x4]]
    %v1125 = vstv %s1124
    %v1126 = vmul.f32 %v895, %v1125
    %v1127 = vmul.f32 %v897, %v1125
    %s1128 = sld [smem:[#allocation3 + $0xc]]
    %v1129 = vstv %s1128
    %v1130 = vmul.f32 %v895, %v1129
    %v1131 = vmul.f32 %v897, %v1129
    %1134 = vrot.lane.b32.xlu0 %v1130, 92
    %v1135 = vpop.permute.xlu0 %1134
    %1136 = vrot.lane.b32.xlu0 %v1131, 92
    %v1137 = vpop.permute.xlu0 %1136
    %v1140 = vadd.f32 %v1126, %v1135
    %v1141 = vadd.f32 %v1127, %v1137
    %s1142 = sld [smem:[#allocation3 + $0x14]]
    %v1143 = vstv %s1142
    %v1144 = vmul.f32 %v895, %v1143
    %v1145 = vmul.f32 %v897, %v1143
    %1148 = vrot.lane.b32.xlu0 %v1144, 56
    %v1149 = vpop.permute.xlu0 %1148
    %1150 = vrot.lane.b32.xlu0 %v1145, 56
    %v1151 = vpop.permute.xlu0 %1150
    %v1154 = vadd.f32 %v1140, %v1149
    %v1155 = vadd.f32 %v1141, %v1151
    %s1156 = sld [smem:[#allocation3 + $0x1c]]
    %v1157 = vstv %s1156
    %v1158 = vmul.f32 %v895, %v1157
    %v1159 = vmul.f32 %v896, %v1157
    %v1160 = vmul.f32 %v897, %v1157
    %v1161 = vmul.f32 %v898, %v1157
    %1166 = vrot.lane.b32.xlu0 %v1158, 20
    %v1167 = vpop.permute.xlu0 %1166
    %1168 = vrot.lane.b32.xlu0 %v1159, 20
    %v1169 = vpop.permute.xlu0 %1168
    %1170 = vrot.lane.b32.xlu0 %v1160, 20
    %v1171 = vpop.permute.xlu0 %1170
    %1172 = vrot.lane.b32.xlu0 %v1161, 20
    %v1173 = vpop.permute.xlu0 %1172
    %v1174 = vsel %vm949, %v1167, %v1169
    %v1175 = vsel %vm949, %v1171, %v1173
    %v1178 = vadd.f32 %v1154, %v1174
    %v1179 = vadd.f32 %v1155, %v1175
    %s1180 = sld [smem:[#allocation3 + $0x5]]
    %v1181 = vstv %s1180
    %v1182 = vmul.f32 %v895, %v1181
    %v1183 = vmul.f32 %v897, %v1181
    %s1184 = sld [smem:[#allocation3 + $0xd]]
    %v1185 = vstv %s1184
    %v1186 = vmul.f32 %v895, %v1185
    %v1187 = vmul.f32 %v897, %v1185
    %1190 = vrot.lane.b32.xlu0 %v1186, 92
    %v1191 = vpop.permute.xlu0 %1190
    %1192 = vrot.lane.b32.xlu0 %v1187, 92
    %v1193 = vpop.permute.xlu0 %1192
    %v1196 = vadd.f32 %v1182, %v1191
    %v1197 = vadd.f32 %v1183, %v1193
    %s1198 = sld [smem:[#allocation3 + $0x15]]
    %v1199 = vstv %s1198
    %v1200 = vmul.f32 %v895, %v1199
    %v1201 = vmul.f32 %v897, %v1199
    %1204 = vrot.lane.b32.xlu0 %v1200, 56
    %v1205 = vpop.permute.xlu0 %1204
    %1206 = vrot.lane.b32.xlu0 %v1201, 56
    %v1207 = vpop.permute.xlu0 %1206
    %v1210 = vadd.f32 %v1196, %v1205
    %v1211 = vadd.f32 %v1197, %v1207
    %s1212 = sld [smem:[#allocation3 + $0x1d]]
    %v1213 = vstv %s1212
    %v1214 = vmul.f32 %v895, %v1213
    %v1215 = vmul.f32 %v896, %v1213
    %v1216 = vmul.f32 %v897, %v1213
    %v1217 = vmul.f32 %v898, %v1213
    %1222 = vrot.lane.b32.xlu0 %v1214, 20
    %v1223 = vpop.permute.xlu0 %1222
    %1224 = vrot.lane.b32.xlu0 %v1215, 20
    %v1225 = vpop.permute.xlu0 %1224
    %1226 = vrot.lane.b32.xlu0 %v1216, 20
    %v1227 = vpop.permute.xlu0 %1226
    %1228 = vrot.lane.b32.xlu0 %v1217, 20
    %v1229 = vpop.permute.xlu0 %1228
    %v1230 = vsel %vm949, %v1223, %v1225
    %v1231 = vsel %vm949, %v1227, %v1229
    %v1234 = vadd.f32 %v1210, %v1230
    %v1235 = vadd.f32 %v1211, %v1231
    %s1236 = sld [smem:[#allocation3 + $0x6]]
    %v1237 = vstv %s1236
    %v1238 = vmul.f32 %v895, %v1237
    %v1239 = vmul.f32 %v897, %v1237
    %s1240 = sld [smem:[#allocation3 + $0xe]]
    %v1241 = vstv %s1240
    %v1242 = vmul.f32 %v895, %v1241
    %v1243 = vmul.f32 %v897, %v1241
    %1246 = vrot.lane.b32.xlu0 %v1242, 92
    %v1247 = vpop.permute.xlu0 %1246
    %1248 = vrot.lane.b32.xlu0 %v1243, 92
    %v1249 = vpop.permute.xlu0 %1248
    %v1252 = vadd.f32 %v1238, %v1247
    %v1253 = vadd.f32 %v1239, %v1249
    %s1254 = sld [smem:[#allocation3 + $0x16]]
    %v1255 = vstv %s1254
    %v1256 = vmul.f32 %v895, %v1255
    %v1257 = vmul.f32 %v897, %v1255
    %1260 = vrot.lane.b32.xlu0 %v1256, 56
    %v1261 = vpop.permute.xlu0 %1260
    %1262 = vrot.lane.b32.xlu0 %v1257, 56
    %v1263 = vpop.permute.xlu0 %1262
    %v1266 = vadd.f32 %v1252, %v1261
    %v1267 = vadd.f32 %v1253, %v1263
    %s1268 = sld [smem:[#allocation3 + $0x1e]]
    %v1269 = vstv %s1268
    %v1270 = vmul.f32 %v895, %v1269
    %v1271 = vmul.f32 %v896, %v1269
    %v1272 = vmul.f32 %v897, %v1269
    %v1273 = vmul.f32 %v898, %v1269
    %1278 = vrot.lane.b32.xlu0 %v1270, 20
    %v1279 = vpop.permute.xlu0 %1278
    %1280 = vrot.lane.b32.xlu0 %v1271, 20
    %v1281 = vpop.permute.xlu0 %1280
    %1282 = vrot.lane.b32.xlu0 %v1272, 20
    %v1283 = vpop.permute.xlu0 %1282
    %1284 = vrot.lane.b32.xlu0 %v1273, 20
    %v1285 = vpop.permute.xlu0 %1284
    %v1286 = vsel %vm949, %v1279, %v1281
    %v1287 = vsel %vm949, %v1283, %v1285
    %v1290 = vadd.f32 %v1266, %v1286
    %v1291 = vadd.f32 %v1267, %v1287
    %s1292 = sld [smem:[#allocation3 + $0x7]]
    %v1293 = vstv %s1292
    %v1294 = vmul.f32 %v895, %v1293
    %v1295 = vmul.f32 %v897, %v1293
    %s1296 = sld [smem:[#allocation3 + $0xf]]
    %v1297 = vstv %s1296
    %v1298 = vmul.f32 %v895, %v1297
    %v1299 = vmul.f32 %v897, %v1297
    %1302 = vrot.lane.b32.xlu0 %v1298, 92
    %v1303 = vpop.permute.xlu0 %1302
    %1304 = vrot.lane.b32.xlu0 %v1299, 92
    %v1305 = vpop.permute.xlu0 %1304
    %v1308 = vadd.f32 %v1294, %v1303
    %v1309 = vadd.f32 %v1295, %v1305
    %s1310 = sld [smem:[#allocation3 + $0x17]]
    %v1311 = vstv %s1310
    %v1312 = vmul.f32 %v895, %v1311
    %v1313 = vmul.f32 %v897, %v1311
    %1316 = vrot.lane.b32.xlu0 %v1312, 56
    %v1317 = vpop.permute.xlu0 %1316
    %1318 = vrot.lane.b32.xlu0 %v1313, 56
    %v1319 = vpop.permute.xlu0 %1318
    %v1322 = vadd.f32 %v1308, %v1317
    %v1323 = vadd.f32 %v1309, %v1319
    %s1324 = sld [smem:[#allocation3 + $0x1f]]
    %v1325 = vstv %s1324
    %v1326 = vmul.f32 %v895, %v1325
    %v1327 = vmul.f32 %v896, %v1325
    %v1328 = vmul.f32 %v897, %v1325
    %v1329 = vmul.f32 %v898, %v1325
    %1334 = vrot.lane.b32.xlu0 %v1326, 20
    %v1335 = vpop.permute.xlu0 %1334
    %1336 = vrot.lane.b32.xlu0 %v1327, 20
    %v1337 = vpop.permute.xlu0 %1336
    %1338 = vrot.lane.b32.xlu0 %v1328, 20
    %v1339 = vpop.permute.xlu0 %1338
    %1340 = vrot.lane.b32.xlu0 %v1329, 20
    %v1341 = vpop.permute.xlu0 %1340
    %v1342 = vsel %vm949, %v1335, %v1337
    %v1343 = vsel %vm949, %v1339, %v1341
    %v1346 = vadd.f32 %v1322, %v1342
    %v1347 = vadd.f32 %v1323, %v1343
    %vm1348 = vcmask 293888
    %v1349 = vsel %vm1348, %v954, 0.0
    %v1350 = vsel %vm1348, %v955, 0.0
    %v1351 = vadd.f32 %v1349, %v1350
    %v1352 = vrot.slane %v1351, 4
    %v1353 = vadd.f32 %v1351, %v1352
    %v1354 = vrot.slane %v1353, 2
    %v1355 = vadd.f32 %v1353, %v1354
    %v1356 = vrot.slane %v1355, 1
    %v1357 = vadd.f32 %v1355, %v1356
    %vm1358 = vcmask 286720
    %1359 = vst.msk [vmem:[%s6] sm:$0x1] %vm1358, %v1357
    %v1360 = vmul.f32 %v954, %v954
    %v1361 = vmul.f32 %v955, %v955
    %v1362 = vsel %vm1348, %v1360, 0.0
    %v1363 = vsel %vm1348, %v1361, 0.0
    %v1364 = vadd.f32 %v1362, %v1363
    %v1365 = vrot.slane %v1364, 4
    %v1366 = vadd.f32 %v1364, %v1365
    %v1367 = vrot.slane %v1366, 2
    %v1368 = vadd.f32 %v1366, %v1367
    %v1369 = vrot.slane %v1368, 1
    %v1370 = vadd.f32 %v1368, %v1369
    %1371 = vst.msk [vmem:[%s6 + $0x8] sm:$0x1] %vm1358, %v1370
    %1372 = vst.msk [vmem:[%s5] sm:$0xff] %vm1348, %v954
    %1373 = vst.msk [vmem:[%s5 + $0x18] sm:$0xff] %vm1348, %v955
    %v1374 = vsel %vm1348, %v1010, 0.0
    %v1375 = vsel %vm1348, %v1011, 0.0
    %v1376 = vadd.f32 %v1374, %v1375
    %v1377 = vrot.slane %v1376, 4
    %v1378 = vadd.f32 %v1376, %v1377
    %v1379 = vrot.slane %v1378, 2
    %v1380 = vadd.f32 %v1378, %v1379
    %v1381 = vrot.slane %v1380, 1
    %v1382 = vadd.f32 %v1380, %v1381
    %1383 = vst.msk [vmem:[%s6 + $0x1] sm:$0x1] %vm1358, %v1382
    %v1384 = vmul.f32 %v1010, %v1010
    %v1385 = vmul.f32 %v1011, %v1011
    %v1386 = vsel %vm1348, %v1384, 0.0
    %v1387 = vsel %vm1348, %v1385, 0.0
    %v1388 = vadd.f32 %v1386, %v1387
    %v1389 = vrot.slane %v1388, 4
    %v1390 = vadd.f32 %v1388, %v1389
    %v1391 = vrot.slane %v1390, 2
    %v1392 = vadd.f32 %v1390, %v1391
    %v1393 = vrot.slane %v1392, 1
    %v1394 = vadd.f32 %v1392, %v1393
    %1395 = vst.msk [vmem:[%s6 + $0x9] sm:$0x1] %vm1358, %v1394
    %1398 = vrot.lane.b32.xlu0 %v1010, 36
    %v1399 = vpop.permute.xlu0 %1398
    %1400 = vrot.lane.b32.xlu0 %v1011, 36
    %v1401 = vpop.permute.xlu0 %1400
    %vm1404 = vcmask 589088
    %1405 = vst.msk [vmem:[%s5] sm:$0xff] %vm1404, %v1399
    %1406 = vst.msk [vmem:[%s5 + $0x18] sm:$0xff] %vm1404, %v1401
    %v1407 = vsel %vm1348, %v1066, 0.0
    %v1408 = vsel %vm1348, %v1067, 0.0
    %v1409 = vadd.f32 %v1407, %v1408
    %v1410 = vrot.slane %v1409, 4
    %v1411 = vadd.f32 %v1409, %v1410
    %v1412 = vrot.slane %v1411, 2
    %v1413 = vadd.f32 %v1411, %v1412
    %v1414 = vrot.slane %v1413, 1
    %v1415 = vadd.f32 %v1413, %v1414
    %1416 = vst.msk [vmem:[%s6 + $0x2] sm:$0x1] %vm1358, %v1415
    %v1417 = vmul.f32 %v1066, %v1066
    %v1418 = vmul.f32 %v1067, %v1067
    %v1419 = vsel %vm1348, %v1417, 0.0
    %v1420 = vsel %vm1348, %v1418, 0.0
    %v1421 = vadd.f32 %v1419, %v1420
    %v1422 = vrot.slane %v1421, 4
    %v1423 = vadd.f32 %v1421, %v1422
    %v1424 = vrot.slane %v1423, 2
    %v1425 = vadd.f32 %v1423, %v1424
    %v1426 = vrot.slane %v1425, 1
    %v1427 = vadd.f32 %v1425, %v1426
    %1428 = vst.msk [vmem:[%s6 + $0xa] sm:$0x1] %vm1358, %v1427
    %1431 = vrot.lane.b32.xlu0 %v1066, 72
    %v1432 = vpop.permute.xlu0 %1431
    %1433 = vrot.lane.b32.xlu0 %v1067, 72
    %v1434 = vpop.permute.xlu0 %1433
    %vm1437 = vcmask 884288
    %1438 = vst.msk [vmem:[%s5] sm:$0xff] %vm1437, %v1432
    %1439 = vst.msk [vmem:[%s5 + $0x18] sm:$0xff] %vm1437, %v1434
    %v1440 = vsel %vm1348, %v1122, 0.0
    %v1441 = vsel %vm1348, %v1123, 0.0
    %v1442 = vadd.f32 %v1440, %v1441
    %v1443 = vrot.slane %v1442, 4
    %v1444 = vadd.f32 %v1442, %v1443
    %v1445 = vrot.slane %v1444, 2
    %v1446 = vadd.f32 %v1444, %v1445
    %v1447 = vrot.slane %v1446, 1
    %v1448 = vadd.f32 %v1446, %v1447
    %1449 = vst.msk [vmem:[%s6 + $0x3] sm:$0x1] %vm1358, %v1448
    %v1450 = vmul.f32 %v1122, %v1122
    %v1451 = vmul.f32 %v1123, %v1123
    %v1452 = vsel %vm1348, %v1450, 0.0
    %v1453 = vsel %vm1348, %v1451, 0.0
    %v1454 = vadd.f32 %v1452, %v1453
    %v1455 = vrot.slane %v1454, 4
    %v1456 = vadd.f32 %v1454, %v1455
    %v1457 = vrot.slane %v1456, 2
    %v1458 = vadd.f32 %v1456, %v1457
    %v1459 = vrot.slane %v1458, 1
    %v1460 = vadd.f32 %v1458, %v1459
    %1461 = vst.msk [vmem:[%s6 + $0xb] sm:$0x1] %vm1358, %v1460
    %1464 = vrot.lane.b32.xlu0 %v1122, 108
    %v1465 = vpop.permute.xlu0 %1464
    %1466 = vrot.lane.b32.xlu0 %v1123, 108
    %v1467 = vpop.permute.xlu0 %1466
    %vm1470 = vcmask 1048416
    %1471 = vst.msk [vmem:[%s5] sm:$0xff] %vm1470, %v1465
    %vm1472 = vcmask 130048
    %1473 = vst.msk [vmem:[%s5 + $0x8] sm:$0xff] %vm1472, %v1465
    %1474 = vst.msk [vmem:[%s5 + $0x18] sm:$0xff] %vm1470, %v1467
    %1475 = vst.msk [vmem:[%s5 + $0x20] sm:$0xff] %vm1472, %v1467
    %v1476 = vsel %vm1348, %v1178, 0.0
    %v1477 = vsel %vm1348, %v1179, 0.0
    %v1478 = vadd.f32 %v1476, %v1477
    %v1479 = vrot.slane %v1478, 4
    %v1480 = vadd.f32 %v1478, %v1479
    %v1481 = vrot.slane %v1480, 2
    %v1482 = vadd.f32 %v1480, %v1481
    %v1483 = vrot.slane %v1482, 1
    %v1484 = vadd.f32 %v1482, %v1483
    %1485 = vst.msk [vmem:[%s6 + $0x4] sm:$0x1] %vm1358, %v1484
    %v1486 = vmul.f32 %v1178, %v1178
    %v1487 = vmul.f32 %v1179, %v1179
    %v1488 = vsel %vm1348, %v1486, 0.0
    %v1489 = vsel %vm1348, %v1487, 0.0
    %v1490 = vadd.f32 %v1488, %v1489
    %v1491 = vrot.slane %v1490, 4
    %v1492 = vadd.f32 %v1490, %v1491
    %v1493 = vrot.slane %v1492, 2
    %v1494 = vadd.f32 %v1492, %v1493
    %v1495 = vrot.slane %v1494, 1
    %v1496 = vadd.f32 %v1494, %v1495
    %1497 = vst.msk [vmem:[%s6 + $0xc] sm:$0x1] %vm1358, %v1496
    %1500 = vrot.lane.b32.xlu0 %v1178, 16
    %v1501 = vpop.permute.xlu0 %1500
    %1502 = vrot.lane.b32.xlu0 %v1179, 16
    %v1503 = vpop.permute.xlu0 %1502
    %vm1506 = vcmask 425088
    %1507 = vst.msk [vmem:[%s5 + $0x8] sm:$0xff] %vm1506, %v1501
    %1508 = vst.msk [vmem:[%s5 + $0x20] sm:$0xff] %vm1506, %v1503
    %v1509 = vsel %vm1348, %v1234, 0.0
    %v1510 = vsel %vm1348, %v1235, 0.0
    %v1511 = vadd.f32 %v1509, %v1510
    %v1512 = vrot.slane %v1511, 4
    %v1513 = vadd.f32 %v1511, %v1512
    %v1514 = vrot.slane %v1513, 2
    %v1515 = vadd.f32 %v1513, %v1514
    %v1516 = vrot.slane %v1515, 1
    %v1517 = vadd.f32 %v1515, %v1516
    %1518 = vst.msk [vmem:[%s6 + $0x5] sm:$0x1] %vm1358, %v1517
    %v1519 = vmul.f32 %v1234, %v1234
    %v1520 = vmul.f32 %v1235, %v1235
    %v1521 = vsel %vm1348, %v1519, 0.0
    %v1522 = vsel %vm1348, %v1520, 0.0
    %v1523 = vadd.f32 %v1521, %v1522
    %v1524 = vrot.slane %v1523, 4
    %v1525 = vadd.f32 %v1523, %v1524
    %v1526 = vrot.slane %v1525, 2
    %v1527 = vadd.f32 %v1525, %v1526
    %v1528 = vrot.slane %v1527, 1
    %v1529 = vadd.f32 %v1527, %v1528
    %1530 = vst.msk [vmem:[%s6 + $0xd] sm:$0x1] %vm1358, %v1529
    %1533 = vrot.lane.b32.xlu0 %v1234, 52
    %v1534 = vpop.permute.xlu0 %1533
    %1535 = vrot.lane.b32.xlu0 %v1235, 52
    %v1536 = vpop.permute.xlu0 %1535
    %vm1539 = vcmask 720288
    %1540 = vst.msk [vmem:[%s5 + $0x8] sm:$0xff] %vm1539, %v1534
    %1541 = vst.msk [vmem:[%s5 + $0x20] sm:$0xff] %vm1539, %v1536
    %v1542 = vsel %vm1348, %v1290, 0.0
    %v1543 = vsel %vm1348, %v1291, 0.0
    %v1544 = vadd.f32 %v1542, %v1543
    %v1545 = vrot.slane %v1544, 4
    %v1546 = vadd.f32 %v1544, %v1545
    %v1547 = vrot.slane %v1546, 2
    %v1548 = vadd.f32 %v1546, %v1547
    %v1549 = vrot.slane %v1548, 1
    %v1550 = vadd.f32 %v1548, %v1549
    %1551 = vst.msk [vmem:[%s6 + $0x6] sm:$0x1] %vm1358, %v1550
    %v1552 = vmul.f32 %v1290, %v1290
    %v1553 = vmul.f32 %v1291, %v1291
    %v1554 = vsel %vm1348, %v1552, 0.0
    %v1555 = vsel %vm1348, %v1553, 0.0
    %v1556 = vadd.f32 %v1554, %v1555
    %v1557 = vrot.slane %v1556, 4
    %v1558 = vadd.f32 %v1556, %v1557
    %v1559 = vrot.slane %v1558, 2
    %v1560 = vadd.f32 %v1558, %v1559
    %v1561 = vrot.slane %v1560, 1
    %v1562 = vadd.f32 %v1560, %v1561
    %1563 = vst.msk [vmem:[%s6 + $0xe] sm:$0x1] %vm1358, %v1562
    %1566 = vrot.lane.b32.xlu0 %v1290, 88
    %v1567 = vpop.permute.xlu0 %1566
    %1568 = vrot.lane.b32.xlu0 %v1291, 88
    %v1569 = vpop.permute.xlu0 %1568
    %vm1572 = vcmask 1015488
    %1573 = vst.msk [vmem:[%s5 + $0x8] sm:$0xff] %vm1572, %v1567
    %1574 = vst.msk [vmem:[%s5 + $0x20] sm:$0xff] %vm1572, %v1569
    %v1575 = vsel %vm1348, %v1346, 0.0
    %v1576 = vsel %vm1348, %v1347, 0.0
    %v1577 = vadd.f32 %v1575, %v1576
    %v1578 = vrot.slane %v1577, 4
    %v1579 = vadd.f32 %v1577, %v1578
    %v1580 = vrot.slane %v1579, 2
    %v1581 = vadd.f32 %v1579, %v1580
    %v1582 = vrot.slane %v1581, 1
    %v1583 = vadd.f32 %v1581, %v1582
    %1584 = vst.msk [vmem:[%s6 + $0x7] sm:$0x1] %vm1358, %v1583
    %v1585 = vmul.f32 %v1346, %v1346
    %v1586 = vmul.f32 %v1347, %v1347
    %v1587 = vsel %vm1348, %v1585, 0.0
    %v1588 = vsel %vm1348, %v1586, 0.0
    %v1589 = vadd.f32 %v1587, %v1588
    %v1590 = vrot.slane %v1589, 4
    %v1591 = vadd.f32 %v1589, %v1590
    %v1592 = vrot.slane %v1591, 2
    %v1593 = vadd.f32 %v1591, %v1592
    %v1594 = vrot.slane %v1593, 1
    %v1595 = vadd.f32 %v1593, %v1594
    %1596 = vst.msk [vmem:[%s6 + $0xf] sm:$0x1] %vm1358, %v1595
    %1599 = vrot.lane.b32.xlu0 %v1346, 124
    %v1600 = vpop.permute.xlu0 %1599
    %1601 = vrot.lane.b32.xlu0 %v1347, 124
    %v1602 = vpop.permute.xlu0 %1601
    %vm1605 = vcmask 1048544
    %1606 = vst.msk [vmem:[%s5 + $0x8] sm:$0xff] %vm1605, %v1600
    %vm1607 = vcmask 261120
    %1608 = vst.msk [vmem:[%s5 + $0x10] sm:$0xff] %vm1607, %v1600
    %1609 = vst.msk [vmem:[%s5 + $0x20] sm:$0xff] %vm1605, %v1602
    %1610 = vst.msk [vmem:[%s5 + $0x28] sm:$0xff] %vm1607, %v1602
    %vm1611 = vcmask 1047808
    %1612 = vst.msk [vmem:[%s5 + $0x10] sm:$0xff] %vm1611, 0.0
    %1613 = vst.msk [vmem:[%s5 + $0x28] sm:$0xff] %vm1611, 0.0
    %vm1614 = vcmask 1047840
    %1615 = vst.msk [vmem:[%s6] sm:$0xff] %vm1614, 0.0
    %1616 = vst.msk [vmem:[%s6 + $0x8] sm:$0xff] %vm1614, 0.0
    // Predicated region
    $region34: #{sepconv_forward.4} parent=1 // pred_check
      _
    $region35: #{sepconv_forward.4} parent=1 // pred_check_branch
      %1618 = sbr.rel (0) target = $region37
    $region36: #{sepconv_forward.4} parent=1 // pred_region
      _
    $region37: #{sepconv_forward.4} parent=1 // pred_fallthru
      _
    // Predicated region
    $region38: #{sepconv_forward.4} parent=1 // pred_check
      _
    $region39: #{sepconv_forward.4} parent=1 // pred_check_branch
      %1620 = sbr.rel (0) target = $region41
    $region40: #{sepconv_forward.4} parent=1 // pred_region
      _
    $region41: #{sepconv_forward.4} parent=1 // pred_fallthru
      _
    // Predicated region
    $region42: #{sepconv_forward.4} parent=1 // pred_check
      _
    $region43: #{sepconv_forward.4} parent=1 // pred_check_branch
      %1622 = sbr.rel (0) target = $region45
    $region44: #{sepconv_forward.4} parent=1 // pred_region
      _
    $region45: #{sepconv_forward.4} parent=1 // pred_fallthru
      _
    // Predicated region
    $region46: #{sepconv_forward.4} parent=1 // pred_check
      _
    $region47: #{sepconv_forward.4} parent=1 // pred_check_branch
      %1624 = sbr.rel (0) target = $region49
    $region48: #{sepconv_forward.4} parent=1 // pred_region
      _
    $region49: #{sepconv_forward.4} parent=1 // pred_fallthru
      _
    %1625 = vsyncpa [#allocation4], 1
    %1626 = vsyncpa [#allocation6], 1

</llo_original>
